<compile_context>
chip_gen: v5e
topology: v5e:2x2
jax: 0.10.0
libtpu: 0.0.40
codegen_flags: <defaults>
</compile_context>

<pallas_src>
import functools

import jax
import jax.numpy as jnp
from jax.experimental import pallas as pl
from jax.experimental.pallas import tpu as pltpu

DARK_KERNEL_SIZE = 5            # spatial window of the dark-channel min-pool
TARGET_BLOCK_BYTES = 4 << 20    # ~4 MiB per input block (review: 1-8 MiB)


def _pick_batch_tile(batch, chans, height, width, itemsize, target_bytes):
    """Largest divisor of `batch` whose block fits the byte target (aligned)."""
    per_image = max(chans * height * width * itemsize, 1)
    divisors = [d for d in range(1, batch + 1) if batch % d == 0]
    fits = [d for d in divisors if d * per_image <= target_bytes] or [1]
    # The (rows, W) block's second-minor dim must be a multiple of 8 unless the
    # block spans the whole array.
    aligned = [d for d in fits if d == batch or (d * chans * height) % 8 == 0]
    if aligned:
        return max(aligned)
    if batch * per_image <= 4 * target_bytes:
        return batch
    # TODO(synk): unaligned sublane blocks (C*H not a multiple of 8) may lower
    # to masked stores; an H-halo split would be the clean fix for such shapes.
    return max(fits)


def _myloss_kernel(x_ref, y_ref, hpl_ref, chan_ref, img_ref, out_ref, *,
                   num_channels, plane_rows, pad):
    """One grid step = one block of whole images, rows laid out as
    (image, channel, height) on the sublane axis and width on the lane axis."""
    C, H = num_channels, plane_rows

    x = x_ref[...].astype(jnp.float32)          # (R, W)
    y = y_ref[...].astype(jnp.float32)
    R, W = x.shape
    inf = jnp.float32(jnp.inf)

    h_pl = hpl_ref[...]    # (R, 1) row position inside its channel plane
    chan = chan_ref[...]   # (R, 1) channel index of the row
    img = img_ref[...]     # (R, 1) image index of the row (local to the block)
    col = jax.lax.broadcasted_iota(jnp.int32, (1, W), 1)

    # Tap schedule: (roll shift, validity mask).  Masks are derived by rolling
    # the tiny coordinate vectors with the same primitive as the data, so they
    # are independent of the roll direction convention, and they are shared by
    # x and y (built once per grid step).
    col_taps, row_taps, chan_taps = [], [], []
    for s in range(1, pad + 1):
        for t in (s, W - s):                    # +/- s along width (lanes)
            m = jnp.abs(pltpu.roll(col, shift=t, axis=1) - col) <= pad
            col_taps.append((t, m))
        for t in (s, R - s):                    # +/- s along height (sublanes)
            m = jnp.abs(pltpu.roll(h_pl, shift=t, axis=0) - h_pl) <= pad
            row_taps.append((t, m))
    seen = set()
    for k in range(1, C):                       # +/- k*H: other channel planes
        for t in (k * H, R - k * H):
            if t and t not in seen:
                seen.add(t)
                m = pltpu.roll(img, shift=t, axis=0) == img
                chan_taps.append((t, m))

    def dark(v):
        # 1) 5-tap min along W.
        w_min = v
        for t, m in col_taps:
            w_min = jnp.minimum(
                w_min, jnp.where(m, pltpu.roll(v, shift=t, axis=1), inf))
        # 2) 5-tap min along H, confined to each channel plane.
        hw_min = w_min
        for t, m in row_taps:
            hw_min = jnp.minimum(
                hw_min, jnp.where(m, pltpu.roll(w_min, shift=t, axis=0), inf))
        # 3) min across channels of the same image (min-pool and channel-min
        #    commute, so this equals spatial-min of the channel-min).
        d = hw_min
        for t, m in chan_taps:
            d = jnp.minimum(
                d, jnp.where(m, pltpu.roll(hw_min, shift=t, axis=0), inf))
        return d                                # correct on channel-0 rows

    ddiff = dark(x) - dark(y)
    dark_rows = chan == 0                       # one dark-channel row per (b,h)
    mse_part = jnp.sum(jnp.where(dark_rows, ddiff * ddiff, 0.0))
    l1_part = jnp.sum(jnp.abs(x - y))

    # Per-block partial sums, written to a lane-aligned (8,128) output tile:
    # [0,0] = sum of squared dark-channel diffs, [0,1] = sum |x - y|.
    r8 = jax.lax.broadcasted_iota(jnp.int32, (8, 128), 0)
    c128 = jax.lax.broadcasted_iota(jnp.int32, (8, 128), 1)
    out_ref[0] = jnp.where((r8 == 0) & (c128 == 0), mse_part,
                           jnp.where((r8 == 0) & (c128 == 1), l1_part, 0.0))


def myloss(x, y, kernel_size=DARK_KERNEL_SIZE):
    """Pallas implementation of Myloss.forward(x, y) -> scalar float32."""
    assert x.shape == y.shape and x.ndim == 4
    B, C, H, W = x.shape
    assert min(H, W) >= kernel_size, "spatial dims must cover the pool window"
    pad = kernel_size // 2

    itemsize = jnp.dtype(x.dtype).itemsize
    tb = _pick_batch_tile(B, C, H, W, itemsize, TARGET_BLOCK_BYTES)
    num_blocks = B // tb
    rows = tb * C * H                     # sublane rows per block

    # Free, contiguity-preserving reshape: row index = (image, channel, height).
    x2 = x.reshape(B * C * H, W)
    y2 = y.reshape(B * C * H, W)

    # Per-row coordinates (identical for every block since blocks start at
    # image boundaries); computed once by XLA, streamed as tiny inputs.
    r = jnp.arange(rows, dtype=jnp.int32)
    h_in_plane = (r % H)[:, None]
    chan_idx = ((r // H) % C)[:, None]
    img_idx = (r // (C * H))[:, None]

    block_bytes = rows * W * itemsize     # per-input block in HBM dtype
    work_bytes = rows * W * 4             # f32 working copies / temporaries
    vmem_limit = int(min(max(32 << 20,
                             4 * block_bytes + 4 * work_bytes + (2 << 20)),
                         56 << 20))       # stay inside v7x's 64 MiB VMEM

    kernel = functools.partial(_myloss_kernel, num_channels=C, plane_rows=H,
                               pad=pad)

    partials = pl.pallas_call(
        kernel,
        out_shape=jax.ShapeDtypeStruct((num_blocks, 8, 128), jnp.float32),
        grid=(num_blocks,),
        in_specs=[
            pl.BlockSpec((rows, W), lambda i: (i, 0)),
            pl.BlockSpec((rows, W), lambda i: (i, 0)),
            pl.BlockSpec((rows, 1), lambda i: (0, 0)),
            pl.BlockSpec((rows, 1), lambda i: (0, 0)),
            pl.BlockSpec((rows, 1), lambda i: (0, 0)),
        ],
        out_specs=pl.BlockSpec((1, 8, 128), lambda i: (i, 0, 0)),
        compiler_params=pltpu.CompilerParams(
            # No carried state -> blocks are independent -> megacore-friendly.
            dimension_semantics=("parallel",),
            vmem_limit_bytes=vmem_limit,
        ),
    )(x2, y2, h_in_plane, chan_idx, img_idx)

    mse_sum = jnp.sum(partials[:, 0, 0])
    l1_sum = jnp.sum(partials[:, 0, 1])
    # Global mean divisors (not tile-local sizes).
    return mse_sum / (B * H * W) + l1_sum / (B * C * H * W)


def _reference(x, y, kernel_size=DARK_KERNEL_SIZE):
    """Pure-JAX reference for validation."""
    pad = kernel_size // 2

    def dark(v):
        d = jnp.min(v, axis=1)  # channel min -> (B, H, W)
        return jax.lax.reduce_window(
            d, jnp.inf, jax.lax.min,
            window_dimensions=(1, kernel_size, kernel_size),
            window_strides=(1, 1, 1),
            padding=((0, 0), (pad, pad), (pad, pad)))

    mse = jnp.mean((dark(x) - dark(y)) ** 2)
    l1 = jnp.mean(jnp.abs(x - y))
    return mse + l1


if __name__ == "__main__":
    key = jax.random.PRNGKey(0)
    kx, ky = jax.random.split(key)

    B, C, H, W = 2, 4, 16, 16
    x = jax.random.uniform(kx, (B, C, H, W), dtype=jnp.float32)
    y = jax.random.uniform(ky, (B, C, H, W), dtype=jnp.float32)

    loss = jax.jit(myloss)(x, y)
    jax.block_until_ready(loss)

    ref = _reference(x, y)
    assert jnp.allclose(loss, ref, rtol=1e-4, atol=1e-5), (loss, ref)
    print("KERNEL_OK")
</pallas_src>

<mosaic_0001>
module attributes {stable_mosaic.version = 11 : i64} {
  func.func @_myloss_kernel(%arg0: i32, %arg1: memref<128x16xf32, #tpu.memory_space<vmem>>, %arg2: memref<128x16xf32, #tpu.memory_space<vmem>>, %arg3: memref<128x1xi32, #tpu.memory_space<vmem>>, %arg4: memref<128x1xi32, #tpu.memory_space<vmem>>, %arg5: memref<128x1xi32, #tpu.memory_space<vmem>>, %arg6: memref<1x8x128xf32, #tpu.memory_space<vmem>>) attributes {dimension_semantics = [#tpu.dimension_semantics<parallel>], iteration_bounds = array<i64: 1>, scalar_prefetch = 0 : i64, scratch_operands = 0 : i64, tpu.core_type = #tpu.core_type<tc>, window_params = [{transform_indices = @transform_0, window_bounds = array<i64: 128, 16>}, {transform_indices = @transform_1, window_bounds = array<i64: 128, 16>}, {pipeline_mode = #tpu.pipeline_mode<synchronous>, transform_indices = @transform_2, window_bounds = array<i64: 128, 1>}, {pipeline_mode = #tpu.pipeline_mode<synchronous>, transform_indices = @transform_3, window_bounds = array<i64: 128, 1>}, {pipeline_mode = #tpu.pipeline_mode<synchronous>, transform_indices = @transform_4, window_bounds = array<i64: 128, 1>}, {transform_indices = @transform_5, window_bounds = array<i64: 1, 8, 128>}]} {
    %c0 = arith.constant 0 : index
    %c0_0 = arith.constant 0 : index
    %0 = vector.load %arg1[%c0, %c0_0] : memref<128x16xf32, #tpu.memory_space<vmem>>, vector<128x16xf32>
    %c0_1 = arith.constant 0 : index
    %c0_2 = arith.constant 0 : index
    %1 = vector.load %arg2[%c0_1, %c0_2] : memref<128x16xf32, #tpu.memory_space<vmem>>, vector<128x16xf32>
    %c0_3 = arith.constant 0 : index
    %c0_4 = arith.constant 0 : index
    %2 = vector.load %arg3[%c0_3, %c0_4] : memref<128x1xi32, #tpu.memory_space<vmem>>, vector<128x1xi32>
    %c0_5 = arith.constant 0 : index
    %c0_6 = arith.constant 0 : index
    %3 = vector.load %arg4[%c0_5, %c0_6] : memref<128x1xi32, #tpu.memory_space<vmem>>, vector<128x1xi32>
    %c0_7 = arith.constant 0 : index
    %c0_8 = arith.constant 0 : index
    %4 = vector.load %arg5[%c0_7, %c0_8] : memref<128x1xi32, #tpu.memory_space<vmem>>, vector<128x1xi32>
    %5 = tpu.iota {dimensions = array<i32: 1>} : vector<1x16xi32>
    %c1_i32 = arith.constant 1 : i32
    %6 = tpu.dynamic_rotate %5 by %c1_i32 dim 1 : vector<1x16xi32>, i32 -> vector<1x16xi32>
    %7 = arith.subi %6, %5 : vector<1x16xi32>
    %8 = math.absi %7 : vector<1x16xi32>
    %c2_i32 = arith.constant 2 : i32
    %9 = vector.broadcast %c2_i32 : i32 to vector<1x16xi32>
    %10 = arith.cmpi sle, %8, %9 : vector<1x16xi32>
    %c15_i32 = arith.constant 15 : i32
    %11 = tpu.dynamic_rotate %5 by %c15_i32 dim 1 : vector<1x16xi32>, i32 -> vector<1x16xi32>
    %12 = arith.subi %11, %5 : vector<1x16xi32>
    %13 = math.absi %12 : vector<1x16xi32>
    %c2_i32_9 = arith.constant 2 : i32
    %14 = vector.broadcast %c2_i32_9 : i32 to vector<1x16xi32>
    %15 = arith.cmpi sle, %13, %14 : vector<1x16xi32>
    %c1_i32_10 = arith.constant 1 : i32
    %16 = tpu.dynamic_rotate %2 by %c1_i32_10 dim 0 : vector<128x1xi32>, i32 -> vector<128x1xi32>
    %17 = arith.subi %16, %2 : vector<128x1xi32>
    %18 = math.absi %17 : vector<128x1xi32>
    %c2_i32_11 = arith.constant 2 : i32
    %19 = vector.broadcast %c2_i32_11 : i32 to vector<128x1xi32>
    %20 = arith.cmpi sle, %18, %19 : vector<128x1xi32>
    %c127_i32 = arith.constant 127 : i32
    %21 = tpu.dynamic_rotate %2 by %c127_i32 dim 0 : vector<128x1xi32>, i32 -> vector<128x1xi32>
    %22 = arith.subi %21, %2 : vector<128x1xi32>
    %23 = math.absi %22 : vector<128x1xi32>
    %c2_i32_12 = arith.constant 2 : i32
    %24 = vector.broadcast %c2_i32_12 : i32 to vector<128x1xi32>
    %25 = arith.cmpi sle, %23, %24 : vector<128x1xi32>
    %c2_i32_13 = arith.constant 2 : i32
    %26 = tpu.dynamic_rotate %5 by %c2_i32_13 dim 1 : vector<1x16xi32>, i32 -> vector<1x16xi32>
    %27 = arith.subi %26, %5 : vector<1x16xi32>
    %28 = math.absi %27 : vector<1x16xi32>
    %c2_i32_14 = arith.constant 2 : i32
    %29 = vector.broadcast %c2_i32_14 : i32 to vector<1x16xi32>
    %30 = arith.cmpi sle, %28, %29 : vector<1x16xi32>
    %c14_i32 = arith.constant 14 : i32
    %31 = tpu.dynamic_rotate %5 by %c14_i32 dim 1 : vector<1x16xi32>, i32 -> vector<1x16xi32>
    %32 = arith.subi %31, %5 : vector<1x16xi32>
    %33 = math.absi %32 : vector<1x16xi32>
    %c2_i32_15 = arith.constant 2 : i32
    %34 = vector.broadcast %c2_i32_15 : i32 to vector<1x16xi32>
    %35 = arith.cmpi sle, %33, %34 : vector<1x16xi32>
    %c2_i32_16 = arith.constant 2 : i32
    %36 = tpu.dynamic_rotate %2 by %c2_i32_16 dim 0 : vector<128x1xi32>, i32 -> vector<128x1xi32>
    %37 = arith.subi %36, %2 : vector<128x1xi32>
    %38 = math.absi %37 : vector<128x1xi32>
    %c2_i32_17 = arith.constant 2 : i32
    %39 = vector.broadcast %c2_i32_17 : i32 to vector<128x1xi32>
    %40 = arith.cmpi sle, %38, %39 : vector<128x1xi32>
    %c126_i32 = arith.constant 126 : i32
    %41 = tpu.dynamic_rotate %2 by %c126_i32 dim 0 : vector<128x1xi32>, i32 -> vector<128x1xi32>
    %42 = arith.subi %41, %2 : vector<128x1xi32>
    %43 = math.absi %42 : vector<128x1xi32>
    %c2_i32_18 = arith.constant 2 : i32
    %44 = vector.broadcast %c2_i32_18 : i32 to vector<128x1xi32>
    %45 = arith.cmpi sle, %43, %44 : vector<128x1xi32>
    %c16_i32 = arith.constant 16 : i32
    %46 = tpu.dynamic_rotate %4 by %c16_i32 dim 0 : vector<128x1xi32>, i32 -> vector<128x1xi32>
    %47 = arith.cmpi eq, %46, %4 : vector<128x1xi32>
    %c112_i32 = arith.constant 112 : i32
    %48 = tpu.dynamic_rotate %4 by %c112_i32 dim 0 : vector<128x1xi32>, i32 -> vector<128x1xi32>
    %49 = arith.cmpi eq, %48, %4 : vector<128x1xi32>
    %c32_i32 = arith.constant 32 : i32
    %50 = tpu.dynamic_rotate %4 by %c32_i32 dim 0 : vector<128x1xi32>, i32 -> vector<128x1xi32>
    %51 = arith.cmpi eq, %50, %4 : vector<128x1xi32>
    %c96_i32 = arith.constant 96 : i32
    %52 = tpu.dynamic_rotate %4 by %c96_i32 dim 0 : vector<128x1xi32>, i32 -> vector<128x1xi32>
    %53 = arith.cmpi eq, %52, %4 : vector<128x1xi32>
    %c48_i32 = arith.constant 48 : i32
    %54 = tpu.dynamic_rotate %4 by %c48_i32 dim 0 : vector<128x1xi32>, i32 -> vector<128x1xi32>
    %55 = arith.cmpi eq, %54, %4 : vector<128x1xi32>
    %c80_i32 = arith.constant 80 : i32
    %56 = tpu.dynamic_rotate %4 by %c80_i32 dim 0 : vector<128x1xi32>, i32 -> vector<128x1xi32>
    %57 = arith.cmpi eq, %56, %4 : vector<128x1xi32>
    %c1_i32_19 = arith.constant 1 : i32
    %58 = tpu.dynamic_rotate %0 by %c1_i32_19 dim 1 : vector<128x16xf32>, i32 -> vector<128x16xf32>
    %cst = arith.constant 0x7F800000 : f32
    %59 = vector.shape_cast %10 : vector<1x16xi1> to vector<1x16xi1>
    %60 = vector.broadcast %59 : vector<1x16xi1> to vector<128x16xi1>
    %61 = vector.broadcast %cst : f32 to vector<128x16xf32>
    %62 = arith.select %60, %58, %61 : vector<128x16xi1>, vector<128x16xf32>
    %63 = arith.minimumf %0, %62 : vector<128x16xf32>
    %c15_i32_20 = arith.constant 15 : i32
    %64 = tpu.dynamic_rotate %0 by %c15_i32_20 dim 1 : vector<128x16xf32>, i32 -> vector<128x16xf32>
    %cst_21 = arith.constant 0x7F800000 : f32
    %65 = vector.shape_cast %15 : vector<1x16xi1> to vector<1x16xi1>
    %66 = vector.broadcast %65 : vector<1x16xi1> to vector<128x16xi1>
    %67 = vector.broadcast %cst_21 : f32 to vector<128x16xf32>
    %68 = arith.select %66, %64, %67 : vector<128x16xi1>, vector<128x16xf32>
    %69 = arith.minimumf %63, %68 : vector<128x16xf32>
    %c2_i32_22 = arith.constant 2 : i32
    %70 = tpu.dynamic_rotate %0 by %c2_i32_22 dim 1 : vector<128x16xf32>, i32 -> vector<128x16xf32>
    %cst_23 = arith.constant 0x7F800000 : f32
    %71 = vector.shape_cast %30 : vector<1x16xi1> to vector<1x16xi1>
    %72 = vector.broadcast %71 : vector<1x16xi1> to vector<128x16xi1>
    %73 = vector.broadcast %cst_23 : f32 to vector<128x16xf32>
    %74 = arith.select %72, %70, %73 : vector<128x16xi1>, vector<128x16xf32>
    %75 = arith.minimumf %69, %74 : vector<128x16xf32>
    %c14_i32_24 = arith.constant 14 : i32
    %76 = tpu.dynamic_rotate %0 by %c14_i32_24 dim 1 : vector<128x16xf32>, i32 -> vector<128x16xf32>
    %cst_25 = arith.constant 0x7F800000 : f32
    %77 = vector.shape_cast %35 : vector<1x16xi1> to vector<1x16xi1>
    %78 = vector.broadcast %77 : vector<1x16xi1> to vector<128x16xi1>
    %79 = vector.broadcast %cst_25 : f32 to vector<128x16xf32>
    %80 = arith.select %78, %76, %79 : vector<128x16xi1>, vector<128x16xf32>
    %81 = arith.minimumf %75, %80 : vector<128x16xf32>
    %c1_i32_26 = arith.constant 1 : i32
    %82 = tpu.dynamic_rotate %81 by %c1_i32_26 dim 0 : vector<128x16xf32>, i32 -> vector<128x16xf32>
    %cst_27 = arith.constant 0x7F800000 : f32
    %83 = vector.shape_cast %20 : vector<128x1xi1> to vector<128x1xi1>
    %84 = vector.broadcast %83 : vector<128x1xi1> to vector<128x16xi1>
    %85 = vector.broadcast %cst_27 : f32 to vector<128x16xf32>
    %86 = arith.select %84, %82, %85 : vector<128x16xi1>, vector<128x16xf32>
    %87 = arith.minimumf %81, %86 : vector<128x16xf32>
    %c127_i32_28 = arith.constant 127 : i32
    %88 = tpu.dynamic_rotate %81 by %c127_i32_28 dim 0 : vector<128x16xf32>, i32 -> vector<128x16xf32>
    %cst_29 = arith.constant 0x7F800000 : f32
    %89 = vector.shape_cast %25 : vector<128x1xi1> to vector<128x1xi1>
    %90 = vector.broadcast %89 : vector<128x1xi1> to vector<128x16xi1>
    %91 = vector.broadcast %cst_29 : f32 to vector<128x16xf32>
    %92 = arith.select %90, %88, %91 : vector<128x16xi1>, vector<128x16xf32>
    %93 = arith.minimumf %87, %92 : vector<128x16xf32>
    %c2_i32_30 = arith.constant 2 : i32
    %94 = tpu.dynamic_rotate %81 by %c2_i32_30 dim 0 : vector<128x16xf32>, i32 -> vector<128x16xf32>
    %cst_31 = arith.constant 0x7F800000 : f32
    %95 = vector.shape_cast %40 : vector<128x1xi1> to vector<128x1xi1>
    %96 = vector.broadcast %95 : vector<128x1xi1> to vector<128x16xi1>
    %97 = vector.broadcast %cst_31 : f32 to vector<128x16xf32>
    %98 = arith.select %96, %94, %97 : vector<128x16xi1>, vector<128x16xf32>
    %99 = arith.minimumf %93, %98 : vector<128x16xf32>
    %c126_i32_32 = arith.constant 126 : i32
    %100 = tpu.dynamic_rotate %81 by %c126_i32_32 dim 0 : vector<128x16xf32>, i32 -> vector<128x16xf32>
    %cst_33 = arith.constant 0x7F800000 : f32
    %101 = vector.shape_cast %45 : vector<128x1xi1> to vector<128x1xi1>
    %102 = vector.broadcast %101 : vector<128x1xi1> to vector<128x16xi1>
    %103 = vector.broadcast %cst_33 : f32 to vector<128x16xf32>
    %104 = arith.select %102, %100, %103 : vector<128x16xi1>, vector<128x16xf32>
    %105 = arith.minimumf %99, %104 : vector<128x16xf32>
    %c16_i32_34 = arith.constant 16 : i32
    %106 = tpu.dynamic_rotate %105 by %c16_i32_34 dim 0 : vector<128x16xf32>, i32 -> vector<128x16xf32>
    %cst_35 = arith.constant 0x7F800000 : f32
    %107 = vector.shape_cast %47 : vector<128x1xi1> to vector<128x1xi1>
    %108 = vector.broadcast %107 : vector<128x1xi1> to vector<128x16xi1>
    %109 = vector.broadcast %cst_35 : f32 to vector<128x16xf32>
    %110 = arith.select %108, %106, %109 : vector<128x16xi1>, vector<128x16xf32>
    %111 = arith.minimumf %105, %110 : vector<128x16xf32>
    %c112_i32_36 = arith.constant 112 : i32
    %112 = tpu.dynamic_rotate %105 by %c112_i32_36 dim 0 : vector<128x16xf32>, i32 -> vector<128x16xf32>
    %cst_37 = arith.constant 0x7F800000 : f32
    %113 = vector.shape_cast %49 : vector<128x1xi1> to vector<128x1xi1>
    %114 = vector.broadcast %113 : vector<128x1xi1> to vector<128x16xi1>
    %115 = vector.broadcast %cst_37 : f32 to vector<128x16xf32>
    %116 = arith.select %114, %112, %115 : vector<128x16xi1>, vector<128x16xf32>
    %117 = arith.minimumf %111, %116 : vector<128x16xf32>
    %c32_i32_38 = arith.constant 32 : i32
    %118 = tpu.dynamic_rotate %105 by %c32_i32_38 dim 0 : vector<128x16xf32>, i32 -> vector<128x16xf32>
    %cst_39 = arith.constant 0x7F800000 : f32
    %119 = vector.shape_cast %51 : vector<128x1xi1> to vector<128x1xi1>
    %120 = vector.broadcast %119 : vector<128x1xi1> to vector<128x16xi1>
    %121 = vector.broadcast %cst_39 : f32 to vector<128x16xf32>
    %122 = arith.select %120, %118, %121 : vector<128x16xi1>, vector<128x16xf32>
    %123 = arith.minimumf %117, %122 : vector<128x16xf32>
    %c96_i32_40 = arith.constant 96 : i32
    %124 = tpu.dynamic_rotate %105 by %c96_i32_40 dim 0 : vector<128x16xf32>, i32 -> vector<128x16xf32>
    %cst_41 = arith.constant 0x7F800000 : f32
    %125 = vector.shape_cast %53 : vector<128x1xi1> to vector<128x1xi1>
    %126 = vector.broadcast %125 : vector<128x1xi1> to vector<128x16xi1>
    %127 = vector.broadcast %cst_41 : f32 to vector<128x16xf32>
    %128 = arith.select %126, %124, %127 : vector<128x16xi1>, vector<128x16xf32>
    %129 = arith.minimumf %123, %128 : vector<128x16xf32>
    %c48_i32_42 = arith.constant 48 : i32
    %130 = tpu.dynamic_rotate %105 by %c48_i32_42 dim 0 : vector<128x16xf32>, i32 -> vector<128x16xf32>
    %cst_43 = arith.constant 0x7F800000 : f32
    %131 = vector.shape_cast %55 : vector<128x1xi1> to vector<128x1xi1>
    %132 = vector.broadcast %131 : vector<128x1xi1> to vector<128x16xi1>
    %133 = vector.broadcast %cst_43 : f32 to vector<128x16xf32>
    %134 = arith.select %132, %130, %133 : vector<128x16xi1>, vector<128x16xf32>
    %135 = arith.minimumf %129, %134 : vector<128x16xf32>
    %c80_i32_44 = arith.constant 80 : i32
    %136 = tpu.dynamic_rotate %105 by %c80_i32_44 dim 0 : vector<128x16xf32>, i32 -> vector<128x16xf32>
    %cst_45 = arith.constant 0x7F800000 : f32
    %137 = vector.shape_cast %57 : vector<128x1xi1> to vector<128x1xi1>
    %138 = vector.broadcast %137 : vector<128x1xi1> to vector<128x16xi1>
    %139 = vector.broadcast %cst_45 : f32 to vector<128x16xf32>
    %140 = arith.select %138, %136, %139 : vector<128x16xi1>, vector<128x16xf32>
    %141 = arith.minimumf %135, %140 : vector<128x16xf32>
    %c1_i32_46 = arith.constant 1 : i32
    %142 = tpu.dynamic_rotate %1 by %c1_i32_46 dim 1 : vector<128x16xf32>, i32 -> vector<128x16xf32>
    %cst_47 = arith.constant 0x7F800000 : f32
    %143 = vector.shape_cast %10 : vector<1x16xi1> to vector<1x16xi1>
    %144 = vector.broadcast %143 : vector<1x16xi1> to vector<128x16xi1>
    %145 = vector.broadcast %cst_47 : f32 to vector<128x16xf32>
    %146 = arith.select %144, %142, %145 : vector<128x16xi1>, vector<128x16xf32>
    %147 = arith.minimumf %1, %146 : vector<128x16xf32>
    %c15_i32_48 = arith.constant 15 : i32
    %148 = tpu.dynamic_rotate %1 by %c15_i32_48 dim 1 : vector<128x16xf32>, i32 -> vector<128x16xf32>
    %cst_49 = arith.constant 0x7F800000 : f32
    %149 = vector.shape_cast %15 : vector<1x16xi1> to vector<1x16xi1>
    %150 = vector.broadcast %149 : vector<1x16xi1> to vector<128x16xi1>
    %151 = vector.broadcast %cst_49 : f32 to vector<128x16xf32>
    %152 = arith.select %150, %148, %151 : vector<128x16xi1>, vector<128x16xf32>
    %153 = arith.minimumf %147, %152 : vector<128x16xf32>
    %c2_i32_50 = arith.constant 2 : i32
    %154 = tpu.dynamic_rotate %1 by %c2_i32_50 dim 1 : vector<128x16xf32>, i32 -> vector<128x16xf32>
    %cst_51 = arith.constant 0x7F800000 : f32
    %155 = vector.shape_cast %30 : vector<1x16xi1> to vector<1x16xi1>
    %156 = vector.broadcast %155 : vector<1x16xi1> to vector<128x16xi1>
    %157 = vector.broadcast %cst_51 : f32 to vector<128x16xf32>
    %158 = arith.select %156, %154, %157 : vector<128x16xi1>, vector<128x16xf32>
    %159 = arith.minimumf %153, %158 : vector<128x16xf32>
    %c14_i32_52 = arith.constant 14 : i32
    %160 = tpu.dynamic_rotate %1 by %c14_i32_52 dim 1 : vector<128x16xf32>, i32 -> vector<128x16xf32>
    %cst_53 = arith.constant 0x7F800000 : f32
    %161 = vector.shape_cast %35 : vector<1x16xi1> to vector<1x16xi1>
    %162 = vector.broadcast %161 : vector<1x16xi1> to vector<128x16xi1>
    %163 = vector.broadcast %cst_53 : f32 to vector<128x16xf32>
    %164 = arith.select %162, %160, %163 : vector<128x16xi1>, vector<128x16xf32>
    %165 = arith.minimumf %159, %164 : vector<128x16xf32>
    %c1_i32_54 = arith.constant 1 : i32
    %166 = tpu.dynamic_rotate %165 by %c1_i32_54 dim 0 : vector<128x16xf32>, i32 -> vector<128x16xf32>
    %cst_55 = arith.constant 0x7F800000 : f32
    %167 = vector.shape_cast %20 : vector<128x1xi1> to vector<128x1xi1>
    %168 = vector.broadcast %167 : vector<128x1xi1> to vector<128x16xi1>
    %169 = vector.broadcast %cst_55 : f32 to vector<128x16xf32>
    %170 = arith.select %168, %166, %169 : vector<128x16xi1>, vector<128x16xf32>
    %171 = arith.minimumf %165, %170 : vector<128x16xf32>
    %c127_i32_56 = arith.constant 127 : i32
    %172 = tpu.dynamic_rotate %165 by %c127_i32_56 dim 0 : vector<128x16xf32>, i32 -> vector<128x16xf32>
    %cst_57 = arith.constant 0x7F800000 : f32
    %173 = vector.shape_cast %25 : vector<128x1xi1> to vector<128x1xi1>
    %174 = vector.broadcast %173 : vector<128x1xi1> to vector<128x16xi1>
    %175 = vector.broadcast %cst_57 : f32 to vector<128x16xf32>
    %176 = arith.select %174, %172, %175 : vector<128x16xi1>, vector<128x16xf32>
    %177 = arith.minimumf %171, %176 : vector<128x16xf32>
    %c2_i32_58 = arith.constant 2 : i32
    %178 = tpu.dynamic_rotate %165 by %c2_i32_58 dim 0 : vector<128x16xf32>, i32 -> vector<128x16xf32>
    %cst_59 = arith.constant 0x7F800000 : f32
    %179 = vector.shape_cast %40 : vector<128x1xi1> to vector<128x1xi1>
    %180 = vector.broadcast %179 : vector<128x1xi1> to vector<128x16xi1>
    %181 = vector.broadcast %cst_59 : f32 to vector<128x16xf32>
    %182 = arith.select %180, %178, %181 : vector<128x16xi1>, vector<128x16xf32>
    %183 = arith.minimumf %177, %182 : vector<128x16xf32>
    %c126_i32_60 = arith.constant 126 : i32
    %184 = tpu.dynamic_rotate %165 by %c126_i32_60 dim 0 : vector<128x16xf32>, i32 -> vector<128x16xf32>
    %cst_61 = arith.constant 0x7F800000 : f32
    %185 = vector.shape_cast %45 : vector<128x1xi1> to vector<128x1xi1>
    %186 = vector.broadcast %185 : vector<128x1xi1> to vector<128x16xi1>
    %187 = vector.broadcast %cst_61 : f32 to vector<128x16xf32>
    %188 = arith.select %186, %184, %187 : vector<128x16xi1>, vector<128x16xf32>
    %189 = arith.minimumf %183, %188 : vector<128x16xf32>
    %c16_i32_62 = arith.constant 16 : i32
    %190 = tpu.dynamic_rotate %189 by %c16_i32_62 dim 0 : vector<128x16xf32>, i32 -> vector<128x16xf32>
    %cst_63 = arith.constant 0x7F800000 : f32
    %191 = vector.shape_cast %47 : vector<128x1xi1> to vector<128x1xi1>
    %192 = vector.broadcast %191 : vector<128x1xi1> to vector<128x16xi1>
    %193 = vector.broadcast %cst_63 : f32 to vector<128x16xf32>
    %194 = arith.select %192, %190, %193 : vector<128x16xi1>, vector<128x16xf32>
    %195 = arith.minimumf %189, %194 : vector<128x16xf32>
    %c112_i32_64 = arith.constant 112 : i32
    %196 = tpu.dynamic_rotate %189 by %c112_i32_64 dim 0 : vector<128x16xf32>, i32 -> vector<128x16xf32>
    %cst_65 = arith.constant 0x7F800000 : f32
    %197 = vector.shape_cast %49 : vector<128x1xi1> to vector<128x1xi1>
    %198 = vector.broadcast %197 : vector<128x1xi1> to vector<128x16xi1>
    %199 = vector.broadcast %cst_65 : f32 to vector<128x16xf32>
    %200 = arith.select %198, %196, %199 : vector<128x16xi1>, vector<128x16xf32>
    %201 = arith.minimumf %195, %200 : vector<128x16xf32>
    %c32_i32_66 = arith.constant 32 : i32
    %202 = tpu.dynamic_rotate %189 by %c32_i32_66 dim 0 : vector<128x16xf32>, i32 -> vector<128x16xf32>
    %cst_67 = arith.constant 0x7F800000 : f32
    %203 = vector.shape_cast %51 : vector<128x1xi1> to vector<128x1xi1>
    %204 = vector.broadcast %203 : vector<128x1xi1> to vector<128x16xi1>
    %205 = vector.broadcast %cst_67 : f32 to vector<128x16xf32>
    %206 = arith.select %204, %202, %205 : vector<128x16xi1>, vector<128x16xf32>
    %207 = arith.minimumf %201, %206 : vector<128x16xf32>
    %c96_i32_68 = arith.constant 96 : i32
    %208 = tpu.dynamic_rotate %189 by %c96_i32_68 dim 0 : vector<128x16xf32>, i32 -> vector<128x16xf32>
    %cst_69 = arith.constant 0x7F800000 : f32
    %209 = vector.shape_cast %53 : vector<128x1xi1> to vector<128x1xi1>
    %210 = vector.broadcast %209 : vector<128x1xi1> to vector<128x16xi1>
    %211 = vector.broadcast %cst_69 : f32 to vector<128x16xf32>
    %212 = arith.select %210, %208, %211 : vector<128x16xi1>, vector<128x16xf32>
    %213 = arith.minimumf %207, %212 : vector<128x16xf32>
    %c48_i32_70 = arith.constant 48 : i32
    %214 = tpu.dynamic_rotate %189 by %c48_i32_70 dim 0 : vector<128x16xf32>, i32 -> vector<128x16xf32>
    %cst_71 = arith.constant 0x7F800000 : f32
    %215 = vector.shape_cast %55 : vector<128x1xi1> to vector<128x1xi1>
    %216 = vector.broadcast %215 : vector<128x1xi1> to vector<128x16xi1>
    %217 = vector.broadcast %cst_71 : f32 to vector<128x16xf32>
    %218 = arith.select %216, %214, %217 : vector<128x16xi1>, vector<128x16xf32>
    %219 = arith.minimumf %213, %218 : vector<128x16xf32>
    %c80_i32_72 = arith.constant 80 : i32
    %220 = tpu.dynamic_rotate %189 by %c80_i32_72 dim 0 : vector<128x16xf32>, i32 -> vector<128x16xf32>
    %cst_73 = arith.constant 0x7F800000 : f32
    %221 = vector.shape_cast %57 : vector<128x1xi1> to vector<128x1xi1>
    %222 = vector.broadcast %221 : vector<128x1xi1> to vector<128x16xi1>
    %223 = vector.broadcast %cst_73 : f32 to vector<128x16xf32>
    %224 = arith.select %222, %220, %223 : vector<128x16xi1>, vector<128x16xf32>
    %225 = arith.minimumf %219, %224 : vector<128x16xf32>
    %226 = arith.subf %141, %225 : vector<128x16xf32>
    %c0_i32 = arith.constant 0 : i32
    %227 = vector.broadcast %c0_i32 : i32 to vector<128x1xi32>
    %228 = arith.cmpi eq, %3, %227 : vector<128x1xi32>
    %229 = arith.mulf %226, %226 : vector<128x16xf32>
    %cst_74 = arith.constant 0.000000e+00 : f32
    %230 = vector.shape_cast %228 : vector<128x1xi1> to vector<128x1xi1>
    %231 = vector.broadcast %230 : vector<128x1xi1> to vector<128x16xi1>
    %232 = vector.broadcast %cst_74 : f32 to vector<128x16xf32>
    %233 = arith.select %231, %229, %232 : vector<128x16xi1>, vector<128x16xf32>
    %234 = vector.shape_cast %233 : vector<128x16xf32> to vector<1x128x16xf32>
    %cst_75 = arith.constant dense<0.000000e+00> : vector<1xf32>
    %235 = vector.multi_reduction <add>, %234, %cst_75 [1, 2] : vector<1x128x16xf32> to vector<1xf32>
    %236 = vector.shape_cast %235 : vector<1xf32> to vector<1x1x1xf32>
    %237 = vector.extract %236[0, 0, 0] : f32 from vector<1x1x1xf32>
    %238 = arith.subf %0, %1 : vector<128x16xf32>
    %239 = math.absf %238 : vector<128x16xf32>
    %240 = vector.shape_cast %239 : vector<128x16xf32> to vector<1x128x16xf32>
    %cst_76 = arith.constant dense<0.000000e+00> : vector<1xf32>
    %241 = vector.multi_reduction <add>, %240, %cst_76 [1, 2] : vector<1x128x16xf32> to vector<1xf32>
    %242 = vector.shape_cast %241 : vector<1xf32> to vector<1x1x1xf32>
    %243 = vector.extract %242[0, 0, 0] : f32 from vector<1x1x1xf32>
    %244 = tpu.iota {dimensions = array<i32: 0>} : vector<8x128xi32>
    %245 = tpu.iota {dimensions = array<i32: 1>} : vector<8x128xi32>
    %c0_i32_77 = arith.constant 0 : i32
    %246 = vector.broadcast %c0_i32_77 : i32 to vector<8x128xi32>
    %247 = arith.cmpi eq, %244, %246 : vector<8x128xi32>
    %c0_i32_78 = arith.constant 0 : i32
    %248 = vector.broadcast %c0_i32_78 : i32 to vector<8x128xi32>
    %249 = arith.cmpi eq, %245, %248 : vector<8x128xi32>
    %250 = arith.andi %247, %249 : vector<8x128xi1>
    %c0_i32_79 = arith.constant 0 : i32
    %251 = vector.broadcast %c0_i32_79 : i32 to vector<8x128xi32>
    %252 = arith.cmpi eq, %244, %251 : vector<8x128xi32>
    %c1_i32_80 = arith.constant 1 : i32
    %253 = vector.broadcast %c1_i32_80 : i32 to vector<8x128xi32>
    %254 = arith.cmpi eq, %245, %253 : vector<8x128xi32>
    %255 = arith.andi %252, %254 : vector<8x128xi1>
    %cst_81 = arith.constant 0.000000e+00 : f32
    %256 = vector.broadcast %243 : f32 to vector<8x128xf32>
    %257 = vector.broadcast %cst_81 : f32 to vector<8x128xf32>
    %258 = arith.select %255, %256, %257 : vector<8x128xi1>, vector<8x128xf32>
    %259 = vector.broadcast %237 : f32 to vector<8x128xf32>
    %260 = arith.select %250, %259, %258 : vector<8x128xi1>, vector<8x128xf32>
    %c0_82 = arith.constant 0 : index
    %c0_83 = arith.constant 0 : index
    %c0_84 = arith.constant 0 : index
    %261 = vector.load %arg6[%c0_82, %c0_83, %c0_84] : memref<1x8x128xf32, #tpu.memory_space<vmem>>, vector<1x8x128xf32>
    %262 = vector.shape_cast %261 : vector<1x8x128xf32> to vector<8x128xf32>
    %263 = vector.shape_cast %260 : vector<8x128xf32> to vector<1x8x128xf32>
    tpu.vector_store %arg6[%c0_82, %c0_83, %c0_84], %263 {strides = array<i32>} : memref<1x8x128xf32, #tpu.memory_space<vmem>>, vector<1x8x128xf32>,
    return
  }
  func.func @transform_0(%arg0: i32) -> (i32, i32) {
    %c0_i32 = arith.constant 0 : i32
    %c0_i32_0 = arith.constant 0 : i32
    return %arg0, %c0_i32 : i32, i32
  }
  func.func @transform_1(%arg0: i32) -> (i32, i32) {
    %c0_i32 = arith.constant 0 : i32
    %c0_i32_0 = arith.constant 0 : i32
    return %arg0, %c0_i32 : i32, i32
  }
  func.func @transform_2(%arg0: i32) -> (i32, i32) {
    %c0_i32 = arith.constant 0 : i32
    %c0_i32_0 = arith.constant 0 : i32
    %c0_i32_1 = arith.constant 0 : i32
    return %c0_i32, %c0_i32_0 : i32, i32
  }
  func.func @transform_3(%arg0: i32) -> (i32, i32) {
    %c0_i32 = arith.constant 0 : i32
    %c0_i32_0 = arith.constant 0 : i32
    %c0_i32_1 = arith.constant 0 : i32
    return %c0_i32, %c0_i32_0 : i32, i32
  }
  func.func @transform_4(%arg0: i32) -> (i32, i32) {
    %c0_i32 = arith.constant 0 : i32
    %c0_i32_0 = arith.constant 0 : i32
    %c0_i32_1 = arith.constant 0 : i32
    return %c0_i32, %c0_i32_0 : i32, i32
  }
  func.func @transform_5(%arg0: i32) -> (i32, i32, i32) {
    %c0_i32 = arith.constant 0 : i32
    %c0_i32_0 = arith.constant 0 : i32
    %c0_i32_1 = arith.constant 0 : i32
    return %arg0, %c0_i32, %c0_i32_0 : i32, i32, i32
  }
}

</mosaic_0001>

<llo_original>
// kernel: myloss.1
$region0: #{myloss.1}
  #allocation0 [shape = 'u32[]', space=smem, size = 0x4, offset = 0x4, fixed_abs, tag = 'smem constant byte address 0x4 - core index']
  #allocation1 [shape = 'u32[72,128]{1,0:T(1,128)}', space=vmem, size = 0x9000, scoped, tag = 'internal scratch']
  %s0 = inlined_call_operand.vmem [shape: f32[128,16], index: 0, kind: input, shape index: {}]
  %s1 = inlined_call_operand.vmem [shape: f32[128,16], index: 1, kind: input, shape index: {}]
  %s2 = inlined_call_operand.vmem [shape: s32[128,1], index: 2, kind: input, shape index: {}]
  %s3 = inlined_call_operand.vmem [shape: s32[128,1], index: 3, kind: input, shape index: {}]
  %s4 = inlined_call_operand.vmem [shape: s32[128,1], index: 4, kind: input, shape index: {}]
  %s5 = inlined_call_operand.vmem [shape: f32[1,8,128], index: 5, kind: output, shape index: {}]
  %s6 = sld [smem:[#allocation0]]
  $region30: #{myloss.1} parent=0
    _
  %s8 = ssub.s32 1, %s6
  %s9 = scalar_select 0, %s8, %s6
  // Predicated region
  $region2: #{myloss.1} parent=0 // pred_check
    _
  $region3: #{myloss.1} parent=0 // pred_check_branch
    %11 = sbr.rel (0) target = $region5
  $region4: #{myloss.1} parent=0 // pred_region
    _
  $region5: #{myloss.1} parent=0 // pred_fallthru
    _
  // Predicated region
  $region6: #{myloss.1} parent=0 // pred_check
    _
  $region7: #{myloss.1} parent=0 // pred_check_branch
    %13 = sbr.rel (0) target = $region9
  $region8: #{myloss.1} parent=0 // pred_region
    _
  $region9: #{myloss.1} parent=0 // pred_fallthru
    _
  // Predicated region
  $region10: #{myloss.1} parent=0 // pred_check
    _
  $region11: #{myloss.1} parent=0 // pred_check_branch
    %15 = sbr.rel (0) target = $region13
  $region12: #{myloss.1} parent=0 // pred_region
    _
  $region13: #{myloss.1} parent=0 // pred_fallthru
    _
  // Predicated region
  $region14: #{myloss.1} parent=0 // pred_check
    _
  $region15: #{myloss.1} parent=0 // pred_check_branch
    %17 = sbr.rel (0) target = $region17
  $region16: #{myloss.1} parent=0 // pred_region
    _
  $region17: #{myloss.1} parent=0 // pred_fallthru
    _
  // Predicated region
  $region18: #{myloss.1} parent=0 // pred_check
    _
  $region19: #{myloss.1} parent=0 // pred_check_branch
    %19 = sbr.rel (0) target = $region21
  $region20: #{myloss.1} parent=0 // pred_region
    _
  $region21: #{myloss.1} parent=0 // pred_fallthru
    _
  %v20 = vld [vmem:[%s0] sm:$0xff]
  %v21 = vld [vmem:[%s0 + $0x8] sm:$0xff]
  %v22 = vld [vmem:[%s0 + $0x10] sm:$0xff]
  %v23 = vld [vmem:[%s0 + $0x18] sm:$0xff]
  %v24 = vld [vmem:[%s0 + $0x20] sm:$0xff]
  %v25 = vld [vmem:[%s0 + $0x28] sm:$0xff]
  %v26 = vld [vmem:[%s0 + $0x30] sm:$0xff]
  %v27 = vld [vmem:[%s0 + $0x38] sm:$0xff]
  %v28 = vld [vmem:[%s0 + $0x40] sm:$0xff]
  %v29 = vld [vmem:[%s0 + $0x48] sm:$0xff]
  %v30 = vld [vmem:[%s0 + $0x50] sm:$0xff]
  %v31 = vld [vmem:[%s0 + $0x58] sm:$0xff]
  %v32 = vld [vmem:[%s0 + $0x60] sm:$0xff]
  %v33 = vld [vmem:[%s0 + $0x68] sm:$0xff]
  %v34 = vld [vmem:[%s0 + $0x70] sm:$0xff]
  %v35 = vld [vmem:[%s0 + $0x78] sm:$0xff]
  %v36 = vld [vmem:[%s1] sm:$0xff]
  %v37 = vld [vmem:[%s1 + $0x8] sm:$0xff]
  %v38 = vld [vmem:[%s1 + $0x10] sm:$0xff]
  %v39 = vld [vmem:[%s1 + $0x18] sm:$0xff]
  %v40 = vld [vmem:[%s1 + $0x20] sm:$0xff]
  %v41 = vld [vmem:[%s1 + $0x28] sm:$0xff]
  %v42 = vld [vmem:[%s1 + $0x30] sm:$0xff]
  %v43 = vld [vmem:[%s1 + $0x38] sm:$0xff]
  %v44 = vld [vmem:[%s1 + $0x40] sm:$0xff]
  %v45 = vld [vmem:[%s1 + $0x48] sm:$0xff]
  %v46 = vld [vmem:[%s1 + $0x50] sm:$0xff]
  %v47 = vld [vmem:[%s1 + $0x58] sm:$0xff]
  %v48 = vld [vmem:[%s1 + $0x60] sm:$0xff]
  %v49 = vld [vmem:[%s1 + $0x68] sm:$0xff]
  %v50 = vld [vmem:[%s1 + $0x70] sm:$0xff]
  %v51 = vld [vmem:[%s1 + $0x78] sm:$0xff]
  %v52 = vld [vmem:[%s2] sm:$0xff]
  %v53 = vld [vmem:[%s2 + $0x8] sm:$0xff]
  %v54 = vld [vmem:[%s2 + $0x10] sm:$0xff]
  %v55 = vld [vmem:[%s2 + $0x18] sm:$0xff]
  %v56 = vld [vmem:[%s2 + $0x20] sm:$0xff]
  %v57 = vld [vmem:[%s2 + $0x28] sm:$0xff]
  %v58 = vld [vmem:[%s2 + $0x30] sm:$0xff]
  %v59 = vld [vmem:[%s2 + $0x38] sm:$0xff]
  %v60 = vld [vmem:[%s2 + $0x40] sm:$0xff]
  %v61 = vld [vmem:[%s2 + $0x48] sm:$0xff]
  %v62 = vld [vmem:[%s2 + $0x50] sm:$0xff]
  %v63 = vld [vmem:[%s2 + $0x58] sm:$0xff]
  %v64 = vld [vmem:[%s2 + $0x60] sm:$0xff]
  %v65 = vld [vmem:[%s2 + $0x68] sm:$0xff]
  %v66 = vld [vmem:[%s2 + $0x70] sm:$0xff]
  %v67 = vld [vmem:[%s2 + $0x78] sm:$0xff]
  %v68 = vld [vmem:[%s3] sm:$0xff]
  %v69 = vld [vmem:[%s3 + $0x8] sm:$0xff]
  %v70 = vld [vmem:[%s3 + $0x10] sm:$0xff]
  %v71 = vld [vmem:[%s3 + $0x18] sm:$0xff]
  %v72 = vld [vmem:[%s3 + $0x20] sm:$0xff]
  %v73 = vld [vmem:[%s3 + $0x28] sm:$0xff]
  %v74 = vld [vmem:[%s3 + $0x30] sm:$0xff]
  %v75 = vld [vmem:[%s3 + $0x38] sm:$0xff]
  %v76 = vld [vmem:[%s3 + $0x40] sm:$0xff]
  %v77 = vld [vmem:[%s3 + $0x48] sm:$0xff]
  %v78 = vld [vmem:[%s3 + $0x50] sm:$0xff]
  %v79 = vld [vmem:[%s3 + $0x58] sm:$0xff]
  %v80 = vld [vmem:[%s3 + $0x60] sm:$0xff]
  %v81 = vld [vmem:[%s3 + $0x68] sm:$0xff]
  %v82 = vld [vmem:[%s3 + $0x70] sm:$0xff]
  %v83 = vld [vmem:[%s3 + $0x78] sm:$0xff]
  %v84 = vld [vmem:[%s4] sm:$0xff]
  %v85 = vld [vmem:[%s4 + $0x8] sm:$0xff]
  %v86 = vld [vmem:[%s4 + $0x10] sm:$0xff]
  %v87 = vld [vmem:[%s4 + $0x18] sm:$0xff]
  %v88 = vld [vmem:[%s4 + $0x20] sm:$0xff]
  %v89 = vld [vmem:[%s4 + $0x28] sm:$0xff]
  %v90 = vld [vmem:[%s4 + $0x30] sm:$0xff]
  %v91 = vld [vmem:[%s4 + $0x38] sm:$0xff]
  %v92 = vld [vmem:[%s4 + $0x40] sm:$0xff]
  %v93 = vld [vmem:[%s4 + $0x48] sm:$0xff]
  %v94 = vld [vmem:[%s4 + $0x50] sm:$0xff]
  %v95 = vld [vmem:[%s4 + $0x58] sm:$0xff]
  %v96 = vld [vmem:[%s4 + $0x60] sm:$0xff]
  %v97 = vld [vmem:[%s4 + $0x68] sm:$0xff]
  %v98 = vld [vmem:[%s4 + $0x70] sm:$0xff]
  %v99 = vld [vmem:[%s4 + $0x78] sm:$0xff]
  %v100 = vlaneseq
  %v101 = vand.u32 %v100, 127
  %vm102 = vcmask 1047680
  %103 = vrot.lane.b32.xlu0 %v101, 16
  %v104 = vpop.permute.xlu0 %103
  %v105 = vsel %vm102, %v104, %v101
  %106 = vrot.lane.b32.xlu0 %v105, 16
  %v107 = vpop.permute.xlu0 %106
  %v108 = vsel %vm102, %v107, %v101
  %109 = vrot.lane.b32.xlu0 %v101, 15
  %v110 = vpop.permute.xlu0 %109
  %v111 = vsub.s32 %v108, %v110
  %vm112 = vcmp.lt.s32.totalorder %v111, 0
  %v113 = vsub.s32 0, %v111
  %v114 = vsel %vm112, %v113, %v111
  %vm115 = vcmp.le.s32.totalorder %v114, 2
  %116 = vrot.lane.b32.xlu0 %v101, 1
  %v117 = vpop.permute.xlu0 %116
  %v118 = vsub.s32 %v108, %v117
  %vm119 = vcmp.lt.s32.totalorder %v118, 0
  %v120 = vsub.s32 0, %v118
  %v121 = vsel %vm119, %v120, %v118
  %vm122 = vcmp.le.s32.totalorder %v121, 2
  %v123 = vrot.slane %v52, 7
  %v124 = vrot.slane %v53, 7
  %v125 = vrot.slane %v54, 7
  %v126 = vrot.slane %v55, 7
  %v127 = vrot.slane %v56, 7
  %v128 = vrot.slane %v57, 7
  %v129 = vrot.slane %v58, 7
  %v130 = vrot.slane %v59, 7
  %v131 = vrot.slane %v60, 7
  %v132 = vrot.slane %v61, 7
  %v133 = vrot.slane %v62, 7
  %v134 = vrot.slane %v63, 7
  %v135 = vrot.slane %v64, 7
  %v136 = vrot.slane %v65, 7
  %v137 = vrot.slane %v66, 7
  %v138 = vrot.slane %v67, 7
  %v139 = vlaneseq
  %v140 = vshrl.u32 %v139, 7
  %vm141 = vcmp.lt.s32.totalorder %v140, 1
  %v142 = vsel %vm141, %v137, %v138
  %v143 = vsel %vm141, %v136, %v137
  %v144 = vsel %vm141, %v135, %v136
  %v145 = vsel %vm141, %v134, %v135
  %v146 = vsel %vm141, %v133, %v134
  %v147 = vsel %vm141, %v132, %v133
  %v148 = vsel %vm141, %v131, %v132
  %v149 = vsel %vm141, %v130, %v131
  %v150 = vsel %vm141, %v129, %v130
  %v151 = vsel %vm141, %v128, %v129
  %v152 = vsel %vm141, %v127, %v128
  %v153 = vsel %vm141, %v126, %v127
  %v154 = vsel %vm141, %v125, %v126
  %v155 = vsel %vm141, %v124, %v125
  %v156 = vsel %vm141, %v123, %v124
  %v157 = vsel %vm141, %v138, %v123
  %v158 = vsub.s32 %v157, %v52
  %v159 = vsub.s32 %v156, %v53
  %v160 = vsub.s32 %v155, %v54
  %v161 = vsub.s32 %v154, %v55
  %v162 = vsub.s32 %v153, %v56
  %v163 = vsub.s32 %v152, %v57
  %v164 = vsub.s32 %v151, %v58
  %v165 = vsub.s32 %v150, %v59
  %v166 = vsub.s32 %v149, %v60
  %v167 = vsub.s32 %v148, %v61
  %v168 = vsub.s32 %v147, %v62
  %v169 = vsub.s32 %v146, %v63
  %v170 = vsub.s32 %v145, %v64
  %v171 = vsub.s32 %v144, %v65
  %v172 = vsub.s32 %v143, %v66
  %v173 = vsub.s32 %v142, %v67
  %vm174 = vcmp.lt.s32.totalorder %v158, 0
  %v175 = vsub.s32 0, %v158
  %v176 = vsel %vm174, %v175, %v158
  %vm177 = vcmp.lt.s32.totalorder %v159, 0
  %v178 = vsub.s32 0, %v159
  %v179 = vsel %vm177, %v178, %v159
  %vm180 = vcmp.lt.s32.totalorder %v160, 0
  %v181 = vsub.s32 0, %v160
  %v182 = vsel %vm180, %v181, %v160
  %vm183 = vcmp.lt.s32.totalorder %v161, 0
  %v184 = vsub.s32 0, %v161
  %v185 = vsel %vm183, %v184, %v161
  %vm186 = vcmp.lt.s32.totalorder %v162, 0
  %v187 = vsub.s32 0, %v162
  %v188 = vsel %vm186, %v187, %v162
  %vm189 = vcmp.lt.s32.totalorder %v163, 0
  %v190 = vsub.s32 0, %v163
  %v191 = vsel %vm189, %v190, %v163
  %vm192 = vcmp.lt.s32.totalorder %v164, 0
  %v193 = vsub.s32 0, %v164
  %v194 = vsel %vm192, %v193, %v164
  %vm195 = vcmp.lt.s32.totalorder %v165, 0
  %v196 = vsub.s32 0, %v165
  %v197 = vsel %vm195, %v196, %v165
  %vm198 = vcmp.lt.s32.totalorder %v166, 0
  %v199 = vsub.s32 0, %v166
  %v200 = vsel %vm198, %v199, %v166
  %vm201 = vcmp.lt.s32.totalorder %v167, 0
  %v202 = vsub.s32 0, %v167
  %v203 = vsel %vm201, %v202, %v167
  %vm204 = vcmp.lt.s32.totalorder %v168, 0
  %v205 = vsub.s32 0, %v168
  %v206 = vsel %vm204, %v205, %v168
  %vm207 = vcmp.lt.s32.totalorder %v169, 0
  %v208 = vsub.s32 0, %v169
  %v209 = vsel %vm207, %v208, %v169
  %vm210 = vcmp.lt.s32.totalorder %v170, 0
  %v211 = vsub.s32 0, %v170
  %v212 = vsel %vm210, %v211, %v170
  %vm213 = vcmp.lt.s32.totalorder %v171, 0
  %v214 = vsub.s32 0, %v171
  %v215 = vsel %vm213, %v214, %v171
  %vm216 = vcmp.lt.s32.totalorder %v172, 0
  %v217 = vsub.s32 0, %v172
  %v218 = vsel %vm216, %v217, %v172
  %vm219 = vcmp.lt.s32.totalorder %v173, 0
  %v220 = vsub.s32 0, %v173
  %v221 = vsel %vm219, %v220, %v173
  %vm222 = vcmp.le.s32.totalorder %v176, 2
  %vm223 = vcmp.le.s32.totalorder %v179, 2
  %vm224 = vcmp.le.s32.totalorder %v182, 2
  %vm225 = vcmp.le.s32.totalorder %v185, 2
  %vm226 = vcmp.le.s32.totalorder %v188, 2
  %vm227 = vcmp.le.s32.totalorder %v191, 2
  %vm228 = vcmp.le.s32.totalorder %v194, 2
  %vm229 = vcmp.le.s32.totalorder %v197, 2
  %vm230 = vcmp.le.s32.totalorder %v200, 2
  %vm231 = vcmp.le.s32.totalorder %v203, 2
  %vm232 = vcmp.le.s32.totalorder %v206, 2
  %vm233 = vcmp.le.s32.totalorder %v209, 2
  %vm234 = vcmp.le.s32.totalorder %v212, 2
  %vm235 = vcmp.le.s32.totalorder %v215, 2
  %vm236 = vcmp.le.s32.totalorder %v218, 2
  %vm237 = vcmp.le.s32.totalorder %v221, 2
  %v238 = vrot.slane %v52, 1
  %v239 = vrot.slane %v53, 1
  %v240 = vrot.slane %v54, 1
  %v241 = vrot.slane %v55, 1
  %v242 = vrot.slane %v56, 1
  %v243 = vrot.slane %v57, 1
  %v244 = vrot.slane %v58, 1
  %v245 = vrot.slane %v59, 1
  %v246 = vrot.slane %v60, 1
  %v247 = vrot.slane %v61, 1
  %v248 = vrot.slane %v62, 1
  %v249 = vrot.slane %v63, 1
  %v250 = vrot.slane %v64, 1
  %v251 = vrot.slane %v65, 1
  %v252 = vrot.slane %v66, 1
  %v253 = vrot.slane %v67, 1
  %vm254 = vcmp.lt.s32.totalorder %v140, 7
  %v255 = vsel %vm254, %v252, %v253
  %v256 = vsel %vm254, %v251, %v252
  %v257 = vsel %vm254, %v250, %v251
  %v258 = vsel %vm254, %v249, %v250
  %v259 = vsel %vm254, %v248, %v249
  %v260 = vsel %vm254, %v247, %v248
  %v261 = vsel %vm254, %v246, %v247
  %v262 = vsel %vm254, %v245, %v246
  %v263 = vsel %vm254, %v244, %v245
  %v264 = vsel %vm254, %v243, %v244
  %v265 = vsel %vm254, %v242, %v243
  %v266 = vsel %vm254, %v241, %v242
  %v267 = vsel %vm254, %v240, %v241
  %v268 = vsel %vm254, %v239, %v240
  %v269 = vsel %vm254, %v238, %v239
  %v270 = vsel %vm254, %v253, %v238
  %v271 = vsub.s32 %v269, %v52
  %v272 = vsub.s32 %v268, %v53
  %v273 = vsub.s32 %v267, %v54
  %v274 = vsub.s32 %v266, %v55
  %v275 = vsub.s32 %v265, %v56
  %v276 = vsub.s32 %v264, %v57
  %v277 = vsub.s32 %v263, %v58
  %v278 = vsub.s32 %v262, %v59
  %v279 = vsub.s32 %v261, %v60
  %v280 = vsub.s32 %v260, %v61
  %v281 = vsub.s32 %v259, %v62
  %v282 = vsub.s32 %v258, %v63
  %v283 = vsub.s32 %v257, %v64
  %v284 = vsub.s32 %v256, %v65
  %v285 = vsub.s32 %v255, %v66
  %v286 = vsub.s32 %v270, %v67
  %vm287 = vcmp.lt.s32.totalorder %v271, 0
  %v288 = vsub.s32 0, %v271
  %v289 = vsel %vm287, %v288, %v271
  %vm290 = vcmp.lt.s32.totalorder %v272, 0
  %v291 = vsub.s32 0, %v272
  %v292 = vsel %vm290, %v291, %v272
  %vm293 = vcmp.lt.s32.totalorder %v273, 0
  %v294 = vsub.s32 0, %v273
  %v295 = vsel %vm293, %v294, %v273
  %vm296 = vcmp.lt.s32.totalorder %v274, 0
  %v297 = vsub.s32 0, %v274
  %v298 = vsel %vm296, %v297, %v274
  %vm299 = vcmp.lt.s32.totalorder %v275, 0
  %v300 = vsub.s32 0, %v275
  %v301 = vsel %vm299, %v300, %v275
  %vm302 = vcmp.lt.s32.totalorder %v276, 0
  %v303 = vsub.s32 0, %v276
  %v304 = vsel %vm302, %v303, %v276
  %vm305 = vcmp.lt.s32.totalorder %v277, 0
  %v306 = vsub.s32 0, %v277
  %v307 = vsel %vm305, %v306, %v277
  %vm308 = vcmp.lt.s32.totalorder %v278, 0
  %v309 = vsub.s32 0, %v278
  %v310 = vsel %vm308, %v309, %v278
  %vm311 = vcmp.lt.s32.totalorder %v279, 0
  %v312 = vsub.s32 0, %v279
  %v313 = vsel %vm311, %v312, %v279
  %vm314 = vcmp.lt.s32.totalorder %v280, 0
  %v315 = vsub.s32 0, %v280
  %v316 = vsel %vm314, %v315, %v280
  %vm317 = vcmp.lt.s32.totalorder %v281, 0
  %v318 = vsub.s32 0, %v281
  %v319 = vsel %vm317, %v318, %v281
  %vm320 = vcmp.lt.s32.totalorder %v282, 0
  %v321 = vsub.s32 0, %v282
  %v322 = vsel %vm320, %v321, %v282
  %vm323 = vcmp.lt.s32.totalorder %v283, 0
  %v324 = vsub.s32 0, %v283
  %v325 = vsel %vm323, %v324, %v283
  %vm326 = vcmp.lt.s32.totalorder %v284, 0
  %v327 = vsub.s32 0, %v284
  %v328 = vsel %vm326, %v327, %v284
  %vm329 = vcmp.lt.s32.totalorder %v285, 0
  %v330 = vsub.s32 0, %v285
  %v331 = vsel %vm329, %v330, %v285
  %vm332 = vcmp.lt.s32.totalorder %v286, 0
  %v333 = vsub.s32 0, %v286
  %v334 = vsel %vm332, %v333, %v286
  %vm335 = vcmp.le.s32.totalorder %v289, 2
  %vm336 = vcmp.le.s32.totalorder %v292, 2
  %vm337 = vcmp.le.s32.totalorder %v295, 2
  %vm338 = vcmp.le.s32.totalorder %v298, 2
  %vm339 = vcmp.le.s32.totalorder %v301, 2
  %vm340 = vcmp.le.s32.totalorder %v304, 2
  %vm341 = vcmp.le.s32.totalorder %v307, 2
  %vm342 = vcmp.le.s32.totalorder %v310, 2
  %vm343 = vcmp.le.s32.totalorder %v313, 2
  %vm344 = vcmp.le.s32.totalorder %v316, 2
  %vm345 = vcmp.le.s32.totalorder %v319, 2
  %vm346 = vcmp.le.s32.totalorder %v322, 2
  %vm347 = vcmp.le.s32.totalorder %v325, 2
  %vm348 = vcmp.le.s32.totalorder %v328, 2
  %vm349 = vcmp.le.s32.totalorder %v331, 2
  %vm350 = vcmp.le.s32.totalorder %v334, 2
  %351 = vrot.lane.b32.xlu0 %v101, 14
  %v352 = vpop.permute.xlu0 %351
  %v353 = vsub.s32 %v108, %v352
  %vm354 = vcmp.lt.s32.totalorder %v353, 0
  %v355 = vsub.s32 0, %v353
  %v356 = vsel %vm354, %v355, %v353
  %vm357 = vcmp.le.s32.totalorder %v356, 2
  %358 = vrot.lane.b32.xlu0 %v101, 2
  %v359 = vpop.permute.xlu0 %358
  %v360 = vsub.s32 %v108, %v359
  %vm361 = vcmp.lt.s32.totalorder %v360, 0
  %v362 = vsub.s32 0, %v360
  %v363 = vsel %vm361, %v362, %v360
  %vm364 = vcmp.le.s32.totalorder %v363, 2
  %v365 = vrot.slane %v52, 6
  %v366 = vrot.slane %v53, 6
  %v367 = vrot.slane %v54, 6
  %v368 = vrot.slane %v55, 6
  %v369 = vrot.slane %v56, 6
  %v370 = vrot.slane %v57, 6
  %v371 = vrot.slane %v58, 6
  %v372 = vrot.slane %v59, 6
  %v373 = vrot.slane %v60, 6
  %v374 = vrot.slane %v61, 6
  %v375 = vrot.slane %v62, 6
  %v376 = vrot.slane %v63, 6
  %v377 = vrot.slane %v64, 6
  %v378 = vrot.slane %v65, 6
  %v379 = vrot.slane %v66, 6
  %v380 = vrot.slane %v67, 6
  %vm381 = vcmp.lt.s32.totalorder %v140, 2
  %v382 = vsel %vm381, %v379, %v380
  %v383 = vsel %vm381, %v378, %v379
  %v384 = vsel %vm381, %v377, %v378
  %v385 = vsel %vm381, %v376, %v377
  %v386 = vsel %vm381, %v375, %v376
  %v387 = vsel %vm381, %v374, %v375
  %v388 = vsel %vm381, %v373, %v374
  %v389 = vsel %vm381, %v372, %v373
  %v390 = vsel %vm381, %v371, %v372
  %v391 = vsel %vm381, %v370, %v371
  %v392 = vsel %vm381, %v369, %v370
  %v393 = vsel %vm381, %v368, %v369
  %v394 = vsel %vm381, %v367, %v368
  %v395 = vsel %vm381, %v366, %v367
  %v396 = vsel %vm381, %v365, %v366
  %v397 = vsel %vm381, %v380, %v365
  %v398 = vsub.s32 %v397, %v52
  %v399 = vsub.s32 %v396, %v53
  %v400 = vsub.s32 %v395, %v54
  %v401 = vsub.s32 %v394, %v55
  %v402 = vsub.s32 %v393, %v56
  %v403 = vsub.s32 %v392, %v57
  %v404 = vsub.s32 %v391, %v58
  %v405 = vsub.s32 %v390, %v59
  %v406 = vsub.s32 %v389, %v60
  %v407 = vsub.s32 %v388, %v61
  %v408 = vsub.s32 %v387, %v62
  %v409 = vsub.s32 %v386, %v63
  %v410 = vsub.s32 %v385, %v64
  %v411 = vsub.s32 %v384, %v65
  %v412 = vsub.s32 %v383, %v66
  %v413 = vsub.s32 %v382, %v67
  %vm414 = vcmp.lt.s32.totalorder %v398, 0
  %v415 = vsub.s32 0, %v398
  %v416 = vsel %vm414, %v415, %v398
  %vm417 = vcmp.lt.s32.totalorder %v399, 0
  %v418 = vsub.s32 0, %v399
  %v419 = vsel %vm417, %v418, %v399
  %vm420 = vcmp.lt.s32.totalorder %v400, 0
  %v421 = vsub.s32 0, %v400
  %v422 = vsel %vm420, %v421, %v400
  %vm423 = vcmp.lt.s32.totalorder %v401, 0
  %v424 = vsub.s32 0, %v401
  %v425 = vsel %vm423, %v424, %v401
  %vm426 = vcmp.lt.s32.totalorder %v402, 0
  %v427 = vsub.s32 0, %v402
  %v428 = vsel %vm426, %v427, %v402
  %vm429 = vcmp.lt.s32.totalorder %v403, 0
  %v430 = vsub.s32 0, %v403
  %v431 = vsel %vm429, %v430, %v403
  %vm432 = vcmp.lt.s32.totalorder %v404, 0
  %v433 = vsub.s32 0, %v404
  %v434 = vsel %vm432, %v433, %v404
  %vm435 = vcmp.lt.s32.totalorder %v405, 0
  %v436 = vsub.s32 0, %v405
  %v437 = vsel %vm435, %v436, %v405
  %vm438 = vcmp.lt.s32.totalorder %v406, 0
  %v439 = vsub.s32 0, %v406
  %v440 = vsel %vm438, %v439, %v406
  %vm441 = vcmp.lt.s32.totalorder %v407, 0
  %v442 = vsub.s32 0, %v407
  %v443 = vsel %vm441, %v442, %v407
  %vm444 = vcmp.lt.s32.totalorder %v408, 0
  %v445 = vsub.s32 0, %v408
  %v446 = vsel %vm444, %v445, %v408
  %vm447 = vcmp.lt.s32.totalorder %v409, 0
  %v448 = vsub.s32 0, %v409
  %v449 = vsel %vm447, %v448, %v409
  %vm450 = vcmp.lt.s32.totalorder %v410, 0
  %v451 = vsub.s32 0, %v410
  %v452 = vsel %vm450, %v451, %v410
  %vm453 = vcmp.lt.s32.totalorder %v411, 0
  %v454 = vsub.s32 0, %v411
  %v455 = vsel %vm453, %v454, %v411
  %vm456 = vcmp.lt.s32.totalorder %v412, 0
  %v457 = vsub.s32 0, %v412
  %v458 = vsel %vm456, %v457, %v412
  %vm459 = vcmp.lt.s32.totalorder %v413, 0
  %v460 = vsub.s32 0, %v413
  %v461 = vsel %vm459, %v460, %v413
  %vm462 = vcmp.le.s32.totalorder %v416, 2
  %vm463 = vcmp.le.s32.totalorder %v419, 2
  %vm464 = vcmp.le.s32.totalorder %v422, 2
  %vm465 = vcmp.le.s32.totalorder %v425, 2
  %vm466 = vcmp.le.s32.totalorder %v428, 2
  %vm467 = vcmp.le.s32.totalorder %v431, 2
  %vm468 = vcmp.le.s32.totalorder %v434, 2
  %vm469 = vcmp.le.s32.totalorder %v437, 2
  %vm470 = vcmp.le.s32.totalorder %v440, 2
  %vm471 = vcmp.le.s32.totalorder %v443, 2
  %vm472 = vcmp.le.s32.totalorder %v446, 2
  %vm473 = vcmp.le.s32.totalorder %v449, 2
  %vm474 = vcmp.le.s32.totalorder %v452, 2
  %vm475 = vcmp.le.s32.totalorder %v455, 2
  %vm476 = vcmp.le.s32.totalorder %v458, 2
  %vm477 = vcmp.le.s32.totalorder %v461, 2
  %v478 = vrot.slane %v52, 2
  %v479 = vrot.slane %v53, 2
  %v480 = vrot.slane %v54, 2
  %v481 = vrot.slane %v55, 2
  %v482 = vrot.slane %v56, 2
  %v483 = vrot.slane %v57, 2
  %v484 = vrot.slane %v58, 2
  %v485 = vrot.slane %v59, 2
  %v486 = vrot.slane %v60, 2
  %v487 = vrot.slane %v61, 2
  %v488 = vrot.slane %v62, 2
  %v489 = vrot.slane %v63, 2
  %v490 = vrot.slane %v64, 2
  %v491 = vrot.slane %v65, 2
  %v492 = vrot.slane %v66, 2
  %v493 = vrot.slane %v67, 2
  %vm494 = vcmp.lt.s32.totalorder %v140, 6
  %v495 = vsel %vm494, %v492, %v493
  %v496 = vsel %vm494, %v491, %v492
  %v497 = vsel %vm494, %v490, %v491
  %v498 = vsel %vm494, %v489, %v490
  %v499 = vsel %vm494, %v488, %v489
  %v500 = vsel %vm494, %v487, %v488
  %v501 = vsel %vm494, %v486, %v487
  %v502 = vsel %vm494, %v485, %v486
  %v503 = vsel %vm494, %v484, %v485
  %v504 = vsel %vm494, %v483, %v484
  %v505 = vsel %vm494, %v482, %v483
  %v506 = vsel %vm494, %v481, %v482
  %v507 = vsel %vm494, %v480, %v481
  %v508 = vsel %vm494, %v479, %v480
  %v509 = vsel %vm494, %v478, %v479
  %v510 = vsel %vm494, %v493, %v478
  %v511 = vsub.s32 %v509, %v52
  %v512 = vsub.s32 %v508, %v53
  %v513 = vsub.s32 %v507, %v54
  %v514 = vsub.s32 %v506, %v55
  %v515 = vsub.s32 %v505, %v56
  %v516 = vsub.s32 %v504, %v57
  %v517 = vsub.s32 %v503, %v58
  %v518 = vsub.s32 %v502, %v59
  %v519 = vsub.s32 %v501, %v60
  %v520 = vsub.s32 %v500, %v61
  %v521 = vsub.s32 %v499, %v62
  %v522 = vsub.s32 %v498, %v63
  %v523 = vsub.s32 %v497, %v64
  %v524 = vsub.s32 %v496, %v65
  %v525 = vsub.s32 %v495, %v66
  %v526 = vsub.s32 %v510, %v67
  %vm527 = vcmp.lt.s32.totalorder %v511, 0
  %v528 = vsub.s32 0, %v511
  %v529 = vsel %vm527, %v528, %v511
  %vm530 = vcmp.lt.s32.totalorder %v512, 0
  %v531 = vsub.s32 0, %v512
  %v532 = vsel %vm530, %v531, %v512
  %vm533 = vcmp.lt.s32.totalorder %v513, 0
  %v534 = vsub.s32 0, %v513
  %v535 = vsel %vm533, %v534, %v513
  %vm536 = vcmp.lt.s32.totalorder %v514, 0
  %v537 = vsub.s32 0, %v514
  %v538 = vsel %vm536, %v537, %v514
  %vm539 = vcmp.lt.s32.totalorder %v515, 0
  %v540 = vsub.s32 0, %v515
  %v541 = vsel %vm539, %v540, %v515
  %vm542 = vcmp.lt.s32.totalorder %v516, 0
  %v543 = vsub.s32 0, %v516
  %v544 = vsel %vm542, %v543, %v516
  %vm545 = vcmp.lt.s32.totalorder %v517, 0
  %v546 = vsub.s32 0, %v517
  %v547 = vsel %vm545, %v546, %v517
  %vm548 = vcmp.lt.s32.totalorder %v518, 0
  %v549 = vsub.s32 0, %v518
  %v550 = vsel %vm548, %v549, %v518
  %vm551 = vcmp.lt.s32.totalorder %v519, 0
  %v552 = vsub.s32 0, %v519
  %v553 = vsel %vm551, %v552, %v519
  %vm554 = vcmp.lt.s32.totalorder %v520, 0
  %v555 = vsub.s32 0, %v520
  %v556 = vsel %vm554, %v555, %v520
  %vm557 = vcmp.lt.s32.totalorder %v521, 0
  %v558 = vsub.s32 0, %v521
  %v559 = vsel %vm557, %v558, %v521
  %vm560 = vcmp.lt.s32.totalorder %v522, 0
  %v561 = vsub.s32 0, %v522
  %v562 = vsel %vm560, %v561, %v522
  %vm563 = vcmp.lt.s32.totalorder %v523, 0
  %v564 = vsub.s32 0, %v523
  %v565 = vsel %vm563, %v564, %v523
  %vm566 = vcmp.lt.s32.totalorder %v524, 0
  %v567 = vsub.s32 0, %v524
  %v568 = vsel %vm566, %v567, %v524
  %vm569 = vcmp.lt.s32.totalorder %v525, 0
  %v570 = vsub.s32 0, %v525
  %v571 = vsel %vm569, %v570, %v525
  %vm572 = vcmp.lt.s32.totalorder %v526, 0
  %v573 = vsub.s32 0, %v526
  %v574 = vsel %vm572, %v573, %v526
  %vm575 = vcmp.le.s32.totalorder %v529, 2
  %vm576 = vcmp.le.s32.totalorder %v532, 2
  %vm577 = vcmp.le.s32.totalorder %v535, 2
  %vm578 = vcmp.le.s32.totalorder %v538, 2
  %vm579 = vcmp.le.s32.totalorder %v541, 2
  %vm580 = vcmp.le.s32.totalorder %v544, 2
  %vm581 = vcmp.le.s32.totalorder %v547, 2
  %vm582 = vcmp.le.s32.totalorder %v550, 2
  %vm583 = vcmp.le.s32.totalorder %v553, 2
  %vm584 = vcmp.le.s32.totalorder %v556, 2
  %vm585 = vcmp.le.s32.totalorder %v559, 2
  %vm586 = vcmp.le.s32.totalorder %v562, 2
  %vm587 = vcmp.le.s32.totalorder %v565, 2
  %vm588 = vcmp.le.s32.totalorder %v568, 2
  %vm589 = vcmp.le.s32.totalorder %v571, 2
  %vm590 = vcmp.le.s32.totalorder %v574, 2
  %vm591 = vcmp.eq.s32.totalorder %v98, %v84
  %vm592 = vcmp.eq.s32.totalorder %v99, %v85
  %vm593 = vcmp.eq.s32.totalorder %v84, %v86
  %vm594 = vcmp.eq.s32.totalorder %v85, %v87
  %vm595 = vcmp.eq.s32.totalorder %v86, %v88
  %vm596 = vcmp.eq.s32.totalorder %v87, %v89
  %vm597 = vcmp.eq.s32.totalorder %v88, %v90
  %vm598 = vcmp.eq.s32.totalorder %v89, %v91
  %vm599 = vcmp.eq.s32.totalorder %v90, %v92
  %vm600 = vcmp.eq.s32.totalorder %v91, %v93
  %vm601 = vcmp.eq.s32.totalorder %v92, %v94
  %vm602 = vcmp.eq.s32.totalorder %v93, %v95
  %vm603 = vcmp.eq.s32.totalorder %v94, %v96
  %vm604 = vcmp.eq.s32.totalorder %v95, %v97
  %vm605 = vcmp.eq.s32.totalorder %v96, %v98
  %vm606 = vcmp.eq.s32.totalorder %v97, %v99
  %vm607 = vcmp.eq.s32.totalorder %v86, %v84
  %vm608 = vcmp.eq.s32.totalorder %v87, %v85
  %vm609 = vcmp.eq.s32.totalorder %v88, %v86
  %vm610 = vcmp.eq.s32.totalorder %v89, %v87
  %vm611 = vcmp.eq.s32.totalorder %v90, %v88
  %vm612 = vcmp.eq.s32.totalorder %v91, %v89
  %vm613 = vcmp.eq.s32.totalorder %v92, %v90
  %vm614 = vcmp.eq.s32.totalorder %v93, %v91
  %vm615 = vcmp.eq.s32.totalorder %v94, %v92
  %vm616 = vcmp.eq.s32.totalorder %v95, %v93
  %vm617 = vcmp.eq.s32.totalorder %v96, %v94
  %vm618 = vcmp.eq.s32.totalorder %v97, %v95
  %vm619 = vcmp.eq.s32.totalorder %v98, %v96
  %vm620 = vcmp.eq.s32.totalorder %v99, %v97
  %vm621 = vcmp.eq.s32.totalorder %v84, %v98
  %vm622 = vcmp.eq.s32.totalorder %v85, %v99
  %vm623 = vcmp.eq.s32.totalorder %v96, %v84
  %vm624 = vcmp.eq.s32.totalorder %v97, %v85
  %vm625 = vcmp.eq.s32.totalorder %v98, %v86
  %vm626 = vcmp.eq.s32.totalorder %v99, %v87
  %vm627 = vcmp.eq.s32.totalorder %v84, %v88
  %vm628 = vcmp.eq.s32.totalorder %v85, %v89
  %vm629 = vcmp.eq.s32.totalorder %v86, %v90
  %vm630 = vcmp.eq.s32.totalorder %v87, %v91
  %vm631 = vcmp.eq.s32.totalorder %v88, %v92
  %vm632 = vcmp.eq.s32.totalorder %v89, %v93
  %vm633 = vcmp.eq.s32.totalorder %v90, %v94
  %vm634 = vcmp.eq.s32.totalorder %v91, %v95
  %vm635 = vcmp.eq.s32.totalorder %v92, %v96
  %vm636 = vcmp.eq.s32.totalorder %v93, %v97
  %vm637 = vcmp.eq.s32.totalorder %v94, %v98
  %vm638 = vcmp.eq.s32.totalorder %v95, %v99
  %vm639 = vcmp.eq.s32.totalorder %v88, %v84
  %vm640 = vcmp.eq.s32.totalorder %v89, %v85
  %vm641 = vcmp.eq.s32.totalorder %v90, %v86
  %vm642 = vcmp.eq.s32.totalorder %v91, %v87
  %vm643 = vcmp.eq.s32.totalorder %v92, %v88
  %vm644 = vcmp.eq.s32.totalorder %v93, %v89
  %vm645 = vcmp.eq.s32.totalorder %v94, %v90
  %vm646 = vcmp.eq.s32.totalorder %v95, %v91
  %vm647 = vcmp.eq.s32.totalorder %v96, %v92
  %vm648 = vcmp.eq.s32.totalorder %v97, %v93
  %vm649 = vcmp.eq.s32.totalorder %v98, %v94
  %vm650 = vcmp.eq.s32.totalorder %v99, %v95
  %vm651 = vcmp.eq.s32.totalorder %v84, %v96
  %vm652 = vcmp.eq.s32.totalorder %v85, %v97
  %vm653 = vcmp.eq.s32.totalorder %v86, %v98
  %vm654 = vcmp.eq.s32.totalorder %v87, %v99
  %vm655 = vcmp.eq.s32.totalorder %v94, %v84
  %vm656 = vcmp.eq.s32.totalorder %v95, %v85
  %vm657 = vcmp.eq.s32.totalorder %v96, %v86
  %vm658 = vcmp.eq.s32.totalorder %v97, %v87
  %vm659 = vcmp.eq.s32.totalorder %v98, %v88
  %vm660 = vcmp.eq.s32.totalorder %v99, %v89
  %vm661 = vcmp.eq.s32.totalorder %v84, %v90
  %vm662 = vcmp.eq.s32.totalorder %v85, %v91
  %vm663 = vcmp.eq.s32.totalorder %v86, %v92
  %vm664 = vcmp.eq.s32.totalorder %v87, %v93
  %vm665 = vcmp.eq.s32.totalorder %v88, %v94
  %vm666 = vcmp.eq.s32.totalorder %v89, %v95
  %vm667 = vcmp.eq.s32.totalorder %v90, %v96
  %vm668 = vcmp.eq.s32.totalorder %v91, %v97
  %vm669 = vcmp.eq.s32.totalorder %v92, %v98
  %vm670 = vcmp.eq.s32.totalorder %v93, %v99
  %vm671 = vcmp.eq.s32.totalorder %v90, %v84
  %vm672 = vcmp.eq.s32.totalorder %v91, %v85
  %vm673 = vcmp.eq.s32.totalorder %v92, %v86
  %vm674 = vcmp.eq.s32.totalorder %v93, %v87
  %vm675 = vcmp.eq.s32.totalorder %v94, %v88
  %vm676 = vcmp.eq.s32.totalorder %v95, %v89
  %vm677 = vcmp.eq.s32.totalorder %v96, %v90
  %vm678 = vcmp.eq.s32.totalorder %v97, %v91
  %vm679 = vcmp.eq.s32.totalorder %v98, %v92
  %vm680 = vcmp.eq.s32.totalorder %v99, %v93
  %vm681 = vcmp.eq.s32.totalorder %v84, %v94
  %vm682 = vcmp.eq.s32.totalorder %v85, %v95
  %vm683 = vcmp.eq.s32.totalorder %v86, %v96
  %vm684 = vcmp.eq.s32.totalorder %v87, %v97
  %vm685 = vcmp.eq.s32.totalorder %v88, %v98
  %vm686 = vcmp.eq.s32.totalorder %v89, %v99
  %687 = vrot.lane.b32.xlu0 %v20, 16
  %v688 = vpop.permute.xlu0 %687
  %v689 = vsel %vm102, %v688, %v20
  %690 = vrot.lane.b32.xlu0 %v21, 16
  %v691 = vpop.permute.xlu0 %690
  %v692 = vsel %vm102, %v691, %v21
  %693 = vrot.lane.b32.xlu0 %v22, 16
  %v694 = vpop.permute.xlu0 %693
  %v695 = vsel %vm102, %v694, %v22
  %696 = vrot.lane.b32.xlu0 %v23, 16
  %v697 = vpop.permute.xlu0 %696
  %v698 = vsel %vm102, %v697, %v23
  %699 = vrot.lane.b32.xlu0 %v24, 16
  %v700 = vpop.permute.xlu0 %699
  %v701 = vsel %vm102, %v700, %v24
  %702 = vrot.lane.b32.xlu0 %v25, 16
  %v703 = vpop.permute.xlu0 %702
  %v704 = vsel %vm102, %v703, %v25
  %705 = vrot.lane.b32.xlu0 %v26, 16
  %v706 = vpop.permute.xlu0 %705
  %v707 = vsel %vm102, %v706, %v26
  %708 = vrot.lane.b32.xlu0 %v27, 16
  %v709 = vpop.permute.xlu0 %708
  %v710 = vsel %vm102, %v709, %v27
  %711 = vrot.lane.b32.xlu0 %v28, 16
  %v712 = vpop.permute.xlu0 %711
  %v713 = vsel %vm102, %v712, %v28
  %714 = vrot.lane.b32.xlu0 %v29, 16
  %v715 = vpop.permute.xlu0 %714
  %v716 = vsel %vm102, %v715, %v29
  %717 = vrot.lane.b32.xlu0 %v30, 16
  %v718 = vpop.permute.xlu0 %717
  %v719 = vsel %vm102, %v718, %v30
  %720 = vrot.lane.b32.xlu0 %v31, 16
  %v721 = vpop.permute.xlu0 %720
  %v722 = vsel %vm102, %v721, %v31
  %723 = vrot.lane.b32.xlu0 %v32, 16
  %v724 = vpop.permute.xlu0 %723
  %v725 = vsel %vm102, %v724, %v32
  %726 = vrot.lane.b32.xlu0 %v33, 16
  %v727 = vpop.permute.xlu0 %726
  %v728 = vsel %vm102, %v727, %v33
  %729 = vrot.lane.b32.xlu0 %v34, 16
  %v730 = vpop.permute.xlu0 %729
  %v731 = vsel %vm102, %v730, %v34
  %732 = vrot.lane.b32.xlu0 %v35, 16
  %v733 = vpop.permute.xlu0 %732
  %v734 = vsel %vm102, %v733, %v35
  %735 = vrot.lane.b32.xlu0 %v689, 16
  %v736 = vpop.permute.xlu0 %735
  %737 = vrot.lane.b32.xlu0 %v692, 16
  %v738 = vpop.permute.xlu0 %737
  %739 = vrot.lane.b32.xlu0 %v695, 16
  %v740 = vpop.permute.xlu0 %739
  %741 = vrot.lane.b32.xlu0 %v698, 16
  %v742 = vpop.permute.xlu0 %741
  %743 = vrot.lane.b32.xlu0 %v701, 16
  %v744 = vpop.permute.xlu0 %743
  %745 = vrot.lane.b32.xlu0 %v704, 16
  %v746 = vpop.permute.xlu0 %745
  %747 = vrot.lane.b32.xlu0 %v707, 16
  %v748 = vpop.permute.xlu0 %747
  %749 = vrot.lane.b32.xlu0 %v710, 16
  %v750 = vpop.permute.xlu0 %749
  %751 = vrot.lane.b32.xlu0 %v713, 16
  %v752 = vpop.permute.xlu0 %751
  %753 = vrot.lane.b32.xlu0 %v716, 16
  %v754 = vpop.permute.xlu0 %753
  %755 = vrot.lane.b32.xlu0 %v719, 16
  %v756 = vpop.permute.xlu0 %755
  %757 = vrot.lane.b32.xlu0 %v722, 16
  %v758 = vpop.permute.xlu0 %757
  %759 = vrot.lane.b32.xlu0 %v725, 16
  %v760 = vpop.permute.xlu0 %759
  %761 = vrot.lane.b32.xlu0 %v728, 16
  %v762 = vpop.permute.xlu0 %761
  %763 = vrot.lane.b32.xlu0 %v731, 16
  %v764 = vpop.permute.xlu0 %763
  %765 = vrot.lane.b32.xlu0 %v734, 16
  %v766 = vpop.permute.xlu0 %765
  %v767 = vsel %vm102, %v736, %v20
  %v768 = vsel %vm102, %v738, %v21
  %v769 = vsel %vm102, %v740, %v22
  %v770 = vsel %vm102, %v742, %v23
  %v771 = vsel %vm102, %v744, %v24
  %v772 = vsel %vm102, %v746, %v25
  %v773 = vsel %vm102, %v748, %v26
  %v774 = vsel %vm102, %v750, %v27
  %v775 = vsel %vm102, %v752, %v28
  %v776 = vsel %vm102, %v754, %v29
  %v777 = vsel %vm102, %v756, %v30
  %v778 = vsel %vm102, %v758, %v31
  %v779 = vsel %vm102, %v760, %v32
  %v780 = vsel %vm102, %v762, %v33
  %v781 = vsel %vm102, %v764, %v34
  %v782 = vsel %vm102, %v766, %v35
  %v783 = vsel %vm115, 1, 0
  %v784 = vperm.slane %v783, 0
  %vm785 = vcmp.eq.s32.totalorder %v784, 1
  %v786 = vsel %vm785, %v767, inf
  %v787 = vsel %vm785, %v768, inf
  %v788 = vsel %vm785, %v769, inf
  %v789 = vsel %vm785, %v770, inf
  %v790 = vsel %vm785, %v771, inf
  %v791 = vsel %vm785, %v772, inf
  %v792 = vsel %vm785, %v773, inf
  %v793 = vsel %vm785, %v774, inf
  %v794 = vsel %vm785, %v775, inf
  %v795 = vsel %vm785, %v776, inf
  %v796 = vsel %vm785, %v777, inf
  %v797 = vsel %vm785, %v778, inf
  %v798 = vsel %vm785, %v779, inf
  %v799 = vsel %vm785, %v780, inf
  %v800 = vsel %vm785, %v781, inf
  %v801 = vsel %vm785, %v782, inf
  %818 = vrot.lane.b32.xlu0 %v786, 113
  %v819 = vpop.permute.xlu0 %818
  %820 = vrot.lane.b32.xlu0 %v787, 113
  %v821 = vpop.permute.xlu0 %820
  %822 = vrot.lane.b32.xlu0 %v788, 113
  %v823 = vpop.permute.xlu0 %822
  %824 = vrot.lane.b32.xlu0 %v789, 113
  %v825 = vpop.permute.xlu0 %824
  %826 = vrot.lane.b32.xlu0 %v790, 113
  %v827 = vpop.permute.xlu0 %826
  %828 = vrot.lane.b32.xlu0 %v791, 113
  %v829 = vpop.permute.xlu0 %828
  %830 = vrot.lane.b32.xlu0 %v792, 113
  %v831 = vpop.permute.xlu0 %830
  %832 = vrot.lane.b32.xlu0 %v793, 113
  %v833 = vpop.permute.xlu0 %832
  %834 = vrot.lane.b32.xlu0 %v794, 113
  %v835 = vpop.permute.xlu0 %834
  %836 = vrot.lane.b32.xlu0 %v795, 113
  %v837 = vpop.permute.xlu0 %836
  %838 = vrot.lane.b32.xlu0 %v796, 113
  %v839 = vpop.permute.xlu0 %838
  %840 = vrot.lane.b32.xlu0 %v797, 113
  %v841 = vpop.permute.xlu0 %840
  %842 = vrot.lane.b32.xlu0 %v798, 113
  %v843 = vpop.permute.xlu0 %842
  %844 = vrot.lane.b32.xlu0 %v799, 113
  %v845 = vpop.permute.xlu0 %844
  %846 = vrot.lane.b32.xlu0 %v800, 113
  %v847 = vpop.permute.xlu0 %846
  %848 = vrot.lane.b32.xlu0 %v801, 113
  %v849 = vpop.permute.xlu0 %848
  %v866 = vmin.f32 %v20, %v819
  %v867 = vmin.f32 %v21, %v821
  %v868 = vmin.f32 %v22, %v823
  %v869 = vmin.f32 %v23, %v825
  %v870 = vmin.f32 %v24, %v827
  %v871 = vmin.f32 %v25, %v829
  %v872 = vmin.f32 %v26, %v831
  %v873 = vmin.f32 %v27, %v833
  %v874 = vmin.f32 %v28, %v835
  %v875 = vmin.f32 %v29, %v837
  %v876 = vmin.f32 %v30, %v839
  %v877 = vmin.f32 %v31, %v841
  %v878 = vmin.f32 %v32, %v843
  %v879 = vmin.f32 %v33, %v845
  %v880 = vmin.f32 %v34, %v847
  %v881 = vmin.f32 %v35, %v849
  %v882 = vsel %vm122, 1, 0
  %v883 = vperm.slane %v882, 0
  %vm884 = vcmp.eq.s32.totalorder %v883, 1
  %v885 = vsel %vm884, %v767, inf
  %v886 = vsel %vm884, %v768, inf
  %v887 = vsel %vm884, %v769, inf
  %v888 = vsel %vm884, %v770, inf
  %v889 = vsel %vm884, %v771, inf
  %v890 = vsel %vm884, %v772, inf
  %v891 = vsel %vm884, %v773, inf
  %v892 = vsel %vm884, %v774, inf
  %v893 = vsel %vm884, %v775, inf
  %v894 = vsel %vm884, %v776, inf
  %v895 = vsel %vm884, %v777, inf
  %v896 = vsel %vm884, %v778, inf
  %v897 = vsel %vm884, %v779, inf
  %v898 = vsel %vm884, %v780, inf
  %v899 = vsel %vm884, %v781, inf
  %v900 = vsel %vm884, %v782, inf
  %917 = vrot.lane.b32.xlu0 %v885, 127
  %v918 = vpop.permute.xlu0 %917
  %919 = vrot.lane.b32.xlu0 %v886, 127
  %v920 = vpop.permute.xlu0 %919
  %921 = vrot.lane.b32.xlu0 %v887, 127
  %v922 = vpop.permute.xlu0 %921
  %923 = vrot.lane.b32.xlu0 %v888, 127
  %v924 = vpop.permute.xlu0 %923
  %925 = vrot.lane.b32.xlu0 %v889, 127
  %v926 = vpop.permute.xlu0 %925
  %927 = vrot.lane.b32.xlu0 %v890, 127
  %v928 = vpop.permute.xlu0 %927
  %929 = vrot.lane.b32.xlu0 %v891, 127
  %v930 = vpop.permute.xlu0 %929
  %931 = vrot.lane.b32.xlu0 %v892, 127
  %v932 = vpop.permute.xlu0 %931
  %933 = vrot.lane.b32.xlu0 %v893, 127
  %v934 = vpop.permute.xlu0 %933
  %935 = vrot.lane.b32.xlu0 %v894, 127
  %v936 = vpop.permute.xlu0 %935
  %937 = vrot.lane.b32.xlu0 %v895, 127
  %v938 = vpop.permute.xlu0 %937
  %939 = vrot.lane.b32.xlu0 %v896, 127
  %v940 = vpop.permute.xlu0 %939
  %941 = vrot.lane.b32.xlu0 %v897, 127
  %v942 = vpop.permute.xlu0 %941
  %943 = vrot.lane.b32.xlu0 %v898, 127
  %v944 = vpop.permute.xlu0 %943
  %945 = vrot.lane.b32.xlu0 %v899, 127
  %v946 = vpop.permute.xlu0 %945
  %947 = vrot.lane.b32.xlu0 %v900, 127
  %v948 = vpop.permute.xlu0 %947
  %v965 = vmin.f32 %v866, %v918
  %v966 = vmin.f32 %v867, %v920
  %v967 = vmin.f32 %v868, %v922
  %v968 = vmin.f32 %v869, %v924
  %v969 = vmin.f32 %v870, %v926
  %v970 = vmin.f32 %v871, %v928
  %v971 = vmin.f32 %v872, %v930
  %v972 = vmin.f32 %v873, %v932
  %v973 = vmin.f32 %v874, %v934
  %v974 = vmin.f32 %v875, %v936
  %v975 = vmin.f32 %v876, %v938
  %v976 = vmin.f32 %v877, %v940
  %v977 = vmin.f32 %v878, %v942
  %v978 = vmin.f32 %v879, %v944
  %v979 = vmin.f32 %v880, %v946
  %v980 = vmin.f32 %v881, %v948
  %v981 = vsel %vm357, 1, 0
  %v982 = vperm.slane %v981, 0
  %vm983 = vcmp.eq.s32.totalorder %v982, 1
  %v984 = vsel %vm983, %v767, inf
  %v985 = vsel %vm983, %v768, inf
  %v986 = vsel %vm983, %v769, inf
  %v987 = vsel %vm983, %v770, inf
  %v988 = vsel %vm983, %v771, inf
  %v989 = vsel %vm983, %v772, inf
  %v990 = vsel %vm983, %v773, inf
  %v991 = vsel %vm983, %v774, inf
  %v992 = vsel %vm983, %v775, inf
  %v993 = vsel %vm983, %v776, inf
  %v994 = vsel %vm983, %v777, inf
  %v995 = vsel %vm983, %v778, inf
  %v996 = vsel %vm983, %v779, inf
  %v997 = vsel %vm983, %v780, inf
  %v998 = vsel %vm983, %v781, inf
  %v999 = vsel %vm983, %v782, inf
  %1016 = vrot.lane.b32.xlu0 %v984, 114
  %v1017 = vpop.permute.xlu0 %1016
  %1018 = vrot.lane.b32.xlu0 %v985, 114
  %v1019 = vpop.permute.xlu0 %1018
  %1020 = vrot.lane.b32.xlu0 %v986, 114
  %v1021 = vpop.permute.xlu0 %1020
  %1022 = vrot.lane.b32.xlu0 %v987, 114
  %v1023 = vpop.permute.xlu0 %1022
  %1024 = vrot.lane.b32.xlu0 %v988, 114
  %v1025 = vpop.permute.xlu0 %1024
  %1026 = vrot.lane.b32.xlu0 %v989, 114
  %v1027 = vpop.permute.xlu0 %1026
  %1028 = vrot.lane.b32.xlu0 %v990, 114
  %v1029 = vpop.permute.xlu0 %1028
  %1030 = vrot.lane.b32.xlu0 %v991, 114
  %v1031 = vpop.permute.xlu0 %1030
  %1032 = vrot.lane.b32.xlu0 %v992, 114
  %v1033 = vpop.permute.xlu0 %1032
  %1034 = vrot.lane.b32.xlu0 %v993, 114
  %v1035 = vpop.permute.xlu0 %1034
  %1036 = vrot.lane.b32.xlu0 %v994, 114
  %v1037 = vpop.permute.xlu0 %1036
  %1038 = vrot.lane.b32.xlu0 %v995, 114
  %v1039 = vpop.permute.xlu0 %1038
  %1040 = vrot.lane.b32.xlu0 %v996, 114
  %v1041 = vpop.permute.xlu0 %1040
  %1042 = vrot.lane.b32.xlu0 %v997, 114
  %v1043 = vpop.permute.xlu0 %1042
  %1044 = vrot.lane.b32.xlu0 %v998, 114
  %v1045 = vpop.permute.xlu0 %1044
  %1046 = vrot.lane.b32.xlu0 %v999, 114
  %v1047 = vpop.permute.xlu0 %1046
  %v1064 = vmin.f32 %v965, %v1017
  %v1065 = vmin.f32 %v966, %v1019
  %v1066 = vmin.f32 %v967, %v1021
  %v1067 = vmin.f32 %v968, %v1023
  %v1068 = vmin.f32 %v969, %v1025
  %v1069 = vmin.f32 %v970, %v1027
  %v1070 = vmin.f32 %v971, %v1029
  %v1071 = vmin.f32 %v972, %v1031
  %v1072 = vmin.f32 %v973, %v1033
  %v1073 = vmin.f32 %v974, %v1035
  %v1074 = vmin.f32 %v975, %v1037
  %v1075 = vmin.f32 %v976, %v1039
  %v1076 = vmin.f32 %v977, %v1041
  %v1077 = vmin.f32 %v978, %v1043
  %v1078 = vmin.f32 %v979, %v1045
  %v1079 = vmin.f32 %v980, %v1047
  %v1080 = vsel %vm364, 1, 0
  %v1081 = vperm.slane %v1080, 0
  %vm1082 = vcmp.eq.s32.totalorder %v1081, 1
  %v1083 = vsel %vm1082, %v767, inf
  %v1084 = vsel %vm1082, %v768, inf
  %v1085 = vsel %vm1082, %v769, inf
  %v1086 = vsel %vm1082, %v770, inf
  %v1087 = vsel %vm1082, %v771, inf
  %v1088 = vsel %vm1082, %v772, inf
  %v1089 = vsel %vm1082, %v773, inf
  %v1090 = vsel %vm1082, %v774, inf
  %v1091 = vsel %vm1082, %v775, inf
  %v1092 = vsel %vm1082, %v776, inf
  %v1093 = vsel %vm1082, %v777, inf
  %v1094 = vsel %vm1082, %v778, inf
  %v1095 = vsel %vm1082, %v779, inf
  %v1096 = vsel %vm1082, %v780, inf
  %v1097 = vsel %vm1082, %v781, inf
  %v1098 = vsel %vm1082, %v782, inf
  %1115 = vrot.lane.b32.xlu0 %v1083, 126
  %v1116 = vpop.permute.xlu0 %1115
  %1117 = vrot.lane.b32.xlu0 %v1084, 126
  %v1118 = vpop.permute.xlu0 %1117
  %1119 = vrot.lane.b32.xlu0 %v1085, 126
  %v1120 = vpop.permute.xlu0 %1119
  %1121 = vrot.lane.b32.xlu0 %v1086, 126
  %v1122 = vpop.permute.xlu0 %1121
  %1123 = vrot.lane.b32.xlu0 %v1087, 126
  %v1124 = vpop.permute.xlu0 %1123
  %1125 = vrot.lane.b32.xlu0 %v1088, 126
  %v1126 = vpop.permute.xlu0 %1125
  %1127 = vrot.lane.b32.xlu0 %v1089, 126
  %v1128 = vpop.permute.xlu0 %1127
  %1129 = vrot.lane.b32.xlu0 %v1090, 126
  %v1130 = vpop.permute.xlu0 %1129
  %1131 = vrot.lane.b32.xlu0 %v1091, 126
  %v1132 = vpop.permute.xlu0 %1131
  %1133 = vrot.lane.b32.xlu0 %v1092, 126
  %v1134 = vpop.permute.xlu0 %1133
  %1135 = vrot.lane.b32.xlu0 %v1093, 126
  %v1136 = vpop.permute.xlu0 %1135
  %1137 = vrot.lane.b32.xlu0 %v1094, 126
  %v1138 = vpop.permute.xlu0 %1137
  %1139 = vrot.lane.b32.xlu0 %v1095, 126
  %v1140 = vpop.permute.xlu0 %1139
  %1141 = vrot.lane.b32.xlu0 %v1096, 126
  %v1142 = vpop.permute.xlu0 %1141
  %1143 = vrot.lane.b32.xlu0 %v1097, 126
  %v1144 = vpop.permute.xlu0 %1143
  %1145 = vrot.lane.b32.xlu0 %v1098, 126
  %v1146 = vpop.permute.xlu0 %1145
  %v1163 = vmin.f32 %v1064, %v1116
  %v1164 = vmin.f32 %v1065, %v1118
  %v1165 = vmin.f32 %v1066, %v1120
  %v1166 = vmin.f32 %v1067, %v1122
  %v1167 = vmin.f32 %v1068, %v1124
  %v1168 = vmin.f32 %v1069, %v1126
  %v1169 = vmin.f32 %v1070, %v1128
  %v1170 = vmin.f32 %v1071, %v1130
  %v1171 = vmin.f32 %v1072, %v1132
  %v1172 = vmin.f32 %v1073, %v1134
  %v1173 = vmin.f32 %v1074, %v1136
  %v1174 = vmin.f32 %v1075, %v1138
  %v1175 = vmin.f32 %v1076, %v1140
  %v1176 = vmin.f32 %v1077, %v1142
  %v1177 = vmin.f32 %v1078, %v1144
  %v1178 = vmin.f32 %v1079, %v1146
  %v1179 = vrot.slane %v1163, 7
  %v1180 = vrot.slane %v1164, 7
  %v1181 = vrot.slane %v1165, 7
  %v1182 = vrot.slane %v1166, 7
  %v1183 = vrot.slane %v1167, 7
  %v1184 = vrot.slane %v1168, 7
  %v1185 = vrot.slane %v1169, 7
  %v1186 = vrot.slane %v1170, 7
  %v1187 = vrot.slane %v1171, 7
  %v1188 = vrot.slane %v1172, 7
  %v1189 = vrot.slane %v1173, 7
  %v1190 = vrot.slane %v1174, 7
  %v1191 = vrot.slane %v1175, 7
  %v1192 = vrot.slane %v1176, 7
  %v1193 = vrot.slane %v1177, 7
  %v1194 = vrot.slane %v1178, 7
  %v1195 = vsel %vm141, %v1193, %v1194
  %v1196 = vsel %vm141, %v1192, %v1193
  %v1197 = vsel %vm141, %v1191, %v1192
  %v1198 = vsel %vm141, %v1190, %v1191
  %v1199 = vsel %vm141, %v1189, %v1190
  %v1200 = vsel %vm141, %v1188, %v1189
  %v1201 = vsel %vm141, %v1187, %v1188
  %v1202 = vsel %vm141, %v1186, %v1187
  %v1203 = vsel %vm141, %v1185, %v1186
  %v1204 = vsel %vm141, %v1184, %v1185
  %v1205 = vsel %vm141, %v1183, %v1184
  %v1206 = vsel %vm141, %v1182, %v1183
  %v1207 = vsel %vm141, %v1181, %v1182
  %v1208 = vsel %vm141, %v1180, %v1181
  %v1209 = vsel %vm141, %v1179, %v1180
  %v1210 = vsel %vm141, %v1194, %v1179
  %v1211 = vsel %vm222, 1, 0
  %v1212 = vsel %vm223, 1, 0
  %v1213 = vsel %vm224, 1, 0
  %v1214 = vsel %vm225, 1, 0
  %v1215 = vsel %vm226, 1, 0
  %v1216 = vsel %vm227, 1, 0
  %v1217 = vsel %vm228, 1, 0
  %v1218 = vsel %vm229, 1, 0
  %v1219 = vsel %vm230, 1, 0
  %v1220 = vsel %vm231, 1, 0
  %v1221 = vsel %vm232, 1, 0
  %v1222 = vsel %vm233, 1, 0
  %v1223 = vsel %vm234, 1, 0
  %v1224 = vsel %vm235, 1, 0
  %v1225 = vsel %vm236, 1, 0
  %v1226 = vsel %vm237, 1, 0
  %1227 = vset.pattern.permute.xlu0 0
  %1228 = vperm.xlu0 %1227, %v1211
  %v1229 = vpop.permute.xlu0 %1228
  %1230 = vset.pattern.permute.xlu0 0
  %1231 = vperm.xlu0 %1230, %v1212
  %v1232 = vpop.permute.xlu0 %1231
  %1233 = vset.pattern.permute.xlu0 0
  %1234 = vperm.xlu0 %1233, %v1213
  %v1235 = vpop.permute.xlu0 %1234
  %1236 = vset.pattern.permute.xlu0 0
  %1237 = vperm.xlu0 %1236, %v1214
  %v1238 = vpop.permute.xlu0 %1237
  %1239 = vset.pattern.permute.xlu0 0
  %1240 = vperm.xlu0 %1239, %v1215
  %v1241 = vpop.permute.xlu0 %1240
  %1242 = vset.pattern.permute.xlu0 0
  %1243 = vperm.xlu0 %1242, %v1216
  %v1244 = vpop.permute.xlu0 %1243
  %1245 = vset.pattern.permute.xlu0 0
  %1246 = vperm.xlu0 %1245, %v1217
  %v1247 = vpop.permute.xlu0 %1246
  %1248 = vset.pattern.permute.xlu0 0
  %1249 = vperm.xlu0 %1248, %v1218
  %v1250 = vpop.permute.xlu0 %1249
  %1251 = vset.pattern.permute.xlu0 0
  %1252 = vperm.xlu0 %1251, %v1219
  %v1253 = vpop.permute.xlu0 %1252
  %1254 = vset.pattern.permute.xlu0 0
  %1255 = vperm.xlu0 %1254, %v1220
  %v1256 = vpop.permute.xlu0 %1255
  %1257 = vset.pattern.permute.xlu0 0
  %1258 = vperm.xlu0 %1257, %v1221
  %v1259 = vpop.permute.xlu0 %1258
  %1260 = vset.pattern.permute.xlu0 0
  %1261 = vperm.xlu0 %1260, %v1222
  %v1262 = vpop.permute.xlu0 %1261
  %1263 = vset.pattern.permute.xlu0 0
  %1264 = vperm.xlu0 %1263, %v1223
  %v1265 = vpop.permute.xlu0 %1264
  %1266 = vset.pattern.permute.xlu0 0
  %1267 = vperm.xlu0 %1266, %v1224
  %v1268 = vpop.permute.xlu0 %1267
  %1269 = vset.pattern.permute.xlu0 0
  %1270 = vperm.xlu0 %1269, %v1225
  %v1271 = vpop.permute.xlu0 %1270
  %1272 = vset.pattern.permute.xlu0 0
  %1273 = vperm.xlu0 %1272, %v1226
  %v1274 = vpop.permute.xlu0 %1273
  %vm1275 = vcmp.eq.s32.totalorder %v1229, 1
  %vm1276 = vcmp.eq.s32.totalorder %v1232, 1
  %vm1277 = vcmp.eq.s32.totalorder %v1235, 1
  %vm1278 = vcmp.eq.s32.totalorder %v1238, 1
  %vm1279 = vcmp.eq.s32.totalorder %v1241, 1
  %vm1280 = vcmp.eq.s32.totalorder %v1244, 1
  %vm1281 = vcmp.eq.s32.totalorder %v1247, 1
  %vm1282 = vcmp.eq.s32.totalorder %v1250, 1
  %vm1283 = vcmp.eq.s32.totalorder %v1253, 1
  %vm1284 = vcmp.eq.s32.totalorder %v1256, 1
  %vm1285 = vcmp.eq.s32.totalorder %v1259, 1
  %vm1286 = vcmp.eq.s32.totalorder %v1262, 1
  %vm1287 = vcmp.eq.s32.totalorder %v1265, 1
  %vm1288 = vcmp.eq.s32.totalorder %v1268, 1
  %vm1289 = vcmp.eq.s32.totalorder %v1271, 1
  %vm1290 = vcmp.eq.s32.totalorder %v1274, 1
  %v1291 = vsel %vm1275, %v1210, inf
  %v1292 = vsel %vm1276, %v1209, inf
  %v1293 = vsel %vm1277, %v1208, inf
  %v1294 = vsel %vm1278, %v1207, inf
  %v1295 = vsel %vm1279, %v1206, inf
  %v1296 = vsel %vm1280, %v1205, inf
  %v1297 = vsel %vm1281, %v1204, inf
  %v1298 = vsel %vm1282, %v1203, inf
  %v1299 = vsel %vm1283, %v1202, inf
  %v1300 = vsel %vm1284, %v1201, inf
  %v1301 = vsel %vm1285, %v1200, inf
  %v1302 = vsel %vm1286, %v1199, inf
  %v1303 = vsel %vm1287, %v1198, inf
  %v1304 = vsel %vm1288, %v1197, inf
  %v1305 = vsel %vm1289, %v1196, inf
  %v1306 = vsel %vm1290, %v1195, inf
  %v1307 = vmin.f32 %v1163, %v1291
  %v1308 = vmin.f32 %v1164, %v1292
  %v1309 = vmin.f32 %v1165, %v1293
  %v1310 = vmin.f32 %v1166, %v1294
  %v1311 = vmin.f32 %v1167, %v1295
  %v1312 = vmin.f32 %v1168, %v1296
  %v1313 = vmin.f32 %v1169, %v1297
  %v1314 = vmin.f32 %v1170, %v1298
  %v1315 = vmin.f32 %v1171, %v1299
  %v1316 = vmin.f32 %v1172, %v1300
  %v1317 = vmin.f32 %v1173, %v1301
  %v1318 = vmin.f32 %v1174, %v1302
  %v1319 = vmin.f32 %v1175, %v1303
  %v1320 = vmin.f32 %v1176, %v1304
  %v1321 = vmin.f32 %v1177, %v1305
  %v1322 = vmin.f32 %v1178, %v1306
  %v1323 = vrot.slane %v1163, 1
  %v1324 = vrot.slane %v1164, 1
  %v1325 = vrot.slane %v1165, 1
  %v1326 = vrot.slane %v1166, 1
  %v1327 = vrot.slane %v1167, 1
  %v1328 = vrot.slane %v1168, 1
  %v1329 = vrot.slane %v1169, 1
  %v1330 = vrot.slane %v1170, 1
  %v1331 = vrot.slane %v1171, 1
  %v1332 = vrot.slane %v1172, 1
  %v1333 = vrot.slane %v1173, 1
  %v1334 = vrot.slane %v1174, 1
  %v1335 = vrot.slane %v1175, 1
  %v1336 = vrot.slane %v1176, 1
  %v1337 = vrot.slane %v1177, 1
  %v1338 = vrot.slane %v1178, 1
  %v1339 = vsel %vm254, %v1337, %v1338
  %v1340 = vsel %vm254, %v1336, %v1337
  %v1341 = vsel %vm254, %v1335, %v1336
  %v1342 = vsel %vm254, %v1334, %v1335
  %v1343 = vsel %vm254, %v1333, %v1334
  %v1344 = vsel %vm254, %v1332, %v1333
  %v1345 = vsel %vm254, %v1331, %v1332
  %v1346 = vsel %vm254, %v1330, %v1331
  %v1347 = vsel %vm254, %v1329, %v1330
  %v1348 = vsel %vm254, %v1328, %v1329
  %v1349 = vsel %vm254, %v1327, %v1328
  %v1350 = vsel %vm254, %v1326, %v1327
  %v1351 = vsel %vm254, %v1325, %v1326
  %v1352 = vsel %vm254, %v1324, %v1325
  %v1353 = vsel %vm254, %v1323, %v1324
  %v1354 = vsel %vm254, %v1338, %v1323
  %v1355 = vsel %vm335, 1, 0
  %v1356 = vsel %vm336, 1, 0
  %v1357 = vsel %vm337, 1, 0
  %v1358 = vsel %vm338, 1, 0
  %v1359 = vsel %vm339, 1, 0
  %v1360 = vsel %vm340, 1, 0
  %v1361 = vsel %vm341, 1, 0
  %v1362 = vsel %vm342, 1, 0
  %v1363 = vsel %vm343, 1, 0
  %v1364 = vsel %vm344, 1, 0
  %v1365 = vsel %vm345, 1, 0
  %v1366 = vsel %vm346, 1, 0
  %v1367 = vsel %vm347, 1, 0
  %v1368 = vsel %vm348, 1, 0
  %v1369 = vsel %vm349, 1, 0
  %v1370 = vsel %vm350, 1, 0
  %1371 = vset.pattern.permute.xlu0 0
  %1372 = vperm.xlu0 %1371, %v1355
  %v1373 = vpop.permute.xlu0 %1372
  %1374 = vset.pattern.permute.xlu0 0
  %1375 = vperm.xlu0 %1374, %v1356
  %v1376 = vpop.permute.xlu0 %1375
  %1377 = vset.pattern.permute.xlu0 0
  %1378 = vperm.xlu0 %1377, %v1357
  %v1379 = vpop.permute.xlu0 %1378
  %1380 = vset.pattern.permute.xlu0 0
  %1381 = vperm.xlu0 %1380, %v1358
  %v1382 = vpop.permute.xlu0 %1381
  %1383 = vset.pattern.permute.xlu0 0
  %1384 = vperm.xlu0 %1383, %v1359
  %v1385 = vpop.permute.xlu0 %1384
  %1386 = vset.pattern.permute.xlu0 0
  %1387 = vperm.xlu0 %1386, %v1360
  %v1388 = vpop.permute.xlu0 %1387
  %1389 = vset.pattern.permute.xlu0 0
  %1390 = vperm.xlu0 %1389, %v1361
  %v1391 = vpop.permute.xlu0 %1390
  %1392 = vset.pattern.permute.xlu0 0
  %1393 = vperm.xlu0 %1392, %v1362
  %v1394 = vpop.permute.xlu0 %1393
  %1395 = vset.pattern.permute.xlu0 0
  %1396 = vperm.xlu0 %1395, %v1363
  %v1397 = vpop.permute.xlu0 %1396
  %1398 = vset.pattern.permute.xlu0 0
  %1399 = vperm.xlu0 %1398, %v1364
  %v1400 = vpop.permute.xlu0 %1399
  %1401 = vset.pattern.permute.xlu0 0
  %1402 = vperm.xlu0 %1401, %v1365
  %v1403 = vpop.permute.xlu0 %1402
  %1404 = vset.pattern.permute.xlu0 0
  %1405 = vperm.xlu0 %1404, %v1366
  %v1406 = vpop.permute.xlu0 %1405
  %1407 = vset.pattern.permute.xlu0 0
  %1408 = vperm.xlu0 %1407, %v1367
  %v1409 = vpop.permute.xlu0 %1408
  %1410 = vset.pattern.permute.xlu0 0
  %1411 = vperm.xlu0 %1410, %v1368
  %v1412 = vpop.permute.xlu0 %1411
  %1413 = vset.pattern.permute.xlu0 0
  %1414 = vperm.xlu0 %1413, %v1369
  %v1415 = vpop.permute.xlu0 %1414
  %1416 = vset.pattern.permute.xlu0 0
  %1417 = vperm.xlu0 %1416, %v1370
  %v1418 = vpop.permute.xlu0 %1417
  %vm1419 = vcmp.eq.s32.totalorder %v1373, 1
  %vm1420 = vcmp.eq.s32.totalorder %v1376, 1
  %vm1421 = vcmp.eq.s32.totalorder %v1379, 1
  %vm1422 = vcmp.eq.s32.totalorder %v1382, 1
  %vm1423 = vcmp.eq.s32.totalorder %v1385, 1
  %vm1424 = vcmp.eq.s32.totalorder %v1388, 1
  %vm1425 = vcmp.eq.s32.totalorder %v1391, 1
  %vm1426 = vcmp.eq.s32.totalorder %v1394, 1
  %vm1427 = vcmp.eq.s32.totalorder %v1397, 1
  %vm1428 = vcmp.eq.s32.totalorder %v1400, 1
  %vm1429 = vcmp.eq.s32.totalorder %v1403, 1
  %vm1430 = vcmp.eq.s32.totalorder %v1406, 1
  %vm1431 = vcmp.eq.s32.totalorder %v1409, 1
  %vm1432 = vcmp.eq.s32.totalorder %v1412, 1
  %vm1433 = vcmp.eq.s32.totalorder %v1415, 1
  %vm1434 = vcmp.eq.s32.totalorder %v1418, 1
  %v1435 = vsel %vm1419, %v1353, inf
  %v1436 = vsel %vm1420, %v1352, inf
  %v1437 = vsel %vm1421, %v1351, inf
  %v1438 = vsel %vm1422, %v1350, inf
  %v1439 = vsel %vm1423, %v1349, inf
  %v1440 = vsel %vm1424, %v1348, inf
  %v1441 = vsel %vm1425, %v1347, inf
  %v1442 = vsel %vm1426, %v1346, inf
  %v1443 = vsel %vm1427, %v1345, inf
  %v1444 = vsel %vm1428, %v1344, inf
  %v1445 = vsel %vm1429, %v1343, inf
  %v1446 = vsel %vm1430, %v1342, inf
  %v1447 = vsel %vm1431, %v1341, inf
  %v1448 = vsel %vm1432, %v1340, inf
  %v1449 = vsel %vm1433, %v1339, inf
  %v1450 = vsel %vm1434, %v1354, inf
  %v1451 = vmin.f32 %v1307, %v1435
  %v1452 = vmin.f32 %v1308, %v1436
  %v1453 = vmin.f32 %v1309, %v1437
  %v1454 = vmin.f32 %v1310, %v1438
  %v1455 = vmin.f32 %v1311, %v1439
  %v1456 = vmin.f32 %v1312, %v1440
  %v1457 = vmin.f32 %v1313, %v1441
  %v1458 = vmin.f32 %v1314, %v1442
  %v1459 = vmin.f32 %v1315, %v1443
  %v1460 = vmin.f32 %v1316, %v1444
  %v1461 = vmin.f32 %v1317, %v1445
  %v1462 = vmin.f32 %v1318, %v1446
  %v1463 = vmin.f32 %v1319, %v1447
  %v1464 = vmin.f32 %v1320, %v1448
  %v1465 = vmin.f32 %v1321, %v1449
  %v1466 = vmin.f32 %v1322, %v1450
  %v1467 = vrot.slane %v1163, 6
  %v1468 = vrot.slane %v1164, 6
  %v1469 = vrot.slane %v1165, 6
  %v1470 = vrot.slane %v1166, 6
  %v1471 = vrot.slane %v1167, 6
  %v1472 = vrot.slane %v1168, 6
  %v1473 = vrot.slane %v1169, 6
  %v1474 = vrot.slane %v1170, 6
  %v1475 = vrot.slane %v1171, 6
  %v1476 = vrot.slane %v1172, 6
  %v1477 = vrot.slane %v1173, 6
  %v1478 = vrot.slane %v1174, 6
  %v1479 = vrot.slane %v1175, 6
  %v1480 = vrot.slane %v1176, 6
  %v1481 = vrot.slane %v1177, 6
  %v1482 = vrot.slane %v1178, 6
  %v1483 = vsel %vm381, %v1481, %v1482
  %v1484 = vsel %vm381, %v1480, %v1481
  %v1485 = vsel %vm381, %v1479, %v1480
  %v1486 = vsel %vm381, %v1478, %v1479
  %v1487 = vsel %vm381, %v1477, %v1478
  %v1488 = vsel %vm381, %v1476, %v1477
  %v1489 = vsel %vm381, %v1475, %v1476
  %v1490 = vsel %vm381, %v1474, %v1475
  %v1491 = vsel %vm381, %v1473, %v1474
  %v1492 = vsel %vm381, %v1472, %v1473
  %v1493 = vsel %vm381, %v1471, %v1472
  %v1494 = vsel %vm381, %v1470, %v1471
  %v1495 = vsel %vm381, %v1469, %v1470
  %v1496 = vsel %vm381, %v1468, %v1469
  %v1497 = vsel %vm381, %v1467, %v1468
  %v1498 = vsel %vm381, %v1482, %v1467
  %v1499 = vsel %vm462, 1, 0
  %v1500 = vsel %vm463, 1, 0
  %v1501 = vsel %vm464, 1, 0
  %v1502 = vsel %vm465, 1, 0
  %v1503 = vsel %vm466, 1, 0
  %v1504 = vsel %vm467, 1, 0
  %v1505 = vsel %vm468, 1, 0
  %v1506 = vsel %vm469, 1, 0
  %v1507 = vsel %vm470, 1, 0
  %v1508 = vsel %vm471, 1, 0
  %v1509 = vsel %vm472, 1, 0
  %v1510 = vsel %vm473, 1, 0
  %v1511 = vsel %vm474, 1, 0
  %v1512 = vsel %vm475, 1, 0
  %v1513 = vsel %vm476, 1, 0
  %v1514 = vsel %vm477, 1, 0
  %1515 = vset.pattern.permute.xlu0 0
  %1516 = vperm.xlu0 %1515, %v1499
  %v1517 = vpop.permute.xlu0 %1516
  %1518 = vset.pattern.permute.xlu0 0
  %1519 = vperm.xlu0 %1518, %v1500
  %v1520 = vpop.permute.xlu0 %1519
  %1521 = vset.pattern.permute.xlu0 0
  %1522 = vperm.xlu0 %1521, %v1501
  %v1523 = vpop.permute.xlu0 %1522
  %1524 = vset.pattern.permute.xlu0 0
  %1525 = vperm.xlu0 %1524, %v1502
  %v1526 = vpop.permute.xlu0 %1525
  %1527 = vset.pattern.permute.xlu0 0
  %1528 = vperm.xlu0 %1527, %v1503
  %v1529 = vpop.permute.xlu0 %1528
  %1530 = vset.pattern.permute.xlu0 0
  %1531 = vperm.xlu0 %1530, %v1504
  %v1532 = vpop.permute.xlu0 %1531
  %1533 = vset.pattern.permute.xlu0 0
  %1534 = vperm.xlu0 %1533, %v1505
  %v1535 = vpop.permute.xlu0 %1534
  %1536 = vset.pattern.permute.xlu0 0
  %1537 = vperm.xlu0 %1536, %v1506
  %v1538 = vpop.permute.xlu0 %1537
  %1539 = vset.pattern.permute.xlu0 0
  %1540 = vperm.xlu0 %1539, %v1507
  %v1541 = vpop.permute.xlu0 %1540
  %1542 = vset.pattern.permute.xlu0 0
  %1543 = vperm.xlu0 %1542, %v1508
  %v1544 = vpop.permute.xlu0 %1543
  %1545 = vset.pattern.permute.xlu0 0
  %1546 = vperm.xlu0 %1545, %v1509
  %v1547 = vpop.permute.xlu0 %1546
  %1548 = vset.pattern.permute.xlu0 0
  %1549 = vperm.xlu0 %1548, %v1510
  %v1550 = vpop.permute.xlu0 %1549
  %1551 = vset.pattern.permute.xlu0 0
  %1552 = vperm.xlu0 %1551, %v1511
  %v1553 = vpop.permute.xlu0 %1552
  %1554 = vset.pattern.permute.xlu0 0
  %1555 = vperm.xlu0 %1554, %v1512
  %v1556 = vpop.permute.xlu0 %1555
  %1557 = vset.pattern.permute.xlu0 0
  %1558 = vperm.xlu0 %1557, %v1513
  %v1559 = vpop.permute.xlu0 %1558
  %1560 = vset.pattern.permute.xlu0 0
  %1561 = vperm.xlu0 %1560, %v1514
  %v1562 = vpop.permute.xlu0 %1561
  %vm1563 = vcmp.eq.s32.totalorder %v1517, 1
  %vm1564 = vcmp.eq.s32.totalorder %v1520, 1
  %vm1565 = vcmp.eq.s32.totalorder %v1523, 1
  %vm1566 = vcmp.eq.s32.totalorder %v1526, 1
  %vm1567 = vcmp.eq.s32.totalorder %v1529, 1
  %vm1568 = vcmp.eq.s32.totalorder %v1532, 1
  %vm1569 = vcmp.eq.s32.totalorder %v1535, 1
  %vm1570 = vcmp.eq.s32.totalorder %v1538, 1
  %vm1571 = vcmp.eq.s32.totalorder %v1541, 1
  %vm1572 = vcmp.eq.s32.totalorder %v1544, 1
  %vm1573 = vcmp.eq.s32.totalorder %v1547, 1
  %vm1574 = vcmp.eq.s32.totalorder %v1550, 1
  %vm1575 = vcmp.eq.s32.totalorder %v1553, 1
  %vm1576 = vcmp.eq.s32.totalorder %v1556, 1
  %vm1577 = vcmp.eq.s32.totalorder %v1559, 1
  %vm1578 = vcmp.eq.s32.totalorder %v1562, 1
  %v1579 = vsel %vm1563, %v1498, inf
  %v1580 = vsel %vm1564, %v1497, inf
  %v1581 = vsel %vm1565, %v1496, inf
  %v1582 = vsel %vm1566, %v1495, inf
  %v1583 = vsel %vm1567, %v1494, inf
  %v1584 = vsel %vm1568, %v1493, inf
  %v1585 = vsel %vm1569, %v1492, inf
  %v1586 = vsel %vm1570, %v1491, inf
  %v1587 = vsel %vm1571, %v1490, inf
  %v1588 = vsel %vm1572, %v1489, inf
  %v1589 = vsel %vm1573, %v1488, inf
  %v1590 = vsel %vm1574, %v1487, inf
  %v1591 = vsel %vm1575, %v1486, inf
  %v1592 = vsel %vm1576, %v1485, inf
  %v1593 = vsel %vm1577, %v1484, inf
  %v1594 = vsel %vm1578, %v1483, inf
  %v1595 = vmin.f32 %v1451, %v1579
  %v1596 = vmin.f32 %v1452, %v1580
  %v1597 = vmin.f32 %v1453, %v1581
  %v1598 = vmin.f32 %v1454, %v1582
  %v1599 = vmin.f32 %v1455, %v1583
  %v1600 = vmin.f32 %v1456, %v1584
  %v1601 = vmin.f32 %v1457, %v1585
  %v1602 = vmin.f32 %v1458, %v1586
  %v1603 = vmin.f32 %v1459, %v1587
  %v1604 = vmin.f32 %v1460, %v1588
  %v1605 = vmin.f32 %v1461, %v1589
  %v1606 = vmin.f32 %v1462, %v1590
  %v1607 = vmin.f32 %v1463, %v1591
  %v1608 = vmin.f32 %v1464, %v1592
  %v1609 = vmin.f32 %v1465, %v1593
  %v1610 = vmin.f32 %v1466, %v1594
  %v1611 = vrot.slane %v1163, 2
  %v1612 = vrot.slane %v1164, 2
  %v1613 = vrot.slane %v1165, 2
  %v1614 = vrot.slane %v1166, 2
  %v1615 = vrot.slane %v1167, 2
  %v1616 = vrot.slane %v1168, 2
  %v1617 = vrot.slane %v1169, 2
  %v1618 = vrot.slane %v1170, 2
  %v1619 = vrot.slane %v1171, 2
  %v1620 = vrot.slane %v1172, 2
  %v1621 = vrot.slane %v1173, 2
  %v1622 = vrot.slane %v1174, 2
  %v1623 = vrot.slane %v1175, 2
  %v1624 = vrot.slane %v1176, 2
  %v1625 = vrot.slane %v1177, 2
  %v1626 = vrot.slane %v1178, 2
  %v1627 = vsel %vm494, %v1625, %v1626
  %v1628 = vsel %vm494, %v1624, %v1625
  %v1629 = vsel %vm494, %v1623, %v1624
  %v1630 = vsel %vm494, %v1622, %v1623
  %v1631 = vsel %vm494, %v1621, %v1622
  %v1632 = vsel %vm494, %v1620, %v1621
  %v1633 = vsel %vm494, %v1619, %v1620
  %v1634 = vsel %vm494, %v1618, %v1619
  %v1635 = vsel %vm494, %v1617, %v1618
  %v1636 = vsel %vm494, %v1616, %v1617
  %v1637 = vsel %vm494, %v1615, %v1616
  %v1638 = vsel %vm494, %v1614, %v1615
  %v1639 = vsel %vm494, %v1613, %v1614
  %v1640 = vsel %vm494, %v1612, %v1613
  %v1641 = vsel %vm494, %v1611, %v1612
  %v1642 = vsel %vm494, %v1626, %v1611
  %v1643 = vsel %vm575, 1, 0
  %v1644 = vsel %vm576, 1, 0
  %v1645 = vsel %vm577, 1, 0
  %v1646 = vsel %vm578, 1, 0
  %v1647 = vsel %vm579, 1, 0
  %v1648 = vsel %vm580, 1, 0
  %v1649 = vsel %vm581, 1, 0
  %v1650 = vsel %vm582, 1, 0
  %v1651 = vsel %vm583, 1, 0
  %v1652 = vsel %vm584, 1, 0
  %v1653 = vsel %vm585, 1, 0
  %v1654 = vsel %vm586, 1, 0
  %v1655 = vsel %vm587, 1, 0
  %v1656 = vsel %vm588, 1, 0
  %v1657 = vsel %vm589, 1, 0
  %v1658 = vsel %vm590, 1, 0
  %1659 = vset.pattern.permute.xlu0 0
  %1660 = vperm.xlu0 %1659, %v1643
  %v1661 = vpop.permute.xlu0 %1660
  %1662 = vset.pattern.permute.xlu0 0
  %1663 = vperm.xlu0 %1662, %v1644
  %v1664 = vpop.permute.xlu0 %1663
  %1665 = vset.pattern.permute.xlu0 0
  %1666 = vperm.xlu0 %1665, %v1645
  %v1667 = vpop.permute.xlu0 %1666
  %1668 = vset.pattern.permute.xlu0 0
  %1669 = vperm.xlu0 %1668, %v1646
  %v1670 = vpop.permute.xlu0 %1669
  %1671 = vset.pattern.permute.xlu0 0
  %1672 = vperm.xlu0 %1671, %v1647
  %v1673 = vpop.permute.xlu0 %1672
  %1674 = vset.pattern.permute.xlu0 0
  %1675 = vperm.xlu0 %1674, %v1648
  %v1676 = vpop.permute.xlu0 %1675
  %1677 = vset.pattern.permute.xlu0 0
  %1678 = vperm.xlu0 %1677, %v1649
  %v1679 = vpop.permute.xlu0 %1678
  %1680 = vset.pattern.permute.xlu0 0
  %1681 = vperm.xlu0 %1680, %v1650
  %v1682 = vpop.permute.xlu0 %1681
  %1683 = vset.pattern.permute.xlu0 0
  %1684 = vperm.xlu0 %1683, %v1651
  %v1685 = vpop.permute.xlu0 %1684
  %1686 = vset.pattern.permute.xlu0 0
  %1687 = vperm.xlu0 %1686, %v1652
  %v1688 = vpop.permute.xlu0 %1687
  %1689 = vset.pattern.permute.xlu0 0
  %1690 = vperm.xlu0 %1689, %v1653
  %v1691 = vpop.permute.xlu0 %1690
  %1692 = vset.pattern.permute.xlu0 0
  %1693 = vperm.xlu0 %1692, %v1654
  %v1694 = vpop.permute.xlu0 %1693
  %1695 = vset.pattern.permute.xlu0 0
  %1696 = vperm.xlu0 %1695, %v1655
  %v1697 = vpop.permute.xlu0 %1696
  %1698 = vset.pattern.permute.xlu0 0
  %1699 = vperm.xlu0 %1698, %v1656
  %v1700 = vpop.permute.xlu0 %1699
  %1701 = vset.pattern.permute.xlu0 0
  %1702 = vperm.xlu0 %1701, %v1657
  %v1703 = vpop.permute.xlu0 %1702
  %1704 = vset.pattern.permute.xlu0 0
  %1705 = vperm.xlu0 %1704, %v1658
  %v1706 = vpop.permute.xlu0 %1705
  %vm1707 = vcmp.eq.s32.totalorder %v1661, 1
  %vm1708 = vcmp.eq.s32.totalorder %v1664, 1
  %vm1709 = vcmp.eq.s32.totalorder %v1667, 1
  %vm1710 = vcmp.eq.s32.totalorder %v1670, 1
  %vm1711 = vcmp.eq.s32.totalorder %v1673, 1
  %vm1712 = vcmp.eq.s32.totalorder %v1676, 1
  %vm1713 = vcmp.eq.s32.totalorder %v1679, 1
  %vm1714 = vcmp.eq.s32.totalorder %v1682, 1
  %vm1715 = vcmp.eq.s32.totalorder %v1685, 1
  %vm1716 = vcmp.eq.s32.totalorder %v1688, 1
  %vm1717 = vcmp.eq.s32.totalorder %v1691, 1
  %vm1718 = vcmp.eq.s32.totalorder %v1694, 1
  %vm1719 = vcmp.eq.s32.totalorder %v1697, 1
  %vm1720 = vcmp.eq.s32.totalorder %v1700, 1
  %vm1721 = vcmp.eq.s32.totalorder %v1703, 1
  %vm1722 = vcmp.eq.s32.totalorder %v1706, 1
  %v1723 = vsel %vm1707, %v1641, inf
  %v1724 = vsel %vm1708, %v1640, inf
  %v1725 = vsel %vm1709, %v1639, inf
  %v1726 = vsel %vm1710, %v1638, inf
  %v1727 = vsel %vm1711, %v1637, inf
  %v1728 = vsel %vm1712, %v1636, inf
  %v1729 = vsel %vm1713, %v1635, inf
  %v1730 = vsel %vm1714, %v1634, inf
  %v1731 = vsel %vm1715, %v1633, inf
  %v1732 = vsel %vm1716, %v1632, inf
  %v1733 = vsel %vm1717, %v1631, inf
  %v1734 = vsel %vm1718, %v1630, inf
  %v1735 = vsel %vm1719, %v1629, inf
  %v1736 = vsel %vm1720, %v1628, inf
  %v1737 = vsel %vm1721, %v1627, inf
  %v1738 = vsel %vm1722, %v1642, inf
  %v1739 = vmin.f32 %v1595, %v1723
  %v1740 = vmin.f32 %v1596, %v1724
  %v1741 = vmin.f32 %v1597, %v1725
  %v1742 = vmin.f32 %v1598, %v1726
  %v1743 = vmin.f32 %v1599, %v1727
  %v1744 = vmin.f32 %v1600, %v1728
  %v1745 = vmin.f32 %v1601, %v1729
  %v1746 = vmin.f32 %v1602, %v1730
  %v1747 = vmin.f32 %v1603, %v1731
  %v1748 = vmin.f32 %v1604, %v1732
  %v1749 = vmin.f32 %v1605, %v1733
  %v1750 = vmin.f32 %v1606, %v1734
  %v1751 = vmin.f32 %v1607, %v1735
  %v1752 = vmin.f32 %v1608, %v1736
  %v1753 = vmin.f32 %v1609, %v1737
  %v1754 = vmin.f32 %v1610, %v1738
  %v1755 = vsel %vm591, 1, 0
  %v1756 = vsel %vm592, 1, 0
  %v1757 = vsel %vm593, 1, 0
  %v1758 = vsel %vm594, 1, 0
  %v1759 = vsel %vm595, 1, 0
  %v1760 = vsel %vm596, 1, 0
  %v1761 = vsel %vm597, 1, 0
  %v1762 = vsel %vm598, 1, 0
  %v1763 = vsel %vm599, 1, 0
  %v1764 = vsel %vm600, 1, 0
  %v1765 = vsel %vm601, 1, 0
  %v1766 = vsel %vm602, 1, 0
  %v1767 = vsel %vm603, 1, 0
  %v1768 = vsel %vm604, 1, 0
  %v1769 = vsel %vm605, 1, 0
  %v1770 = vsel %vm606, 1, 0
  %1771 = vset.pattern.permute.xlu0 0
  %1772 = vperm.xlu0 %1771, %v1755
  %v1773 = vpop.permute.xlu0 %1772
  %1774 = vset.pattern.permute.xlu0 0
  %1775 = vperm.xlu0 %1774, %v1756
  %v1776 = vpop.permute.xlu0 %1775
  %1777 = vset.pattern.permute.xlu0 0
  %1778 = vperm.xlu0 %1777, %v1757
  %v1779 = vpop.permute.xlu0 %1778
  %1780 = vset.pattern.permute.xlu0 0
  %1781 = vperm.xlu0 %1780, %v1758
  %v1782 = vpop.permute.xlu0 %1781
  %1783 = vset.pattern.permute.xlu0 0
  %1784 = vperm.xlu0 %1783, %v1759
  %v1785 = vpop.permute.xlu0 %1784
  %1786 = vset.pattern.permute.xlu0 0
  %1787 = vperm.xlu0 %1786, %v1760
  %v1788 = vpop.permute.xlu0 %1787
  %1789 = vset.pattern.permute.xlu0 0
  %1790 = vperm.xlu0 %1789, %v1761
  %v1791 = vpop.permute.xlu0 %1790
  %1792 = vset.pattern.permute.xlu0 0
  %1793 = vperm.xlu0 %1792, %v1762
  %v1794 = vpop.permute.xlu0 %1793
  %1795 = vset.pattern.permute.xlu0 0
  %1796 = vperm.xlu0 %1795, %v1763
  %v1797 = vpop.permute.xlu0 %1796
  %1798 = vset.pattern.permute.xlu0 0
  %1799 = vperm.xlu0 %1798, %v1764
  %v1800 = vpop.permute.xlu0 %1799
  %1801 = vset.pattern.permute.xlu0 0
  %1802 = vperm.xlu0 %1801, %v1765
  %v1803 = vpop.permute.xlu0 %1802
  %1804 = vset.pattern.permute.xlu0 0
  %1805 = vperm.xlu0 %1804, %v1766
  %v1806 = vpop.permute.xlu0 %1805
  %1807 = vset.pattern.permute.xlu0 0
  %1808 = vperm.xlu0 %1807, %v1767
  %v1809 = vpop.permute.xlu0 %1808
  %1810 = vset.pattern.permute.xlu0 0
  %1811 = vperm.xlu0 %1810, %v1768
  %v1812 = vpop.permute.xlu0 %1811
  %1813 = vset.pattern.permute.xlu0 0
  %1814 = vperm.xlu0 %1813, %v1769
  %v1815 = vpop.permute.xlu0 %1814
  %1816 = vset.pattern.permute.xlu0 0
  %1817 = vperm.xlu0 %1816, %v1770
  %v1818 = vpop.permute.xlu0 %1817
  %vm1819 = vcmp.eq.s32.totalorder %v1773, 1
  %vm1820 = vcmp.eq.s32.totalorder %v1776, 1
  %vm1821 = vcmp.eq.s32.totalorder %v1779, 1
  %vm1822 = vcmp.eq.s32.totalorder %v1782, 1
  %vm1823 = vcmp.eq.s32.totalorder %v1785, 1
  %vm1824 = vcmp.eq.s32.totalorder %v1788, 1
  %vm1825 = vcmp.eq.s32.totalorder %v1791, 1
  %vm1826 = vcmp.eq.s32.totalorder %v1794, 1
  %vm1827 = vcmp.eq.s32.totalorder %v1797, 1
  %vm1828 = vcmp.eq.s32.totalorder %v1800, 1
  %vm1829 = vcmp.eq.s32.totalorder %v1803, 1
  %vm1830 = vcmp.eq.s32.totalorder %v1806, 1
  %vm1831 = vcmp.eq.s32.totalorder %v1809, 1
  %vm1832 = vcmp.eq.s32.totalorder %v1812, 1
  %vm1833 = vcmp.eq.s32.totalorder %v1815, 1
  %vm1834 = vcmp.eq.s32.totalorder %v1818, 1
  %v1835 = vsel %vm1819, %v1753, inf
  %v1836 = vsel %vm1820, %v1754, inf
  %v1837 = vsel %vm1821, %v1739, inf
  %v1838 = vsel %vm1822, %v1740, inf
  %v1839 = vsel %vm1823, %v1741, inf
  %v1840 = vsel %vm1824, %v1742, inf
  %v1841 = vsel %vm1825, %v1743, inf
  %v1842 = vsel %vm1826, %v1744, inf
  %v1843 = vsel %vm1827, %v1745, inf
  %v1844 = vsel %vm1828, %v1746, inf
  %v1845 = vsel %vm1829, %v1747, inf
  %v1846 = vsel %vm1830, %v1748, inf
  %v1847 = vsel %vm1831, %v1749, inf
  %v1848 = vsel %vm1832, %v1750, inf
  %v1849 = vsel %vm1833, %v1751, inf
  %v1850 = vsel %vm1834, %v1752, inf
  %v1851 = vmin.f32 %v1739, %v1835
  %v1852 = vmin.f32 %v1740, %v1836
  %v1853 = vmin.f32 %v1741, %v1837
  %v1854 = vmin.f32 %v1742, %v1838
  %v1855 = vmin.f32 %v1743, %v1839
  %v1856 = vmin.f32 %v1744, %v1840
  %v1857 = vmin.f32 %v1745, %v1841
  %v1858 = vmin.f32 %v1746, %v1842
  %v1859 = vmin.f32 %v1747, %v1843
  %v1860 = vmin.f32 %v1748, %v1844
  %v1861 = vmin.f32 %v1749, %v1845
  %v1862 = vmin.f32 %v1750, %v1846
  %v1863 = vmin.f32 %v1751, %v1847
  %v1864 = vmin.f32 %v1752, %v1848
  %v1865 = vmin.f32 %v1753, %v1849
  %v1866 = vmin.f32 %v1754, %v1850
  %v1867 = vsel %vm607, 1, 0
  %v1868 = vsel %vm608, 1, 0
  %v1869 = vsel %vm609, 1, 0
  %v1870 = vsel %vm610, 1, 0
  %v1871 = vsel %vm611, 1, 0
  %v1872 = vsel %vm612, 1, 0
  %v1873 = vsel %vm613, 1, 0
  %v1874 = vsel %vm614, 1, 0
  %v1875 = vsel %vm615, 1, 0
  %v1876 = vsel %vm616, 1, 0
  %v1877 = vsel %vm617, 1, 0
  %v1878 = vsel %vm618, 1, 0
  %v1879 = vsel %vm619, 1, 0
  %v1880 = vsel %vm620, 1, 0
  %v1881 = vsel %vm621, 1, 0
  %v1882 = vsel %vm622, 1, 0
  %1883 = vset.pattern.permute.xlu0 0
  %1884 = vperm.xlu0 %1883, %v1867
  %v1885 = vpop.permute.xlu0 %1884
  %1886 = vset.pattern.permute.xlu0 0
  %1887 = vperm.xlu0 %1886, %v1868
  %v1888 = vpop.permute.xlu0 %1887
  %1889 = vset.pattern.permute.xlu0 0
  %1890 = vperm.xlu0 %1889, %v1869
  %v1891 = vpop.permute.xlu0 %1890
  %1892 = vset.pattern.permute.xlu0 0
  %1893 = vperm.xlu0 %1892, %v1870
  %v1894 = vpop.permute.xlu0 %1893
  %1895 = vset.pattern.permute.xlu0 0
  %1896 = vperm.xlu0 %1895, %v1871
  %v1897 = vpop.permute.xlu0 %1896
  %1898 = vset.pattern.permute.xlu0 0
  %1899 = vperm.xlu0 %1898, %v1872
  %v1900 = vpop.permute.xlu0 %1899
  %1901 = vset.pattern.permute.xlu0 0
  %1902 = vperm.xlu0 %1901, %v1873
  %v1903 = vpop.permute.xlu0 %1902
  %1904 = vset.pattern.permute.xlu0 0
  %1905 = vperm.xlu0 %1904, %v1874
  %v1906 = vpop.permute.xlu0 %1905
  %1907 = vset.pattern.permute.xlu0 0
  %1908 = vperm.xlu0 %1907, %v1875
  %v1909 = vpop.permute.xlu0 %1908
  %1910 = vset.pattern.permute.xlu0 0
  %1911 = vperm.xlu0 %1910, %v1876
  %v1912 = vpop.permute.xlu0 %1911
  %1913 = vset.pattern.permute.xlu0 0
  %1914 = vperm.xlu0 %1913, %v1877
  %v1915 = vpop.permute.xlu0 %1914
  %1916 = vset.pattern.permute.xlu0 0
  %1917 = vperm.xlu0 %1916, %v1878
  %v1918 = vpop.permute.xlu0 %1917
  %1919 = vset.pattern.permute.xlu0 0
  %1920 = vperm.xlu0 %1919, %v1879
  %v1921 = vpop.permute.xlu0 %1920
  %1922 = vset.pattern.permute.xlu0 0
  %1923 = vperm.xlu0 %1922, %v1880
  %v1924 = vpop.permute.xlu0 %1923
  %1925 = vset.pattern.permute.xlu0 0
  %1926 = vperm.xlu0 %1925, %v1881
  %v1927 = vpop.permute.xlu0 %1926
  %1928 = vset.pattern.permute.xlu0 0
  %1929 = vperm.xlu0 %1928, %v1882
  %v1930 = vpop.permute.xlu0 %1929
  %vm1931 = vcmp.eq.s32.totalorder %v1885, 1
  %vm1932 = vcmp.eq.s32.totalorder %v1888, 1
  %vm1933 = vcmp.eq.s32.totalorder %v1891, 1
  %vm1934 = vcmp.eq.s32.totalorder %v1894, 1
  %vm1935 = vcmp.eq.s32.totalorder %v1897, 1
  %vm1936 = vcmp.eq.s32.totalorder %v1900, 1
  %vm1937 = vcmp.eq.s32.totalorder %v1903, 1
  %vm1938 = vcmp.eq.s32.totalorder %v1906, 1
  %vm1939 = vcmp.eq.s32.totalorder %v1909, 1
  %vm1940 = vcmp.eq.s32.totalorder %v1912, 1
  %vm1941 = vcmp.eq.s32.totalorder %v1915, 1
  %vm1942 = vcmp.eq.s32.totalorder %v1918, 1
  %vm1943 = vcmp.eq.s32.totalorder %v1921, 1
  %vm1944 = vcmp.eq.s32.totalorder %v1924, 1
  %vm1945 = vcmp.eq.s32.totalorder %v1927, 1
  %vm1946 = vcmp.eq.s32.totalorder %v1930, 1
  %v1947 = vsel %vm1931, %v1741, inf
  %v1948 = vsel %vm1932, %v1742, inf
  %v1949 = vsel %vm1933, %v1743, inf
  %v1950 = vsel %vm1934, %v1744, inf
  %v1951 = vsel %vm1935, %v1745, inf
  %v1952 = vsel %vm1936, %v1746, inf
  %v1953 = vsel %vm1937, %v1747, inf
  %v1954 = vsel %vm1938, %v1748, inf
  %v1955 = vsel %vm1939, %v1749, inf
  %v1956 = vsel %vm1940, %v1750, inf
  %v1957 = vsel %vm1941, %v1751, inf
  %v1958 = vsel %vm1942, %v1752, inf
  %v1959 = vsel %vm1943, %v1753, inf
  %v1960 = vsel %vm1944, %v1754, inf
  %v1961 = vsel %vm1945, %v1739, inf
  %v1962 = vsel %vm1946, %v1740, inf
  %v1963 = vmin.f32 %v1851, %v1947
  %v1964 = vmin.f32 %v1852, %v1948
  %v1965 = vmin.f32 %v1853, %v1949
  %v1966 = vmin.f32 %v1854, %v1950
  %v1967 = vmin.f32 %v1855, %v1951
  %v1968 = vmin.f32 %v1856, %v1952
  %v1969 = vmin.f32 %v1857, %v1953
  %v1970 = vmin.f32 %v1858, %v1954
  %v1971 = vmin.f32 %v1859, %v1955
  %v1972 = vmin.f32 %v1860, %v1956
  %v1973 = vmin.f32 %v1861, %v1957
  %v1974 = vmin.f32 %v1862, %v1958
  %v1975 = vmin.f32 %v1863, %v1959
  %v1976 = vmin.f32 %v1864, %v1960
  %v1977 = vmin.f32 %v1865, %v1961
  %v1978 = vmin.f32 %v1866, %v1962
  %v1979 = vsel %vm623, 1, 0
  %v1980 = vsel %vm624, 1, 0
  %v1981 = vsel %vm625, 1, 0
  %v1982 = vsel %vm626, 1, 0
  %v1983 = vsel %vm627, 1, 0
  %v1984 = vsel %vm628, 1, 0
  %v1985 = vsel %vm629, 1, 0
  %v1986 = vsel %vm630, 1, 0
  %v1987 = vsel %vm631, 1, 0
  %v1988 = vsel %vm632, 1, 0
  %v1989 = vsel %vm633, 1, 0
  %v1990 = vsel %vm634, 1, 0
  %v1991 = vsel %vm635, 1, 0
  %v1992 = vsel %vm636, 1, 0
  %v1993 = vsel %vm637, 1, 0
  %v1994 = vsel %vm638, 1, 0
  %1995 = vset.pattern.permute.xlu0 0
  %1996 = vperm.xlu0 %1995, %v1979
  %v1997 = vpop.permute.xlu0 %1996
  %1998 = vset.pattern.permute.xlu0 0
  %1999 = vperm.xlu0 %1998, %v1980
  %v2000 = vpop.permute.xlu0 %1999
  %2001 = vset.pattern.permute.xlu0 0
  %2002 = vperm.xlu0 %2001, %v1981
  %v2003 = vpop.permute.xlu0 %2002
  %2004 = vset.pattern.permute.xlu0 0
  %2005 = vperm.xlu0 %2004, %v1982
  %v2006 = vpop.permute.xlu0 %2005
  %2007 = vset.pattern.permute.xlu0 0
  %2008 = vperm.xlu0 %2007, %v1983
  %v2009 = vpop.permute.xlu0 %2008
  %2010 = vset.pattern.permute.xlu0 0
  %2011 = vperm.xlu0 %2010, %v1984
  %v2012 = vpop.permute.xlu0 %2011
  %2013 = vset.pattern.permute.xlu0 0
  %2014 = vperm.xlu0 %2013, %v1985
  %v2015 = vpop.permute.xlu0 %2014
  %2016 = vset.pattern.permute.xlu0 0
  %2017 = vperm.xlu0 %2016, %v1986
  %v2018 = vpop.permute.xlu0 %2017
  %2019 = vset.pattern.permute.xlu0 0
  %2020 = vperm.xlu0 %2019, %v1987
  %v2021 = vpop.permute.xlu0 %2020
  %2022 = vset.pattern.permute.xlu0 0
  %2023 = vperm.xlu0 %2022, %v1988
  %v2024 = vpop.permute.xlu0 %2023
  %2025 = vset.pattern.permute.xlu0 0
  %2026 = vperm.xlu0 %2025, %v1989
  %v2027 = vpop.permute.xlu0 %2026
  %2028 = vset.pattern.permute.xlu0 0
  %2029 = vperm.xlu0 %2028, %v1990
  %v2030 = vpop.permute.xlu0 %2029
  %2031 = vset.pattern.permute.xlu0 0
  %2032 = vperm.xlu0 %2031, %v1991
  %v2033 = vpop.permute.xlu0 %2032
  %2034 = vset.pattern.permute.xlu0 0
  %2035 = vperm.xlu0 %2034, %v1992
  %v2036 = vpop.permute.xlu0 %2035
  %2037 = vset.pattern.permute.xlu0 0
  %2038 = vperm.xlu0 %2037, %v1993
  %v2039 = vpop.permute.xlu0 %2038
  %2040 = vset.pattern.permute.xlu0 0
  %2041 = vperm.xlu0 %2040, %v1994
  %v2042 = vpop.permute.xlu0 %2041
  %vm2043 = vcmp.eq.s32.totalorder %v1997, 1
  %vm2044 = vcmp.eq.s32.totalorder %v2000, 1
  %vm2045 = vcmp.eq.s32.totalorder %v2003, 1
  %vm2046 = vcmp.eq.s32.totalorder %v2006, 1
  %vm2047 = vcmp.eq.s32.totalorder %v2009, 1
  %vm2048 = vcmp.eq.s32.totalorder %v2012, 1
  %vm2049 = vcmp.eq.s32.totalorder %v2015, 1
  %vm2050 = vcmp.eq.s32.totalorder %v2018, 1
  %vm2051 = vcmp.eq.s32.totalorder %v2021, 1
  %vm2052 = vcmp.eq.s32.totalorder %v2024, 1
  %vm2053 = vcmp.eq.s32.totalorder %v2027, 1
  %vm2054 = vcmp.eq.s32.totalorder %v2030, 1
  %vm2055 = vcmp.eq.s32.totalorder %v2033, 1
  %vm2056 = vcmp.eq.s32.totalorder %v2036, 1
  %vm2057 = vcmp.eq.s32.totalorder %v2039, 1
  %vm2058 = vcmp.eq.s32.totalorder %v2042, 1
  %v2059 = vsel %vm2043, %v1751, inf
  %v2060 = vsel %vm2044, %v1752, inf
  %v2061 = vsel %vm2045, %v1753, inf
  %v2062 = vsel %vm2046, %v1754, inf
  %v2063 = vsel %vm2047, %v1739, inf
  %v2064 = vsel %vm2048, %v1740, inf
  %v2065 = vsel %vm2049, %v1741, inf
  %v2066 = vsel %vm2050, %v1742, inf
  %v2067 = vsel %vm2051, %v1743, inf
  %v2068 = vsel %vm2052, %v1744, inf
  %v2069 = vsel %vm2053, %v1745, inf
  %v2070 = vsel %vm2054, %v1746, inf
  %v2071 = vsel %vm2055, %v1747, inf
  %v2072 = vsel %vm2056, %v1748, inf
  %v2073 = vsel %vm2057, %v1749, inf
  %v2074 = vsel %vm2058, %v1750, inf
  %v2075 = vmin.f32 %v1963, %v2059
  %v2076 = vmin.f32 %v1964, %v2060
  %v2077 = vmin.f32 %v1965, %v2061
  %v2078 = vmin.f32 %v1966, %v2062
  %v2079 = vmin.f32 %v1967, %v2063
  %v2080 = vmin.f32 %v1968, %v2064
  %v2081 = vmin.f32 %v1969, %v2065
  %v2082 = vmin.f32 %v1970, %v2066
  %v2083 = vmin.f32 %v1971, %v2067
  %v2084 = vmin.f32 %v1972, %v2068
  %v2085 = vmin.f32 %v1973, %v2069
  %v2086 = vmin.f32 %v1974, %v2070
  %v2087 = vmin.f32 %v1975, %v2071
  %v2088 = vmin.f32 %v1976, %v2072
  %v2089 = vmin.f32 %v1977, %v2073
  %v2090 = vmin.f32 %v1978, %v2074
  %v2091 = vsel %vm639, 1, 0
  %v2092 = vsel %vm640, 1, 0
  %v2093 = vsel %vm641, 1, 0
  %v2094 = vsel %vm642, 1, 0
  %v2095 = vsel %vm643, 1, 0
  %v2096 = vsel %vm644, 1, 0
  %v2097 = vsel %vm645, 1, 0
  %v2098 = vsel %vm646, 1, 0
  %v2099 = vsel %vm647, 1, 0
  %v2100 = vsel %vm648, 1, 0
  %v2101 = vsel %vm649, 1, 0
  %v2102 = vsel %vm650, 1, 0
  %v2103 = vsel %vm651, 1, 0
  %v2104 = vsel %vm652, 1, 0
  %v2105 = vsel %vm653, 1, 0
  %v2106 = vsel %vm654, 1, 0
  %2107 = vset.pattern.permute.xlu0 0
  %2108 = vperm.xlu0 %2107, %v2091
  %v2109 = vpop.permute.xlu0 %2108
  %2110 = vset.pattern.permute.xlu0 0
  %2111 = vperm.xlu0 %2110, %v2092
  %v2112 = vpop.permute.xlu0 %2111
  %2113 = vset.pattern.permute.xlu0 0
  %2114 = vperm.xlu0 %2113, %v2093
  %v2115 = vpop.permute.xlu0 %2114
  %2116 = vset.pattern.permute.xlu0 0
  %2117 = vperm.xlu0 %2116, %v2094
  %v2118 = vpop.permute.xlu0 %2117
  %2119 = vset.pattern.permute.xlu0 0
  %2120 = vperm.xlu0 %2119, %v2095
  %v2121 = vpop.permute.xlu0 %2120
  %2122 = vset.pattern.permute.xlu0 0
  %2123 = vperm.xlu0 %2122, %v2096
  %v2124 = vpop.permute.xlu0 %2123
  %2125 = vset.pattern.permute.xlu0 0
  %2126 = vperm.xlu0 %2125, %v2097
  %v2127 = vpop.permute.xlu0 %2126
  %2128 = vset.pattern.permute.xlu0 0
  %2129 = vperm.xlu0 %2128, %v2098
  %v2130 = vpop.permute.xlu0 %2129
  %2131 = vset.pattern.permute.xlu0 0
  %2132 = vperm.xlu0 %2131, %v2099
  %v2133 = vpop.permute.xlu0 %2132
  %2134 = vset.pattern.permute.xlu0 0
  %2135 = vperm.xlu0 %2134, %v2100
  %v2136 = vpop.permute.xlu0 %2135
  %2137 = vset.pattern.permute.xlu0 0
  %2138 = vperm.xlu0 %2137, %v2101
  %v2139 = vpop.permute.xlu0 %2138
  %2140 = vset.pattern.permute.xlu0 0
  %2141 = vperm.xlu0 %2140, %v2102
  %v2142 = vpop.permute.xlu0 %2141
  %2143 = vset.pattern.permute.xlu0 0
  %2144 = vperm.xlu0 %2143, %v2103
  %v2145 = vpop.permute.xlu0 %2144
  %2146 = vset.pattern.permute.xlu0 0
  %2147 = vperm.xlu0 %2146, %v2104
  %v2148 = vpop.permute.xlu0 %2147
  %2149 = vset.pattern.permute.xlu0 0
  %2150 = vperm.xlu0 %2149, %v2105
  %v2151 = vpop.permute.xlu0 %2150
  %2152 = vset.pattern.permute.xlu0 0
  %2153 = vperm.xlu0 %2152, %v2106
  %v2154 = vpop.permute.xlu0 %2153
  %vm2155 = vcmp.eq.s32.totalorder %v2109, 1
  %vm2156 = vcmp.eq.s32.totalorder %v2112, 1
  %vm2157 = vcmp.eq.s32.totalorder %v2115, 1
  %vm2158 = vcmp.eq.s32.totalorder %v2118, 1
  %vm2159 = vcmp.eq.s32.totalorder %v2121, 1
  %vm2160 = vcmp.eq.s32.totalorder %v2124, 1
  %vm2161 = vcmp.eq.s32.totalorder %v2127, 1
  %vm2162 = vcmp.eq.s32.totalorder %v2130, 1
  %vm2163 = vcmp.eq.s32.totalorder %v2133, 1
  %vm2164 = vcmp.eq.s32.totalorder %v2136, 1
  %vm2165 = vcmp.eq.s32.totalorder %v2139, 1
  %vm2166 = vcmp.eq.s32.totalorder %v2142, 1
  %vm2167 = vcmp.eq.s32.totalorder %v2145, 1
  %vm2168 = vcmp.eq.s32.totalorder %v2148, 1
  %vm2169 = vcmp.eq.s32.totalorder %v2151, 1
  %vm2170 = vcmp.eq.s32.totalorder %v2154, 1
  %v2171 = vsel %vm2155, %v1743, inf
  %v2172 = vsel %vm2156, %v1744, inf
  %v2173 = vsel %vm2157, %v1745, inf
  %v2174 = vsel %vm2158, %v1746, inf
  %v2175 = vsel %vm2159, %v1747, inf
  %v2176 = vsel %vm2160, %v1748, inf
  %v2177 = vsel %vm2161, %v1749, inf
  %v2178 = vsel %vm2162, %v1750, inf
  %v2179 = vsel %vm2163, %v1751, inf
  %v2180 = vsel %vm2164, %v1752, inf
  %v2181 = vsel %vm2165, %v1753, inf
  %v2182 = vsel %vm2166, %v1754, inf
  %v2183 = vsel %vm2167, %v1739, inf
  %v2184 = vsel %vm2168, %v1740, inf
  %v2185 = vsel %vm2169, %v1741, inf
  %v2186 = vsel %vm2170, %v1742, inf
  %v2187 = vmin.f32 %v2075, %v2171
  %v2188 = vmin.f32 %v2076, %v2172
  %v2189 = vmin.f32 %v2077, %v2173
  %v2190 = vmin.f32 %v2078, %v2174
  %v2191 = vmin.f32 %v2079, %v2175
  %v2192 = vmin.f32 %v2080, %v2176
  %v2193 = vmin.f32 %v2081, %v2177
  %v2194 = vmin.f32 %v2082, %v2178
  %v2195 = vmin.f32 %v2083, %v2179
  %v2196 = vmin.f32 %v2084, %v2180
  %v2197 = vmin.f32 %v2085, %v2181
  %v2198 = vmin.f32 %v2086, %v2182
  %v2199 = vmin.f32 %v2087, %v2183
  %v2200 = vmin.f32 %v2088, %v2184
  %v2201 = vmin.f32 %v2089, %v2185
  %v2202 = vmin.f32 %v2090, %v2186
  %v2203 = vsel %vm655, 1, 0
  %v2204 = vsel %vm656, 1, 0
  %v2205 = vsel %vm657, 1, 0
  %v2206 = vsel %vm658, 1, 0
  %v2207 = vsel %vm659, 1, 0
  %v2208 = vsel %vm660, 1, 0
  %v2209 = vsel %vm661, 1, 0
  %v2210 = vsel %vm662, 1, 0
  %v2211 = vsel %vm663, 1, 0
  %v2212 = vsel %vm664, 1, 0
  %v2213 = vsel %vm665, 1, 0
  %v2214 = vsel %vm666, 1, 0
  %v2215 = vsel %vm667, 1, 0
  %v2216 = vsel %vm668, 1, 0
  %v2217 = vsel %vm669, 1, 0
  %v2218 = vsel %vm670, 1, 0
  %2219 = vset.pattern.permute.xlu0 0
  %2220 = vperm.xlu0 %2219, %v2203
  %v2221 = vpop.permute.xlu0 %2220
  %2222 = vset.pattern.permute.xlu0 0
  %2223 = vperm.xlu0 %2222, %v2204
  %v2224 = vpop.permute.xlu0 %2223
  %2225 = vset.pattern.permute.xlu0 0
  %2226 = vperm.xlu0 %2225, %v2205
  %v2227 = vpop.permute.xlu0 %2226
  %2228 = vset.pattern.permute.xlu0 0
  %2229 = vperm.xlu0 %2228, %v2206
  %v2230 = vpop.permute.xlu0 %2229
  %2231 = vset.pattern.permute.xlu0 0
  %2232 = vperm.xlu0 %2231, %v2207
  %v2233 = vpop.permute.xlu0 %2232
  %2234 = vset.pattern.permute.xlu0 0
  %2235 = vperm.xlu0 %2234, %v2208
  %v2236 = vpop.permute.xlu0 %2235
  %2237 = vset.pattern.permute.xlu0 0
  %2238 = vperm.xlu0 %2237, %v2209
  %v2239 = vpop.permute.xlu0 %2238
  %2240 = vset.pattern.permute.xlu0 0
  %2241 = vperm.xlu0 %2240, %v2210
  %v2242 = vpop.permute.xlu0 %2241
  %2243 = vset.pattern.permute.xlu0 0
  %2244 = vperm.xlu0 %2243, %v2211
  %v2245 = vpop.permute.xlu0 %2244
  %2246 = vset.pattern.permute.xlu0 0
  %2247 = vperm.xlu0 %2246, %v2212
  %v2248 = vpop.permute.xlu0 %2247
  %2249 = vset.pattern.permute.xlu0 0
  %2250 = vperm.xlu0 %2249, %v2213
  %v2251 = vpop.permute.xlu0 %2250
  %2252 = vset.pattern.permute.xlu0 0
  %2253 = vperm.xlu0 %2252, %v2214
  %v2254 = vpop.permute.xlu0 %2253
  %2255 = vset.pattern.permute.xlu0 0
  %2256 = vperm.xlu0 %2255, %v2215
  %v2257 = vpop.permute.xlu0 %2256
  %2258 = vset.pattern.permute.xlu0 0
  %2259 = vperm.xlu0 %2258, %v2216
  %v2260 = vpop.permute.xlu0 %2259
  %2261 = vset.pattern.permute.xlu0 0
  %2262 = vperm.xlu0 %2261, %v2217
  %v2263 = vpop.permute.xlu0 %2262
  %2264 = vset.pattern.permute.xlu0 0
  %2265 = vperm.xlu0 %2264, %v2218
  %v2266 = vpop.permute.xlu0 %2265
  %vm2267 = vcmp.eq.s32.totalorder %v2221, 1
  %vm2268 = vcmp.eq.s32.totalorder %v2224, 1
  %vm2269 = vcmp.eq.s32.totalorder %v2227, 1
  %vm2270 = vcmp.eq.s32.totalorder %v2230, 1
  %vm2271 = vcmp.eq.s32.totalorder %v2233, 1
  %vm2272 = vcmp.eq.s32.totalorder %v2236, 1
  %vm2273 = vcmp.eq.s32.totalorder %v2239, 1
  %vm2274 = vcmp.eq.s32.totalorder %v2242, 1
  %vm2275 = vcmp.eq.s32.totalorder %v2245, 1
  %vm2276 = vcmp.eq.s32.totalorder %v2248, 1
  %vm2277 = vcmp.eq.s32.totalorder %v2251, 1
  %vm2278 = vcmp.eq.s32.totalorder %v2254, 1
  %vm2279 = vcmp.eq.s32.totalorder %v2257, 1
  %vm2280 = vcmp.eq.s32.totalorder %v2260, 1
  %vm2281 = vcmp.eq.s32.totalorder %v2263, 1
  %vm2282 = vcmp.eq.s32.totalorder %v2266, 1
  %v2283 = vsel %vm2267, %v1749, inf
  %v2284 = vsel %vm2268, %v1750, inf
  %v2285 = vsel %vm2269, %v1751, inf
  %v2286 = vsel %vm2270, %v1752, inf
  %v2287 = vsel %vm2271, %v1753, inf
  %v2288 = vsel %vm2272, %v1754, inf
  %v2289 = vsel %vm2273, %v1739, inf
  %v2290 = vsel %vm2274, %v1740, inf
  %v2291 = vsel %vm2275, %v1741, inf
  %v2292 = vsel %vm2276, %v1742, inf
  %v2293 = vsel %vm2277, %v1743, inf
  %v2294 = vsel %vm2278, %v1744, inf
  %v2295 = vsel %vm2279, %v1745, inf
  %v2296 = vsel %vm2280, %v1746, inf
  %v2297 = vsel %vm2281, %v1747, inf
  %v2298 = vsel %vm2282, %v1748, inf
  %v2299 = vmin.f32 %v2187, %v2283
  %v2300 = vmin.f32 %v2188, %v2284
  %v2301 = vmin.f32 %v2189, %v2285
  %v2302 = vmin.f32 %v2190, %v2286
  %v2303 = vmin.f32 %v2191, %v2287
  %v2304 = vmin.f32 %v2192, %v2288
  %v2305 = vmin.f32 %v2193, %v2289
  %v2306 = vmin.f32 %v2194, %v2290
  %v2307 = vmin.f32 %v2195, %v2291
  %v2308 = vmin.f32 %v2196, %v2292
  %v2309 = vmin.f32 %v2197, %v2293
  %v2310 = vmin.f32 %v2198, %v2294
  %v2311 = vmin.f32 %v2199, %v2295
  %v2312 = vmin.f32 %v2200, %v2296
  %v2313 = vmin.f32 %v2201, %v2297
  %v2314 = vmin.f32 %v2202, %v2298
  %v2315 = vsel %vm671, 1, 0
  %v2316 = vsel %vm672, 1, 0
  %v2317 = vsel %vm673, 1, 0
  %v2318 = vsel %vm674, 1, 0
  %v2319 = vsel %vm675, 1, 0
  %v2320 = vsel %vm676, 1, 0
  %v2321 = vsel %vm677, 1, 0
  %v2322 = vsel %vm678, 1, 0
  %v2323 = vsel %vm679, 1, 0
  %v2324 = vsel %vm680, 1, 0
  %v2325 = vsel %vm681, 1, 0
  %v2326 = vsel %vm682, 1, 0
  %v2327 = vsel %vm683, 1, 0
  %v2328 = vsel %vm684, 1, 0
  %v2329 = vsel %vm685, 1, 0
  %v2330 = vsel %vm686, 1, 0
  %2331 = vset.pattern.permute.xlu0 0
  %2332 = vperm.xlu0 %2331, %v2315
  %v2333 = vpop.permute.xlu0 %2332
  %2334 = vset.pattern.permute.xlu0 0
  %2335 = vperm.xlu0 %2334, %v2316
  %v2336 = vpop.permute.xlu0 %2335
  %2337 = vset.pattern.permute.xlu0 0
  %2338 = vperm.xlu0 %2337, %v2317
  %v2339 = vpop.permute.xlu0 %2338
  %2340 = vset.pattern.permute.xlu0 0
  %2341 = vperm.xlu0 %2340, %v2318
  %v2342 = vpop.permute.xlu0 %2341
  %2343 = vset.pattern.permute.xlu0 0
  %2344 = vperm.xlu0 %2343, %v2319
  %v2345 = vpop.permute.xlu0 %2344
  %2346 = vset.pattern.permute.xlu0 0
  %2347 = vperm.xlu0 %2346, %v2320
  %v2348 = vpop.permute.xlu0 %2347
  %2349 = vset.pattern.permute.xlu0 0
  %2350 = vperm.xlu0 %2349, %v2321
  %v2351 = vpop.permute.xlu0 %2350
  %2352 = vset.pattern.permute.xlu0 0
  %2353 = vperm.xlu0 %2352, %v2322
  %v2354 = vpop.permute.xlu0 %2353
  %2355 = vset.pattern.permute.xlu0 0
  %2356 = vperm.xlu0 %2355, %v2323
  %v2357 = vpop.permute.xlu0 %2356
  %2358 = vset.pattern.permute.xlu0 0
  %2359 = vperm.xlu0 %2358, %v2324
  %v2360 = vpop.permute.xlu0 %2359
  %2361 = vset.pattern.permute.xlu0 0
  %2362 = vperm.xlu0 %2361, %v2325
  %v2363 = vpop.permute.xlu0 %2362
  %2364 = vset.pattern.permute.xlu0 0
  %2365 = vperm.xlu0 %2364, %v2326
  %v2366 = vpop.permute.xlu0 %2365
  %2367 = vset.pattern.permute.xlu0 0
  %2368 = vperm.xlu0 %2367, %v2327
  %v2369 = vpop.permute.xlu0 %2368
  %2370 = vset.pattern.permute.xlu0 0
  %2371 = vperm.xlu0 %2370, %v2328
  %v2372 = vpop.permute.xlu0 %2371
  %2373 = vset.pattern.permute.xlu0 0
  %2374 = vperm.xlu0 %2373, %v2329
  %v2375 = vpop.permute.xlu0 %2374
  %2376 = vset.pattern.permute.xlu0 0
  %2377 = vperm.xlu0 %2376, %v2330
  %v2378 = vpop.permute.xlu0 %2377
  %vm2379 = vcmp.eq.s32.totalorder %v2333, 1
  %vm2380 = vcmp.eq.s32.totalorder %v2336, 1
  %vm2381 = vcmp.eq.s32.totalorder %v2339, 1
  %vm2382 = vcmp.eq.s32.totalorder %v2342, 1
  %vm2383 = vcmp.eq.s32.totalorder %v2345, 1
  %vm2384 = vcmp.eq.s32.totalorder %v2348, 1
  %vm2385 = vcmp.eq.s32.totalorder %v2351, 1
  %vm2386 = vcmp.eq.s32.totalorder %v2354, 1
  %vm2387 = vcmp.eq.s32.totalorder %v2357, 1
  %vm2388 = vcmp.eq.s32.totalorder %v2360, 1
  %vm2389 = vcmp.eq.s32.totalorder %v2363, 1
  %vm2390 = vcmp.eq.s32.totalorder %v2366, 1
  %vm2391 = vcmp.eq.s32.totalorder %v2369, 1
  %vm2392 = vcmp.eq.s32.totalorder %v2372, 1
  %vm2393 = vcmp.eq.s32.totalorder %v2375, 1
  %vm2394 = vcmp.eq.s32.totalorder %v2378, 1
  %v2395 = vsel %vm2379, %v1745, inf
  %v2396 = vsel %vm2380, %v1746, inf
  %v2397 = vsel %vm2381, %v1747, inf
  %v2398 = vsel %vm2382, %v1748, inf
  %v2399 = vsel %vm2383, %v1749, inf
  %v2400 = vsel %vm2384, %v1750, inf
  %v2401 = vsel %vm2385, %v1751, inf
  %v2402 = vsel %vm2386, %v1752, inf
  %v2403 = vsel %vm2387, %v1753, inf
  %v2404 = vsel %vm2388, %v1754, inf
  %v2405 = vsel %vm2389, %v1739, inf
  %v2406 = vsel %vm2390, %v1740, inf
  %v2407 = vsel %vm2391, %v1741, inf
  %v2408 = vsel %vm2392, %v1742, inf
  %v2409 = vsel %vm2393, %v1743, inf
  %v2410 = vsel %vm2394, %v1744, inf
  %v2411 = vmin.f32 %v2299, %v2395
  %v2412 = vmin.f32 %v2300, %v2396
  %v2413 = vmin.f32 %v2301, %v2397
  %v2414 = vmin.f32 %v2302, %v2398
  %v2415 = vmin.f32 %v2303, %v2399
  %v2416 = vmin.f32 %v2304, %v2400
  %v2417 = vmin.f32 %v2305, %v2401
  %v2418 = vmin.f32 %v2306, %v2402
  %v2419 = vmin.f32 %v2307, %v2403
  %v2420 = vmin.f32 %v2308, %v2404
  %v2421 = vmin.f32 %v2309, %v2405
  %v2422 = vmin.f32 %v2310, %v2406
  %v2423 = vmin.f32 %v2311, %v2407
  %v2424 = vmin.f32 %v2312, %v2408
  %v2425 = vmin.f32 %v2313, %v2409
  %v2426 = vmin.f32 %v2314, %v2410
  %2427 = vrot.lane.b32.xlu0 %v36, 16
  %v2428 = vpop.permute.xlu0 %2427
  %v2429 = vsel %vm102, %v2428, %v36
  %2430 = vrot.lane.b32.xlu0 %v37, 16
  %v2431 = vpop.permute.xlu0 %2430
  %v2432 = vsel %vm102, %v2431, %v37
  %2433 = vrot.lane.b32.xlu0 %v38, 16
  %v2434 = vpop.permute.xlu0 %2433
  %v2435 = vsel %vm102, %v2434, %v38
  %2436 = vrot.lane.b32.xlu0 %v39, 16
  %v2437 = vpop.permute.xlu0 %2436
  %v2438 = vsel %vm102, %v2437, %v39
  %2439 = vrot.lane.b32.xlu0 %v40, 16
  %v2440 = vpop.permute.xlu0 %2439
  %v2441 = vsel %vm102, %v2440, %v40
  %2442 = vrot.lane.b32.xlu0 %v41, 16
  %v2443 = vpop.permute.xlu0 %2442
  %v2444 = vsel %vm102, %v2443, %v41
  %2445 = vrot.lane.b32.xlu0 %v42, 16
  %v2446 = vpop.permute.xlu0 %2445
  %v2447 = vsel %vm102, %v2446, %v42
  %2448 = vrot.lane.b32.xlu0 %v43, 16
  %v2449 = vpop.permute.xlu0 %2448
  %v2450 = vsel %vm102, %v2449, %v43
  %2451 = vrot.lane.b32.xlu0 %v44, 16
  %v2452 = vpop.permute.xlu0 %2451
  %v2453 = vsel %vm102, %v2452, %v44
  %2454 = vrot.lane.b32.xlu0 %v45, 16
  %v2455 = vpop.permute.xlu0 %2454
  %v2456 = vsel %vm102, %v2455, %v45
  %2457 = vrot.lane.b32.xlu0 %v46, 16
  %v2458 = vpop.permute.xlu0 %2457
  %v2459 = vsel %vm102, %v2458, %v46
  %2460 = vrot.lane.b32.xlu0 %v47, 16
  %v2461 = vpop.permute.xlu0 %2460
  %v2462 = vsel %vm102, %v2461, %v47
  %2463 = vrot.lane.b32.xlu0 %v48, 16
  %v2464 = vpop.permute.xlu0 %2463
  %v2465 = vsel %vm102, %v2464, %v48
  %2466 = vrot.lane.b32.xlu0 %v49, 16
  %v2467 = vpop.permute.xlu0 %2466
  %v2468 = vsel %vm102, %v2467, %v49
  %2469 = vrot.lane.b32.xlu0 %v50, 16
  %v2470 = vpop.permute.xlu0 %2469
  %v2471 = vsel %vm102, %v2470, %v50
  %2472 = vrot.lane.b32.xlu0 %v51, 16
  %v2473 = vpop.permute.xlu0 %2472
  %v2474 = vsel %vm102, %v2473, %v51
  %2475 = vrot.lane.b32.xlu0 %v2429, 16
  %v2476 = vpop.permute.xlu0 %2475
  %2477 = vrot.lane.b32.xlu0 %v2432, 16
  %v2478 = vpop.permute.xlu0 %2477
  %2479 = vrot.lane.b32.xlu0 %v2435, 16
  %v2480 = vpop.permute.xlu0 %2479
  %2481 = vrot.lane.b32.xlu0 %v2438, 16
  %v2482 = vpop.permute.xlu0 %2481
  %2483 = vrot.lane.b32.xlu0 %v2441, 16
  %v2484 = vpop.permute.xlu0 %2483
  %2485 = vrot.lane.b32.xlu0 %v2444, 16
  %v2486 = vpop.permute.xlu0 %2485
  %2487 = vrot.lane.b32.xlu0 %v2447, 16
  %v2488 = vpop.permute.xlu0 %2487
  %2489 = vrot.lane.b32.xlu0 %v2450, 16
  %v2490 = vpop.permute.xlu0 %2489
  %2491 = vrot.lane.b32.xlu0 %v2453, 16
  %v2492 = vpop.permute.xlu0 %2491
  %2493 = vrot.lane.b32.xlu0 %v2456, 16
  %v2494 = vpop.permute.xlu0 %2493
  %2495 = vrot.lane.b32.xlu0 %v2459, 16
  %v2496 = vpop.permute.xlu0 %2495
  %2497 = vrot.lane.b32.xlu0 %v2462, 16
  %v2498 = vpop.permute.xlu0 %2497
  %2499 = vrot.lane.b32.xlu0 %v2465, 16
  %v2500 = vpop.permute.xlu0 %2499
  %2501 = vrot.lane.b32.xlu0 %v2468, 16
  %v2502 = vpop.permute.xlu0 %2501
  %2503 = vrot.lane.b32.xlu0 %v2471, 16
  %v2504 = vpop.permute.xlu0 %2503
  %2505 = vrot.lane.b32.xlu0 %v2474, 16
  %v2506 = vpop.permute.xlu0 %2505
  %v2507 = vsel %vm102, %v2476, %v36
  %v2508 = vsel %vm102, %v2478, %v37
  %v2509 = vsel %vm102, %v2480, %v38
  %v2510 = vsel %vm102, %v2482, %v39
  %v2511 = vsel %vm102, %v2484, %v40
  %v2512 = vsel %vm102, %v2486, %v41
  %v2513 = vsel %vm102, %v2488, %v42
  %v2514 = vsel %vm102, %v2490, %v43
  %v2515 = vsel %vm102, %v2492, %v44
  %v2516 = vsel %vm102, %v2494, %v45
  %v2517 = vsel %vm102, %v2496, %v46
  %v2518 = vsel %vm102, %v2498, %v47
  %v2519 = vsel %vm102, %v2500, %v48
  %v2520 = vsel %vm102, %v2502, %v49
  %v2521 = vsel %vm102, %v2504, %v50
  %v2522 = vsel %vm102, %v2506, %v51
  %v2523 = vsel %vm785, %v2507, inf
  %v2524 = vsel %vm785, %v2508, inf
  %v2525 = vsel %vm785, %v2509, inf
  %v2526 = vsel %vm785, %v2510, inf
  %v2527 = vsel %vm785, %v2511, inf
  %v2528 = vsel %vm785, %v2512, inf
  %v2529 = vsel %vm785, %v2513, inf
  %v2530 = vsel %vm785, %v2514, inf
  %v2531 = vsel %vm785, %v2515, inf
  %v2532 = vsel %vm785, %v2516, inf
  %v2533 = vsel %vm785, %v2517, inf
  %v2534 = vsel %vm785, %v2518, inf
  %v2535 = vsel %vm785, %v2519, inf
  %v2536 = vsel %vm785, %v2520, inf
  %v2537 = vsel %vm785, %v2521, inf
  %v2538 = vsel %vm785, %v2522, inf
  %2555 = vrot.lane.b32.xlu0 %v2523, 113
  %v2556 = vpop.permute.xlu0 %2555
  %2557 = vrot.lane.b32.xlu0 %v2524, 113
  %v2558 = vpop.permute.xlu0 %2557
  %2559 = vrot.lane.b32.xlu0 %v2525, 113
  %v2560 = vpop.permute.xlu0 %2559
  %2561 = vrot.lane.b32.xlu0 %v2526, 113
  %v2562 = vpop.permute.xlu0 %2561
  %2563 = vrot.lane.b32.xlu0 %v2527, 113
  %v2564 = vpop.permute.xlu0 %2563
  %2565 = vrot.lane.b32.xlu0 %v2528, 113
  %v2566 = vpop.permute.xlu0 %2565
  %2567 = vrot.lane.b32.xlu0 %v2529, 113
  %v2568 = vpop.permute.xlu0 %2567
  %2569 = vrot.lane.b32.xlu0 %v2530, 113
  %v2570 = vpop.permute.xlu0 %2569
  %2571 = vrot.lane.b32.xlu0 %v2531, 113
  %v2572 = vpop.permute.xlu0 %2571
  %2573 = vrot.lane.b32.xlu0 %v2532, 113
  %v2574 = vpop.permute.xlu0 %2573
  %2575 = vrot.lane.b32.xlu0 %v2533, 113
  %v2576 = vpop.permute.xlu0 %2575
  %2577 = vrot.lane.b32.xlu0 %v2534, 113
  %v2578 = vpop.permute.xlu0 %2577
  %2579 = vrot.lane.b32.xlu0 %v2535, 113
  %v2580 = vpop.permute.xlu0 %2579
  %2581 = vrot.lane.b32.xlu0 %v2536, 113
  %v2582 = vpop.permute.xlu0 %2581
  %2583 = vrot.lane.b32.xlu0 %v2537, 113
  %v2584 = vpop.permute.xlu0 %2583
  %2585 = vrot.lane.b32.xlu0 %v2538, 113
  %v2586 = vpop.permute.xlu0 %2585
  %v2603 = vmin.f32 %v36, %v2556
  %v2604 = vmin.f32 %v37, %v2558
  %v2605 = vmin.f32 %v38, %v2560
  %v2606 = vmin.f32 %v39, %v2562
  %v2607 = vmin.f32 %v40, %v2564
  %v2608 = vmin.f32 %v41, %v2566
  %v2609 = vmin.f32 %v42, %v2568
  %v2610 = vmin.f32 %v43, %v2570
  %v2611 = vmin.f32 %v44, %v2572
  %v2612 = vmin.f32 %v45, %v2574
  %v2613 = vmin.f32 %v46, %v2576
  %v2614 = vmin.f32 %v47, %v2578
  %v2615 = vmin.f32 %v48, %v2580
  %v2616 = vmin.f32 %v49, %v2582
  %v2617 = vmin.f32 %v50, %v2584
  %v2618 = vmin.f32 %v51, %v2586
  %v2619 = vsel %vm884, %v2507, inf
  %v2620 = vsel %vm884, %v2508, inf
  %v2621 = vsel %vm884, %v2509, inf
  %v2622 = vsel %vm884, %v2510, inf
  %v2623 = vsel %vm884, %v2511, inf
  %v2624 = vsel %vm884, %v2512, inf
  %v2625 = vsel %vm884, %v2513, inf
  %v2626 = vsel %vm884, %v2514, inf
  %v2627 = vsel %vm884, %v2515, inf
  %v2628 = vsel %vm884, %v2516, inf
  %v2629 = vsel %vm884, %v2517, inf
  %v2630 = vsel %vm884, %v2518, inf
  %v2631 = vsel %vm884, %v2519, inf
  %v2632 = vsel %vm884, %v2520, inf
  %v2633 = vsel %vm884, %v2521, inf
  %v2634 = vsel %vm884, %v2522, inf
  %2651 = vrot.lane.b32.xlu0 %v2619, 127
  %v2652 = vpop.permute.xlu0 %2651
  %2653 = vrot.lane.b32.xlu0 %v2620, 127
  %v2654 = vpop.permute.xlu0 %2653
  %2655 = vrot.lane.b32.xlu0 %v2621, 127
  %v2656 = vpop.permute.xlu0 %2655
  %2657 = vrot.lane.b32.xlu0 %v2622, 127
  %v2658 = vpop.permute.xlu0 %2657
  %2659 = vrot.lane.b32.xlu0 %v2623, 127
  %v2660 = vpop.permute.xlu0 %2659
  %2661 = vrot.lane.b32.xlu0 %v2624, 127
  %v2662 = vpop.permute.xlu0 %2661
  %2663 = vrot.lane.b32.xlu0 %v2625, 127
  %v2664 = vpop.permute.xlu0 %2663
  %2665 = vrot.lane.b32.xlu0 %v2626, 127
  %v2666 = vpop.permute.xlu0 %2665
  %2667 = vrot.lane.b32.xlu0 %v2627, 127
  %v2668 = vpop.permute.xlu0 %2667
  %2669 = vrot.lane.b32.xlu0 %v2628, 127
  %v2670 = vpop.permute.xlu0 %2669
  %2671 = vrot.lane.b32.xlu0 %v2629, 127
  %v2672 = vpop.permute.xlu0 %2671
  %2673 = vrot.lane.b32.xlu0 %v2630, 127
  %v2674 = vpop.permute.xlu0 %2673
  %2675 = vrot.lane.b32.xlu0 %v2631, 127
  %v2676 = vpop.permute.xlu0 %2675
  %2677 = vrot.lane.b32.xlu0 %v2632, 127
  %v2678 = vpop.permute.xlu0 %2677
  %2679 = vrot.lane.b32.xlu0 %v2633, 127
  %v2680 = vpop.permute.xlu0 %2679
  %2681 = vrot.lane.b32.xlu0 %v2634, 127
  %v2682 = vpop.permute.xlu0 %2681
  %v2699 = vmin.f32 %v2603, %v2652
  %v2700 = vmin.f32 %v2604, %v2654
  %v2701 = vmin.f32 %v2605, %v2656
  %v2702 = vmin.f32 %v2606, %v2658
  %v2703 = vmin.f32 %v2607, %v2660
  %v2704 = vmin.f32 %v2608, %v2662
  %v2705 = vmin.f32 %v2609, %v2664
  %v2706 = vmin.f32 %v2610, %v2666
  %v2707 = vmin.f32 %v2611, %v2668
  %v2708 = vmin.f32 %v2612, %v2670
  %v2709 = vmin.f32 %v2613, %v2672
  %v2710 = vmin.f32 %v2614, %v2674
  %v2711 = vmin.f32 %v2615, %v2676
  %v2712 = vmin.f32 %v2616, %v2678
  %v2713 = vmin.f32 %v2617, %v2680
  %v2714 = vmin.f32 %v2618, %v2682
  %v2715 = vsel %vm983, %v2507, inf
  %v2716 = vsel %vm983, %v2508, inf
  %v2717 = vsel %vm983, %v2509, inf
  %v2718 = vsel %vm983, %v2510, inf
  %v2719 = vsel %vm983, %v2511, inf
  %v2720 = vsel %vm983, %v2512, inf
  %v2721 = vsel %vm983, %v2513, inf
  %v2722 = vsel %vm983, %v2514, inf
  %v2723 = vsel %vm983, %v2515, inf
  %v2724 = vsel %vm983, %v2516, inf
  %v2725 = vsel %vm983, %v2517, inf
  %v2726 = vsel %vm983, %v2518, inf
  %v2727 = vsel %vm983, %v2519, inf
  %v2728 = vsel %vm983, %v2520, inf
  %v2729 = vsel %vm983, %v2521, inf
  %v2730 = vsel %vm983, %v2522, inf
  %2747 = vrot.lane.b32.xlu0 %v2715, 114
  %v2748 = vpop.permute.xlu0 %2747
  %2749 = vrot.lane.b32.xlu0 %v2716, 114
  %v2750 = vpop.permute.xlu0 %2749
  %2751 = vrot.lane.b32.xlu0 %v2717, 114
  %v2752 = vpop.permute.xlu0 %2751
  %2753 = vrot.lane.b32.xlu0 %v2718, 114
  %v2754 = vpop.permute.xlu0 %2753
  %2755 = vrot.lane.b32.xlu0 %v2719, 114
  %v2756 = vpop.permute.xlu0 %2755
  %2757 = vrot.lane.b32.xlu0 %v2720, 114
  %v2758 = vpop.permute.xlu0 %2757
  %2759 = vrot.lane.b32.xlu0 %v2721, 114
  %v2760 = vpop.permute.xlu0 %2759
  %2761 = vrot.lane.b32.xlu0 %v2722, 114
  %v2762 = vpop.permute.xlu0 %2761
  %2763 = vrot.lane.b32.xlu0 %v2723, 114
  %v2764 = vpop.permute.xlu0 %2763
  %2765 = vrot.lane.b32.xlu0 %v2724, 114
  %v2766 = vpop.permute.xlu0 %2765
  %2767 = vrot.lane.b32.xlu0 %v2725, 114
  %v2768 = vpop.permute.xlu0 %2767
  %2769 = vrot.lane.b32.xlu0 %v2726, 114
  %v2770 = vpop.permute.xlu0 %2769
  %2771 = vrot.lane.b32.xlu0 %v2727, 114
  %v2772 = vpop.permute.xlu0 %2771
  %2773 = vrot.lane.b32.xlu0 %v2728, 114
  %v2774 = vpop.permute.xlu0 %2773
  %2775 = vrot.lane.b32.xlu0 %v2729, 114
  %v2776 = vpop.permute.xlu0 %2775
  %2777 = vrot.lane.b32.xlu0 %v2730, 114
  %v2778 = vpop.permute.xlu0 %2777
  %v2795 = vmin.f32 %v2699, %v2748
  %v2796 = vmin.f32 %v2700, %v2750
  %v2797 = vmin.f32 %v2701, %v2752
  %v2798 = vmin.f32 %v2702, %v2754
  %v2799 = vmin.f32 %v2703, %v2756
  %v2800 = vmin.f32 %v2704, %v2758
  %v2801 = vmin.f32 %v2705, %v2760
  %v2802 = vmin.f32 %v2706, %v2762
  %v2803 = vmin.f32 %v2707, %v2764
  %v2804 = vmin.f32 %v2708, %v2766
  %v2805 = vmin.f32 %v2709, %v2768
  %v2806 = vmin.f32 %v2710, %v2770
  %v2807 = vmin.f32 %v2711, %v2772
  %v2808 = vmin.f32 %v2712, %v2774
  %v2809 = vmin.f32 %v2713, %v2776
  %v2810 = vmin.f32 %v2714, %v2778
  %v2811 = vsel %vm1082, %v2507, inf
  %v2812 = vsel %vm1082, %v2508, inf
  %v2813 = vsel %vm1082, %v2509, inf
  %v2814 = vsel %vm1082, %v2510, inf
  %v2815 = vsel %vm1082, %v2511, inf
  %v2816 = vsel %vm1082, %v2512, inf
  %v2817 = vsel %vm1082, %v2513, inf
  %v2818 = vsel %vm1082, %v2514, inf
  %v2819 = vsel %vm1082, %v2515, inf
  %v2820 = vsel %vm1082, %v2516, inf
  %v2821 = vsel %vm1082, %v2517, inf
  %v2822 = vsel %vm1082, %v2518, inf
  %v2823 = vsel %vm1082, %v2519, inf
  %v2824 = vsel %vm1082, %v2520, inf
  %v2825 = vsel %vm1082, %v2521, inf
  %v2826 = vsel %vm1082, %v2522, inf
  %2843 = vrot.lane.b32.xlu0 %v2811, 126
  %v2844 = vpop.permute.xlu0 %2843
  %2845 = vrot.lane.b32.xlu0 %v2812, 126
  %v2846 = vpop.permute.xlu0 %2845
  %2847 = vrot.lane.b32.xlu0 %v2813, 126
  %v2848 = vpop.permute.xlu0 %2847
  %2849 = vrot.lane.b32.xlu0 %v2814, 126
  %v2850 = vpop.permute.xlu0 %2849
  %2851 = vrot.lane.b32.xlu0 %v2815, 126
  %v2852 = vpop.permute.xlu0 %2851
  %2853 = vrot.lane.b32.xlu0 %v2816, 126
  %v2854 = vpop.permute.xlu0 %2853
  %2855 = vrot.lane.b32.xlu0 %v2817, 126
  %v2856 = vpop.permute.xlu0 %2855
  %2857 = vrot.lane.b32.xlu0 %v2818, 126
  %v2858 = vpop.permute.xlu0 %2857
  %2859 = vrot.lane.b32.xlu0 %v2819, 126
  %v2860 = vpop.permute.xlu0 %2859
  %2861 = vrot.lane.b32.xlu0 %v2820, 126
  %v2862 = vpop.permute.xlu0 %2861
  %2863 = vrot.lane.b32.xlu0 %v2821, 126
  %v2864 = vpop.permute.xlu0 %2863
  %2865 = vrot.lane.b32.xlu0 %v2822, 126
  %v2866 = vpop.permute.xlu0 %2865
  %2867 = vrot.lane.b32.xlu0 %v2823, 126
  %v2868 = vpop.permute.xlu0 %2867
  %2869 = vrot.lane.b32.xlu0 %v2824, 126
  %v2870 = vpop.permute.xlu0 %2869
  %2871 = vrot.lane.b32.xlu0 %v2825, 126
  %v2872 = vpop.permute.xlu0 %2871
  %2873 = vrot.lane.b32.xlu0 %v2826, 126
  %v2874 = vpop.permute.xlu0 %2873
  %v2891 = vmin.f32 %v2795, %v2844
  %v2892 = vmin.f32 %v2796, %v2846
  %v2893 = vmin.f32 %v2797, %v2848
  %v2894 = vmin.f32 %v2798, %v2850
  %v2895 = vmin.f32 %v2799, %v2852
  %v2896 = vmin.f32 %v2800, %v2854
  %v2897 = vmin.f32 %v2801, %v2856
  %v2898 = vmin.f32 %v2802, %v2858
  %v2899 = vmin.f32 %v2803, %v2860
  %v2900 = vmin.f32 %v2804, %v2862
  %v2901 = vmin.f32 %v2805, %v2864
  %v2902 = vmin.f32 %v2806, %v2866
  %v2903 = vmin.f32 %v2807, %v2868
  %v2904 = vmin.f32 %v2808, %v2870
  %v2905 = vmin.f32 %v2809, %v2872
  %v2906 = vmin.f32 %v2810, %v2874
  %v2907 = vrot.slane %v2891, 7
  %v2908 = vrot.slane %v2892, 7
  %v2909 = vrot.slane %v2893, 7
  %v2910 = vrot.slane %v2894, 7
  %v2911 = vrot.slane %v2895, 7
  %v2912 = vrot.slane %v2896, 7
  %v2913 = vrot.slane %v2897, 7
  %v2914 = vrot.slane %v2898, 7
  %v2915 = vrot.slane %v2899, 7
  %v2916 = vrot.slane %v2900, 7
  %v2917 = vrot.slane %v2901, 7
  %v2918 = vrot.slane %v2902, 7
  %v2919 = vrot.slane %v2903, 7
  %v2920 = vrot.slane %v2904, 7
  %v2921 = vrot.slane %v2905, 7
  %v2922 = vrot.slane %v2906, 7
  %v2923 = vsel %vm141, %v2921, %v2922
  %v2924 = vsel %vm141, %v2920, %v2921
  %v2925 = vsel %vm141, %v2919, %v2920
  %v2926 = vsel %vm141, %v2918, %v2919
  %v2927 = vsel %vm141, %v2917, %v2918
  %v2928 = vsel %vm141, %v2916, %v2917
  %v2929 = vsel %vm141, %v2915, %v2916
  %v2930 = vsel %vm141, %v2914, %v2915
  %v2931 = vsel %vm141, %v2913, %v2914
  %v2932 = vsel %vm141, %v2912, %v2913
  %v2933 = vsel %vm141, %v2911, %v2912
  %v2934 = vsel %vm141, %v2910, %v2911
  %v2935 = vsel %vm141, %v2909, %v2910
  %v2936 = vsel %vm141, %v2908, %v2909
  %v2937 = vsel %vm141, %v2907, %v2908
  %v2938 = vsel %vm141, %v2922, %v2907
  %v2939 = vsel %vm1275, %v2938, inf
  %v2940 = vsel %vm1276, %v2937, inf
  %v2941 = vsel %vm1277, %v2936, inf
  %v2942 = vsel %vm1278, %v2935, inf
  %v2943 = vsel %vm1279, %v2934, inf
  %v2944 = vsel %vm1280, %v2933, inf
  %v2945 = vsel %vm1281, %v2932, inf
  %v2946 = vsel %vm1282, %v2931, inf
  %v2947 = vsel %vm1283, %v2930, inf
  %v2948 = vsel %vm1284, %v2929, inf
  %v2949 = vsel %vm1285, %v2928, inf
  %v2950 = vsel %vm1286, %v2927, inf
  %v2951 = vsel %vm1287, %v2926, inf
  %v2952 = vsel %vm1288, %v2925, inf
  %v2953 = vsel %vm1289, %v2924, inf
  %v2954 = vsel %vm1290, %v2923, inf
  %v2955 = vmin.f32 %v2891, %v2939
  %v2956 = vmin.f32 %v2892, %v2940
  %v2957 = vmin.f32 %v2893, %v2941
  %v2958 = vmin.f32 %v2894, %v2942
  %v2959 = vmin.f32 %v2895, %v2943
  %v2960 = vmin.f32 %v2896, %v2944
  %v2961 = vmin.f32 %v2897, %v2945
  %v2962 = vmin.f32 %v2898, %v2946
  %v2963 = vmin.f32 %v2899, %v2947
  %v2964 = vmin.f32 %v2900, %v2948
  %v2965 = vmin.f32 %v2901, %v2949
  %v2966 = vmin.f32 %v2902, %v2950
  %v2967 = vmin.f32 %v2903, %v2951
  %v2968 = vmin.f32 %v2904, %v2952
  %v2969 = vmin.f32 %v2905, %v2953
  %v2970 = vmin.f32 %v2906, %v2954
  %v2971 = vrot.slane %v2891, 1
  %v2972 = vrot.slane %v2892, 1
  %v2973 = vrot.slane %v2893, 1
  %v2974 = vrot.slane %v2894, 1
  %v2975 = vrot.slane %v2895, 1
  %v2976 = vrot.slane %v2896, 1
  %v2977 = vrot.slane %v2897, 1
  %v2978 = vrot.slane %v2898, 1
  %v2979 = vrot.slane %v2899, 1
  %v2980 = vrot.slane %v2900, 1
  %v2981 = vrot.slane %v2901, 1
  %v2982 = vrot.slane %v2902, 1
  %v2983 = vrot.slane %v2903, 1
  %v2984 = vrot.slane %v2904, 1
  %v2985 = vrot.slane %v2905, 1
  %v2986 = vrot.slane %v2906, 1
  %v2987 = vsel %vm254, %v2985, %v2986
  %v2988 = vsel %vm254, %v2984, %v2985
  %v2989 = vsel %vm254, %v2983, %v2984
  %v2990 = vsel %vm254, %v2982, %v2983
  %v2991 = vsel %vm254, %v2981, %v2982
  %v2992 = vsel %vm254, %v2980, %v2981
  %v2993 = vsel %vm254, %v2979, %v2980
  %v2994 = vsel %vm254, %v2978, %v2979
  %v2995 = vsel %vm254, %v2977, %v2978
  %v2996 = vsel %vm254, %v2976, %v2977
  %v2997 = vsel %vm254, %v2975, %v2976
  %v2998 = vsel %vm254, %v2974, %v2975
  %v2999 = vsel %vm254, %v2973, %v2974
  %v3000 = vsel %vm254, %v2972, %v2973
  %v3001 = vsel %vm254, %v2971, %v2972
  %v3002 = vsel %vm254, %v2986, %v2971
  %v3003 = vsel %vm1419, %v3001, inf
  %v3004 = vsel %vm1420, %v3000, inf
  %v3005 = vsel %vm1421, %v2999, inf
  %v3006 = vsel %vm1422, %v2998, inf
  %v3007 = vsel %vm1423, %v2997, inf
  %v3008 = vsel %vm1424, %v2996, inf
  %v3009 = vsel %vm1425, %v2995, inf
  %v3010 = vsel %vm1426, %v2994, inf
  %v3011 = vsel %vm1427, %v2993, inf
  %v3012 = vsel %vm1428, %v2992, inf
  %v3013 = vsel %vm1429, %v2991, inf
  %v3014 = vsel %vm1430, %v2990, inf
  %v3015 = vsel %vm1431, %v2989, inf
  %v3016 = vsel %vm1432, %v2988, inf
  %v3017 = vsel %vm1433, %v2987, inf
  %v3018 = vsel %vm1434, %v3002, inf
  %v3019 = vmin.f32 %v2955, %v3003
  %v3020 = vmin.f32 %v2956, %v3004
  %v3021 = vmin.f32 %v2957, %v3005
  %v3022 = vmin.f32 %v2958, %v3006
  %v3023 = vmin.f32 %v2959, %v3007
  %v3024 = vmin.f32 %v2960, %v3008
  %v3025 = vmin.f32 %v2961, %v3009
  %v3026 = vmin.f32 %v2962, %v3010
  %v3027 = vmin.f32 %v2963, %v3011
  %v3028 = vmin.f32 %v2964, %v3012
  %v3029 = vmin.f32 %v2965, %v3013
  %v3030 = vmin.f32 %v2966, %v3014
  %v3031 = vmin.f32 %v2967, %v3015
  %v3032 = vmin.f32 %v2968, %v3016
  %v3033 = vmin.f32 %v2969, %v3017
  %v3034 = vmin.f32 %v2970, %v3018
  %v3035 = vrot.slane %v2891, 6
  %v3036 = vrot.slane %v2892, 6
  %v3037 = vrot.slane %v2893, 6
  %v3038 = vrot.slane %v2894, 6
  %v3039 = vrot.slane %v2895, 6
  %v3040 = vrot.slane %v2896, 6
  %v3041 = vrot.slane %v2897, 6
  %v3042 = vrot.slane %v2898, 6
  %v3043 = vrot.slane %v2899, 6
  %v3044 = vrot.slane %v2900, 6
  %v3045 = vrot.slane %v2901, 6
  %v3046 = vrot.slane %v2902, 6
  %v3047 = vrot.slane %v2903, 6
  %v3048 = vrot.slane %v2904, 6
  %v3049 = vrot.slane %v2905, 6
  %v3050 = vrot.slane %v2906, 6
  %v3051 = vsel %vm381, %v3049, %v3050
  %v3052 = vsel %vm381, %v3048, %v3049
  %v3053 = vsel %vm381, %v3047, %v3048
  %v3054 = vsel %vm381, %v3046, %v3047
  %v3055 = vsel %vm381, %v3045, %v3046
  %v3056 = vsel %vm381, %v3044, %v3045
  %v3057 = vsel %vm381, %v3043, %v3044
  %v3058 = vsel %vm381, %v3042, %v3043
  %v3059 = vsel %vm381, %v3041, %v3042
  %v3060 = vsel %vm381, %v3040, %v3041
  %v3061 = vsel %vm381, %v3039, %v3040
  %v3062 = vsel %vm381, %v3038, %v3039
  %v3063 = vsel %vm381, %v3037, %v3038
  %v3064 = vsel %vm381, %v3036, %v3037
  %v3065 = vsel %vm381, %v3035, %v3036
  %v3066 = vsel %vm381, %v3050, %v3035
  %v3067 = vsel %vm1563, %v3066, inf
  %v3068 = vsel %vm1564, %v3065, inf
  %v3069 = vsel %vm1565, %v3064, inf
  %v3070 = vsel %vm1566, %v3063, inf
  %v3071 = vsel %vm1567, %v3062, inf
  %v3072 = vsel %vm1568, %v3061, inf
  %v3073 = vsel %vm1569, %v3060, inf
  %v3074 = vsel %vm1570, %v3059, inf
  %v3075 = vsel %vm1571, %v3058, inf
  %v3076 = vsel %vm1572, %v3057, inf
  %v3077 = vsel %vm1573, %v3056, inf
  %v3078 = vsel %vm1574, %v3055, inf
  %v3079 = vsel %vm1575, %v3054, inf
  %v3080 = vsel %vm1576, %v3053, inf
  %v3081 = vsel %vm1577, %v3052, inf
  %v3082 = vsel %vm1578, %v3051, inf
  %v3083 = vmin.f32 %v3019, %v3067
  %v3084 = vmin.f32 %v3020, %v3068
  %v3085 = vmin.f32 %v3021, %v3069
  %v3086 = vmin.f32 %v3022, %v3070
  %v3087 = vmin.f32 %v3023, %v3071
  %v3088 = vmin.f32 %v3024, %v3072
  %v3089 = vmin.f32 %v3025, %v3073
  %v3090 = vmin.f32 %v3026, %v3074
  %v3091 = vmin.f32 %v3027, %v3075
  %v3092 = vmin.f32 %v3028, %v3076
  %v3093 = vmin.f32 %v3029, %v3077
  %v3094 = vmin.f32 %v3030, %v3078
  %v3095 = vmin.f32 %v3031, %v3079
  %v3096 = vmin.f32 %v3032, %v3080
  %v3097 = vmin.f32 %v3033, %v3081
  %v3098 = vmin.f32 %v3034, %v3082
  %v3099 = vrot.slane %v2891, 2
  %v3100 = vrot.slane %v2892, 2
  %v3101 = vrot.slane %v2893, 2
  %v3102 = vrot.slane %v2894, 2
  %v3103 = vrot.slane %v2895, 2
  %v3104 = vrot.slane %v2896, 2
  %v3105 = vrot.slane %v2897, 2
  %v3106 = vrot.slane %v2898, 2
  %v3107 = vrot.slane %v2899, 2
  %v3108 = vrot.slane %v2900, 2
  %v3109 = vrot.slane %v2901, 2
  %v3110 = vrot.slane %v2902, 2
  %v3111 = vrot.slane %v2903, 2
  %v3112 = vrot.slane %v2904, 2
  %v3113 = vrot.slane %v2905, 2
  %v3114 = vrot.slane %v2906, 2
  %v3115 = vsel %vm494, %v3113, %v3114
  %v3116 = vsel %vm494, %v3112, %v3113
  %v3117 = vsel %vm494, %v3111, %v3112
  %v3118 = vsel %vm494, %v3110, %v3111
  %v3119 = vsel %vm494, %v3109, %v3110
  %v3120 = vsel %vm494, %v3108, %v3109
  %v3121 = vsel %vm494, %v3107, %v3108
  %v3122 = vsel %vm494, %v3106, %v3107
  %v3123 = vsel %vm494, %v3105, %v3106
  %v3124 = vsel %vm494, %v3104, %v3105
  %v3125 = vsel %vm494, %v3103, %v3104
  %v3126 = vsel %vm494, %v3102, %v3103
  %v3127 = vsel %vm494, %v3101, %v3102
  %v3128 = vsel %vm494, %v3100, %v3101
  %v3129 = vsel %vm494, %v3099, %v3100
  %v3130 = vsel %vm494, %v3114, %v3099
  %v3131 = vsel %vm1707, %v3129, inf
  %v3132 = vsel %vm1708, %v3128, inf
  %v3133 = vsel %vm1709, %v3127, inf
  %v3134 = vsel %vm1710, %v3126, inf
  %v3135 = vsel %vm1711, %v3125, inf
  %v3136 = vsel %vm1712, %v3124, inf
  %v3137 = vsel %vm1713, %v3123, inf
  %v3138 = vsel %vm1714, %v3122, inf
  %v3139 = vsel %vm1715, %v3121, inf
  %v3140 = vsel %vm1716, %v3120, inf
  %v3141 = vsel %vm1717, %v3119, inf
  %v3142 = vsel %vm1718, %v3118, inf
  %v3143 = vsel %vm1719, %v3117, inf
  %v3144 = vsel %vm1720, %v3116, inf
  %v3145 = vsel %vm1721, %v3115, inf
  %v3146 = vsel %vm1722, %v3130, inf
  %v3147 = vmin.f32 %v3083, %v3131
  %v3148 = vmin.f32 %v3084, %v3132
  %v3149 = vmin.f32 %v3085, %v3133
  %v3150 = vmin.f32 %v3086, %v3134
  %v3151 = vmin.f32 %v3087, %v3135
  %v3152 = vmin.f32 %v3088, %v3136
  %v3153 = vmin.f32 %v3089, %v3137
  %v3154 = vmin.f32 %v3090, %v3138
  %v3155 = vmin.f32 %v3091, %v3139
  %v3156 = vmin.f32 %v3092, %v3140
  %v3157 = vmin.f32 %v3093, %v3141
  %v3158 = vmin.f32 %v3094, %v3142
  %v3159 = vmin.f32 %v3095, %v3143
  %v3160 = vmin.f32 %v3096, %v3144
  %v3161 = vmin.f32 %v3097, %v3145
  %v3162 = vmin.f32 %v3098, %v3146
  %v3163 = vsel %vm1819, %v3161, inf
  %v3164 = vsel %vm1820, %v3162, inf
  %v3165 = vsel %vm1821, %v3147, inf
  %v3166 = vsel %vm1822, %v3148, inf
  %v3167 = vsel %vm1823, %v3149, inf
  %v3168 = vsel %vm1824, %v3150, inf
  %v3169 = vsel %vm1825, %v3151, inf
  %v3170 = vsel %vm1826, %v3152, inf
  %v3171 = vsel %vm1827, %v3153, inf
  %v3172 = vsel %vm1828, %v3154, inf
  %v3173 = vsel %vm1829, %v3155, inf
  %v3174 = vsel %vm1830, %v3156, inf
  %v3175 = vsel %vm1831, %v3157, inf
  %v3176 = vsel %vm1832, %v3158, inf
  %v3177 = vsel %vm1833, %v3159, inf
  %v3178 = vsel %vm1834, %v3160, inf
  %v3179 = vmin.f32 %v3147, %v3163
  %v3180 = vmin.f32 %v3148, %v3164
  %v3181 = vmin.f32 %v3149, %v3165
  %v3182 = vmin.f32 %v3150, %v3166
  %v3183 = vmin.f32 %v3151, %v3167
  %v3184 = vmin.f32 %v3152, %v3168
  %v3185 = vmin.f32 %v3153, %v3169
  %v3186 = vmin.f32 %v3154, %v3170
  %v3187 = vmin.f32 %v3155, %v3171
  %v3188 = vmin.f32 %v3156, %v3172
  %v3189 = vmin.f32 %v3157, %v3173
  %v3190 = vmin.f32 %v3158, %v3174
  %v3191 = vmin.f32 %v3159, %v3175
  %v3192 = vmin.f32 %v3160, %v3176
  %v3193 = vmin.f32 %v3161, %v3177
  %v3194 = vmin.f32 %v3162, %v3178
  %v3195 = vsel %vm1931, %v3149, inf
  %v3196 = vsel %vm1932, %v3150, inf
  %v3197 = vsel %vm1933, %v3151, inf
  %v3198 = vsel %vm1934, %v3152, inf
  %v3199 = vsel %vm1935, %v3153, inf
  %v3200 = vsel %vm1936, %v3154, inf
  %v3201 = vsel %vm1937, %v3155, inf
  %v3202 = vsel %vm1938, %v3156, inf
  %v3203 = vsel %vm1939, %v3157, inf
  %v3204 = vsel %vm1940, %v3158, inf
  %v3205 = vsel %vm1941, %v3159, inf
  %v3206 = vsel %vm1942, %v3160, inf
  %v3207 = vsel %vm1943, %v3161, inf
  %v3208 = vsel %vm1944, %v3162, inf
  %v3209 = vsel %vm1945, %v3147, inf
  %v3210 = vsel %vm1946, %v3148, inf
  %v3211 = vmin.f32 %v3179, %v3195
  %v3212 = vmin.f32 %v3180, %v3196
  %v3213 = vmin.f32 %v3181, %v3197
  %v3214 = vmin.f32 %v3182, %v3198
  %v3215 = vmin.f32 %v3183, %v3199
  %v3216 = vmin.f32 %v3184, %v3200
  %v3217 = vmin.f32 %v3185, %v3201
  %v3218 = vmin.f32 %v3186, %v3202
  %v3219 = vmin.f32 %v3187, %v3203
  %v3220 = vmin.f32 %v3188, %v3204
  %v3221 = vmin.f32 %v3189, %v3205
  %v3222 = vmin.f32 %v3190, %v3206
  %v3223 = vmin.f32 %v3191, %v3207
  %v3224 = vmin.f32 %v3192, %v3208
  %v3225 = vmin.f32 %v3193, %v3209
  %v3226 = vmin.f32 %v3194, %v3210
  %v3227 = vsel %vm2043, %v3159, inf
  %v3228 = vsel %vm2044, %v3160, inf
  %v3229 = vsel %vm2045, %v3161, inf
  %v3230 = vsel %vm2046, %v3162, inf
  %v3231 = vsel %vm2047, %v3147, inf
  %v3232 = vsel %vm2048, %v3148, inf
  %v3233 = vsel %vm2049, %v3149, inf
  %v3234 = vsel %vm2050, %v3150, inf
  %v3235 = vsel %vm2051, %v3151, inf
  %v3236 = vsel %vm2052, %v3152, inf
  %v3237 = vsel %vm2053, %v3153, inf
  %v3238 = vsel %vm2054, %v3154, inf
  %v3239 = vsel %vm2055, %v3155, inf
  %v3240 = vsel %vm2056, %v3156, inf
  %v3241 = vsel %vm2057, %v3157, inf
  %v3242 = vsel %vm2058, %v3158, inf
  %v3243 = vmin.f32 %v3211, %v3227
  %v3244 = vmin.f32 %v3212, %v3228
  %v3245 = vmin.f32 %v3213, %v3229
  %v3246 = vmin.f32 %v3214, %v3230
  %v3247 = vmin.f32 %v3215, %v3231
  %v3248 = vmin.f32 %v3216, %v3232
  %v3249 = vmin.f32 %v3217, %v3233
  %v3250 = vmin.f32 %v3218, %v3234
  %v3251 = vmin.f32 %v3219, %v3235
  %v3252 = vmin.f32 %v3220, %v3236
  %v3253 = vmin.f32 %v3221, %v3237
  %v3254 = vmin.f32 %v3222, %v3238
  %v3255 = vmin.f32 %v3223, %v3239
  %v3256 = vmin.f32 %v3224, %v3240
  %v3257 = vmin.f32 %v3225, %v3241
  %v3258 = vmin.f32 %v3226, %v3242
  %v3259 = vsel %vm2155, %v3151, inf
  %v3260 = vsel %vm2156, %v3152, inf
  %v3261 = vsel %vm2157, %v3153, inf
  %v3262 = vsel %vm2158, %v3154, inf
  %v3263 = vsel %vm2159, %v3155, inf
  %v3264 = vsel %vm2160, %v3156, inf
  %v3265 = vsel %vm2161, %v3157, inf
  %v3266 = vsel %vm2162, %v3158, inf
  %v3267 = vsel %vm2163, %v3159, inf
  %v3268 = vsel %vm2164, %v3160, inf
  %v3269 = vsel %vm2165, %v3161, inf
  %v3270 = vsel %vm2166, %v3162, inf
  %v3271 = vsel %vm2167, %v3147, inf
  %v3272 = vsel %vm2168, %v3148, inf
  %v3273 = vsel %vm2169, %v3149, inf
  %v3274 = vsel %vm2170, %v3150, inf
  %v3275 = vmin.f32 %v3243, %v3259
  %v3276 = vmin.f32 %v3244, %v3260
  %v3277 = vmin.f32 %v3245, %v3261
  %v3278 = vmin.f32 %v3246, %v3262
  %v3279 = vmin.f32 %v3247, %v3263
  %v3280 = vmin.f32 %v3248, %v3264
  %v3281 = vmin.f32 %v3249, %v3265
  %v3282 = vmin.f32 %v3250, %v3266
  %v3283 = vmin.f32 %v3251, %v3267
  %v3284 = vmin.f32 %v3252, %v3268
  %v3285 = vmin.f32 %v3253, %v3269
  %v3286 = vmin.f32 %v3254, %v3270
  %v3287 = vmin.f32 %v3255, %v3271
  %v3288 = vmin.f32 %v3256, %v3272
  %v3289 = vmin.f32 %v3257, %v3273
  %v3290 = vmin.f32 %v3258, %v3274
  %v3291 = vsel %vm2267, %v3157, inf
  %v3292 = vsel %vm2268, %v3158, inf
  %v3293 = vsel %vm2269, %v3159, inf
  %v3294 = vsel %vm2270, %v3160, inf
  %v3295 = vsel %vm2271, %v3161, inf
  %v3296 = vsel %vm2272, %v3162, inf
  %v3297 = vsel %vm2273, %v3147, inf
  %v3298 = vsel %vm2274, %v3148, inf
  %v3299 = vsel %vm2275, %v3149, inf
  %v3300 = vsel %vm2276, %v3150, inf
  %v3301 = vsel %vm2277, %v3151, inf
  %v3302 = vsel %vm2278, %v3152, inf
  %v3303 = vsel %vm2279, %v3153, inf
  %v3304 = vsel %vm2280, %v3154, inf
  %v3305 = vsel %vm2281, %v3155, inf
  %v3306 = vsel %vm2282, %v3156, inf
  %v3307 = vmin.f32 %v3275, %v3291
  %v3308 = vmin.f32 %v3276, %v3292
  %v3309 = vmin.f32 %v3277, %v3293
  %v3310 = vmin.f32 %v3278, %v3294
  %v3311 = vmin.f32 %v3279, %v3295
  %v3312 = vmin.f32 %v3280, %v3296
  %v3313 = vmin.f32 %v3281, %v3297
  %v3314 = vmin.f32 %v3282, %v3298
  %v3315 = vmin.f32 %v3283, %v3299
  %v3316 = vmin.f32 %v3284, %v3300
  %v3317 = vmin.f32 %v3285, %v3301
  %v3318 = vmin.f32 %v3286, %v3302
  %v3319 = vmin.f32 %v3287, %v3303
  %v3320 = vmin.f32 %v3288, %v3304
  %v3321 = vmin.f32 %v3289, %v3305
  %v3322 = vmin.f32 %v3290, %v3306
  %v3323 = vsel %vm2379, %v3153, inf
  %v3324 = vsel %vm2380, %v3154, inf
  %v3325 = vsel %vm2381, %v3155, inf
  %v3326 = vsel %vm2382, %v3156, inf
  %v3327 = vsel %vm2383, %v3157, inf
  %v3328 = vsel %vm2384, %v3158, inf
  %v3329 = vsel %vm2385, %v3159, inf
  %v3330 = vsel %vm2386, %v3160, inf
  %v3331 = vsel %vm2387, %v3161, inf
  %v3332 = vsel %vm2388, %v3162, inf
  %v3333 = vsel %vm2389, %v3147, inf
  %v3334 = vsel %vm2390, %v3148, inf
  %v3335 = vsel %vm2391, %v3149, inf
  %v3336 = vsel %vm2392, %v3150, inf
  %v3337 = vsel %vm2393, %v3151, inf
  %v3338 = vsel %vm2394, %v3152, inf
  %v3339 = vmin.f32 %v3307, %v3323
  %v3340 = vmin.f32 %v3308, %v3324
  %v3341 = vmin.f32 %v3309, %v3325
  %v3342 = vmin.f32 %v3310, %v3326
  %v3343 = vmin.f32 %v3311, %v3327
  %v3344 = vmin.f32 %v3312, %v3328
  %v3345 = vmin.f32 %v3313, %v3329
  %v3346 = vmin.f32 %v3314, %v3330
  %v3347 = vmin.f32 %v3315, %v3331
  %v3348 = vmin.f32 %v3316, %v3332
  %v3349 = vmin.f32 %v3317, %v3333
  %v3350 = vmin.f32 %v3318, %v3334
  %v3351 = vmin.f32 %v3319, %v3335
  %v3352 = vmin.f32 %v3320, %v3336
  %v3353 = vmin.f32 %v3321, %v3337
  %v3354 = vmin.f32 %v3322, %v3338
  %v3355 = vsub.f32 %v2411, %v3339
  %v3356 = vsub.f32 %v2412, %v3340
  %v3357 = vsub.f32 %v2413, %v3341
  %v3358 = vsub.f32 %v2414, %v3342
  %v3359 = vsub.f32 %v2415, %v3343
  %v3360 = vsub.f32 %v2416, %v3344
  %v3361 = vsub.f32 %v2417, %v3345
  %v3362 = vsub.f32 %v2418, %v3346
  %v3363 = vsub.f32 %v2419, %v3347
  %v3364 = vsub.f32 %v2420, %v3348
  %v3365 = vsub.f32 %v2421, %v3349
  %v3366 = vsub.f32 %v2422, %v3350
  %v3367 = vsub.f32 %v2423, %v3351
  %v3368 = vsub.f32 %v2424, %v3352
  %v3369 = vsub.f32 %v2425, %v3353
  %v3370 = vsub.f32 %v2426, %v3354
  %vm3371 = vcmp.eq.s32.totalorder %v68, 0
  %vm3372 = vcmp.eq.s32.totalorder %v69, 0
  %vm3373 = vcmp.eq.s32.totalorder %v70, 0
  %vm3374 = vcmp.eq.s32.totalorder %v71, 0
  %vm3375 = vcmp.eq.s32.totalorder %v72, 0
  %vm3376 = vcmp.eq.s32.totalorder %v73, 0
  %vm3377 = vcmp.eq.s32.totalorder %v74, 0
  %vm3378 = vcmp.eq.s32.totalorder %v75, 0
  %vm3379 = vcmp.eq.s32.totalorder %v76, 0
  %vm3380 = vcmp.eq.s32.totalorder %v77, 0
  %vm3381 = vcmp.eq.s32.totalorder %v78, 0
  %vm3382 = vcmp.eq.s32.totalorder %v79, 0
  %vm3383 = vcmp.eq.s32.totalorder %v80, 0
  %vm3384 = vcmp.eq.s32.totalorder %v81, 0
  %vm3385 = vcmp.eq.s32.totalorder %v82, 0
  %vm3386 = vcmp.eq.s32.totalorder %v83, 0
  %v3387 = vmul.f32 %v3355, %v3355
  %v3388 = vmul.f32 %v3356, %v3356
  %v3389 = vmul.f32 %v3357, %v3357
  %v3390 = vmul.f32 %v3358, %v3358
  %v3391 = vmul.f32 %v3359, %v3359
  %v3392 = vmul.f32 %v3360, %v3360
  %v3393 = vmul.f32 %v3361, %v3361
  %v3394 = vmul.f32 %v3362, %v3362
  %v3395 = vmul.f32 %v3363, %v3363
  %v3396 = vmul.f32 %v3364, %v3364
  %v3397 = vmul.f32 %v3365, %v3365
  %v3398 = vmul.f32 %v3366, %v3366
  %v3399 = vmul.f32 %v3367, %v3367
  %v3400 = vmul.f32 %v3368, %v3368
  %v3401 = vmul.f32 %v3369, %v3369
  %v3402 = vmul.f32 %v3370, %v3370
  %v3403 = vsel %vm3371, 1, 0
  %v3404 = vsel %vm3372, 1, 0
  %v3405 = vsel %vm3373, 1, 0
  %v3406 = vsel %vm3374, 1, 0
  %v3407 = vsel %vm3375, 1, 0
  %v3408 = vsel %vm3376, 1, 0
  %v3409 = vsel %vm3377, 1, 0
  %v3410 = vsel %vm3378, 1, 0
  %v3411 = vsel %vm3379, 1, 0
  %v3412 = vsel %vm3380, 1, 0
  %v3413 = vsel %vm3381, 1, 0
  %v3414 = vsel %vm3382, 1, 0
  %v3415 = vsel %vm3383, 1, 0
  %v3416 = vsel %vm3384, 1, 0
  %v3417 = vsel %vm3385, 1, 0
  %v3418 = vsel %vm3386, 1, 0
  %3419 = vset.pattern.permute.xlu0 0
  %3420 = vperm.xlu0 %3419, %v3403
  %v3421 = vpop.permute.xlu0 %3420
  %3422 = vset.pattern.permute.xlu0 0
  %3423 = vperm.xlu0 %3422, %v3404
  %v3424 = vpop.permute.xlu0 %3423
  %3425 = vset.pattern.permute.xlu0 0
  %3426 = vperm.xlu0 %3425, %v3405
  %v3427 = vpop.permute.xlu0 %3426
  %3428 = vset.pattern.permute.xlu0 0
  %3429 = vperm.xlu0 %3428, %v3406
  %v3430 = vpop.permute.xlu0 %3429
  %3431 = vset.pattern.permute.xlu0 0
  %3432 = vperm.xlu0 %3431, %v3407
  %v3433 = vpop.permute.xlu0 %3432
  %3434 = vset.pattern.permute.xlu0 0
  %3435 = vperm.xlu0 %3434, %v3408
  %v3436 = vpop.permute.xlu0 %3435
  %3437 = vset.pattern.permute.xlu0 0
  %3438 = vperm.xlu0 %3437, %v3409
  %v3439 = vpop.permute.xlu0 %3438
  %3440 = vset.pattern.permute.xlu0 0
  %3441 = vperm.xlu0 %3440, %v3410
  %v3442 = vpop.permute.xlu0 %3441
  %3443 = vset.pattern.permute.xlu0 0
  %3444 = vperm.xlu0 %3443, %v3411
  %v3445 = vpop.permute.xlu0 %3444
  %3446 = vset.pattern.permute.xlu0 0
  %3447 = vperm.xlu0 %3446, %v3412
  %v3448 = vpop.permute.xlu0 %3447
  %3449 = vset.pattern.permute.xlu0 0
  %3450 = vperm.xlu0 %3449, %v3413
  %v3451 = vpop.permute.xlu0 %3450
  %3452 = vset.pattern.permute.xlu0 0
  %3453 = vperm.xlu0 %3452, %v3414
  %v3454 = vpop.permute.xlu0 %3453
  %3455 = vset.pattern.permute.xlu0 0
  %3456 = vperm.xlu0 %3455, %v3415
  %v3457 = vpop.permute.xlu0 %3456
  %3458 = vset.pattern.permute.xlu0 0
  %3459 = vperm.xlu0 %3458, %v3416
  %v3460 = vpop.permute.xlu0 %3459
  %3461 = vset.pattern.permute.xlu0 0
  %3462 = vperm.xlu0 %3461, %v3417
  %v3463 = vpop.permute.xlu0 %3462
  %3464 = vset.pattern.permute.xlu0 0
  %3465 = vperm.xlu0 %3464, %v3418
  %v3466 = vpop.permute.xlu0 %3465
  %vm3467 = vcmp.eq.s32.totalorder %v3421, 1
  %vm3468 = vcmp.eq.s32.totalorder %v3424, 1
  %vm3469 = vcmp.eq.s32.totalorder %v3427, 1
  %vm3470 = vcmp.eq.s32.totalorder %v3430, 1
  %vm3471 = vcmp.eq.s32.totalorder %v3433, 1
  %vm3472 = vcmp.eq.s32.totalorder %v3436, 1
  %vm3473 = vcmp.eq.s32.totalorder %v3439, 1
  %vm3474 = vcmp.eq.s32.totalorder %v3442, 1
  %vm3475 = vcmp.eq.s32.totalorder %v3445, 1
  %vm3476 = vcmp.eq.s32.totalorder %v3448, 1
  %vm3477 = vcmp.eq.s32.totalorder %v3451, 1
  %vm3478 = vcmp.eq.s32.totalorder %v3454, 1
  %vm3479 = vcmp.eq.s32.totalorder %v3457, 1
  %vm3480 = vcmp.eq.s32.totalorder %v3460, 1
  %vm3481 = vcmp.eq.s32.totalorder %v3463, 1
  %vm3482 = vcmp.eq.s32.totalorder %v3466, 1
  %v3483 = vsel %vm3467, %v3387, 0.0
  %v3484 = vsel %vm3468, %v3388, 0.0
  %v3485 = vsel %vm3469, %v3389, 0.0
  %v3486 = vsel %vm3470, %v3390, 0.0
  %v3487 = vsel %vm3471, %v3391, 0.0
  %v3488 = vsel %vm3472, %v3392, 0.0
  %v3489 = vsel %vm3473, %v3393, 0.0
  %v3490 = vsel %vm3474, %v3394, 0.0
  %v3491 = vsel %vm3475, %v3395, 0.0
  %v3492 = vsel %vm3476, %v3396, 0.0
  %v3493 = vsel %vm3477, %v3397, 0.0
  %v3494 = vsel %vm3478, %v3398, 0.0
  %v3495 = vsel %vm3479, %v3399, 0.0
  %v3496 = vsel %vm3480, %v3400, 0.0
  %v3497 = vsel %vm3481, %v3401, 0.0
  %v3498 = vsel %vm3482, %v3402, 0.0
  %vm3499 = vcmask 130048
  %v3500 = vsel %vm3499, %v3483, 0.0
  %v3501 = vsel %vm3499, %v3484, 0.0
  %v3502 = vadd.f32 %v3500, %v3501
  %v3503 = vsel %vm3499, %v3485, 0.0
  %v3504 = vadd.f32 %v3502, %v3503
  %v3505 = vsel %vm3499, %v3486, 0.0
  %v3506 = vadd.f32 %v3504, %v3505
  %v3507 = vsel %vm3499, %v3487, 0.0
  %v3508 = vadd.f32 %v3506, %v3507
  %v3509 = vsel %vm3499, %v3488, 0.0
  %v3510 = vadd.f32 %v3508, %v3509
  %v3511 = vsel %vm3499, %v3489, 0.0
  %v3512 = vadd.f32 %v3510, %v3511
  %v3513 = vsel %vm3499, %v3490, 0.0
  %v3514 = vadd.f32 %v3512, %v3513
  %v3515 = vsel %vm3499, %v3491, 0.0
  %v3516 = vadd.f32 %v3514, %v3515
  %v3517 = vsel %vm3499, %v3492, 0.0
  %v3518 = vadd.f32 %v3516, %v3517
  %v3519 = vsel %vm3499, %v3493, 0.0
  %v3520 = vadd.f32 %v3518, %v3519
  %v3521 = vsel %vm3499, %v3494, 0.0
  %v3522 = vadd.f32 %v3520, %v3521
  %v3523 = vsel %vm3499, %v3495, 0.0
  %v3524 = vadd.f32 %v3522, %v3523
  %v3525 = vsel %vm3499, %v3496, 0.0
  %v3526 = vadd.f32 %v3524, %v3525
  %v3527 = vsel %vm3499, %v3497, 0.0
  %v3528 = vadd.f32 %v3526, %v3527
  %v3529 = vsel %vm3499, %v3498, 0.0
  %v3530 = vadd.f32 %v3528, %v3529
  %3531 = vadd.xlane.f32.xlu0 %v3530
  %v3532 = vpop.xlane.xlu0 %3531
  %v3533 = vrot.slane %v3532, 4
  %v3534 = vadd.f32 %v3532, %v3533
  %v3535 = vrot.slane %v3534, 2
  %v3536 = vadd.f32 %v3534, %v3535
  %v3537 = vrot.slane %v3536, 1
  %v3538 = vadd.f32 %v3536, %v3537
  %s3539 = vtos %v3538
  %v3540 = vsub.f32 %v20, %v36
  %v3541 = vsub.f32 %v21, %v37
  %v3542 = vsub.f32 %v22, %v38
  %v3543 = vsub.f32 %v23, %v39
  %v3544 = vsub.f32 %v24, %v40
  %v3545 = vsub.f32 %v25, %v41
  %v3546 = vsub.f32 %v26, %v42
  %v3547 = vsub.f32 %v27, %v43
  %v3548 = vsub.f32 %v28, %v44
  %v3549 = vsub.f32 %v29, %v45
  %v3550 = vsub.f32 %v30, %v46
  %v3551 = vsub.f32 %v31, %v47
  %v3552 = vsub.f32 %v32, %v48
  %v3553 = vsub.f32 %v33, %v49
  %v3554 = vsub.f32 %v34, %v50
  %v3555 = vsub.f32 %v35, %v51
  %v3556 = vand.u32 2147483647, %v3540
  %v3557 = vand.u32 2147483647, %v3541
  %v3558 = vand.u32 2147483647, %v3542
  %v3559 = vand.u32 2147483647, %v3543
  %v3560 = vand.u32 2147483647, %v3544
  %v3561 = vand.u32 2147483647, %v3545
  %v3562 = vand.u32 2147483647, %v3546
  %v3563 = vand.u32 2147483647, %v3547
  %v3564 = vand.u32 2147483647, %v3548
  %v3565 = vand.u32 2147483647, %v3549
  %v3566 = vand.u32 2147483647, %v3550
  %v3567 = vand.u32 2147483647, %v3551
  %v3568 = vand.u32 2147483647, %v3552
  %v3569 = vand.u32 2147483647, %v3553
  %v3570 = vand.u32 2147483647, %v3554
  %v3571 = vand.u32 2147483647, %v3555
  %v3572 = vsel %vm3499, %v3556, 0.0
  %v3573 = vsel %vm3499, %v3557, 0.0
  %v3574 = vadd.f32 %v3572, %v3573
  %v3575 = vsel %vm3499, %v3558, 0.0
  %v3576 = vadd.f32 %v3574, %v3575
  %v3577 = vsel %vm3499, %v3559, 0.0
  %v3578 = vadd.f32 %v3576, %v3577
  %v3579 = vsel %vm3499, %v3560, 0.0
  %v3580 = vadd.f32 %v3578, %v3579
  %v3581 = vsel %vm3499, %v3561, 0.0
  %v3582 = vadd.f32 %v3580, %v3581
  %v3583 = vsel %vm3499, %v3562, 0.0
  %v3584 = vadd.f32 %v3582, %v3583
  %v3585 = vsel %vm3499, %v3563, 0.0
  %v3586 = vadd.f32 %v3584, %v3585
  %v3587 = vsel %vm3499, %v3564, 0.0
  %v3588 = vadd.f32 %v3586, %v3587
  %v3589 = vsel %vm3499, %v3565, 0.0
  %v3590 = vadd.f32 %v3588, %v3589
  %v3591 = vsel %vm3499, %v3566, 0.0
  %v3592 = vadd.f32 %v3590, %v3591
  %v3593 = vsel %vm3499, %v3567, 0.0
  %v3594 = vadd.f32 %v3592, %v3593
  %v3595 = vsel %vm3499, %v3568, 0.0
  %v3596 = vadd.f32 %v3594, %v3595
  %v3597 = vsel %vm3499, %v3569, 0.0
  %v3598 = vadd.f32 %v3596, %v3597
  %v3599 = vsel %vm3499, %v3570, 0.0
  %v3600 = vadd.f32 %v3598, %v3599
  %v3601 = vsel %vm3499, %v3571, 0.0
  %v3602 = vadd.f32 %v3600, %v3601
  %3603 = vadd.xlane.f32.xlu0 %v3602
  %v3604 = vpop.xlane.xlu0 %3603
  %v3605 = vrot.slane %v3604, 4
  %v3606 = vadd.f32 %v3604, %v3605
  %v3607 = vrot.slane %v3606, 2
  %v3608 = vadd.f32 %v3606, %v3607
  %v3609 = vrot.slane %v3608, 1
  %v3610 = vadd.f32 %v3608, %v3609
  %s3611 = vtos %v3610
  %vm3612 = vcmp.eq.s32.totalorder %v140, 0
  %vm3613 = vcmp.eq.s32.totalorder %v101, 0
  %vm3614 = vmand %vm3612, %vm3613
  %vm3615 = vcmp.eq.s32.totalorder %v101, 1
  %vm3616 = vmand %vm3612, %vm3615
  %v3617 = vstv %s3611
  %v3618 = vsel %vm3616, %v3617, 0.0
  %v3619 = vstv %s3539
  %v3620 = vsel %vm3614, %v3619, %v3618
  %3621 = vst [vmem:[%s5] sm:$0xff] %v3620
  // Predicated region
  $region22: #{myloss.1} parent=0 // pred_check
    _
  $region23: #{myloss.1} parent=0 // pred_check_branch
    %3623 = sbr.rel (0) target = $region25
  $region24: #{myloss.1} parent=0 // pred_region
    _
  $region25: #{myloss.1} parent=0 // pred_fallthru
    _
  // Predicated region
  $region26: #{myloss.1} parent=0 // pred_check
    _
  $region27: #{myloss.1} parent=0 // pred_check_branch
    %3625 = sbr.rel (0) target = $region29
  $region28: #{myloss.1} parent=0 // pred_region
    _
  $region29: #{myloss.1} parent=0 // pred_fallthru
    _

</llo_original>
